<compile_context>
chip_gen: v5e
topology: v5e:2x2
jax: 0.10.0
libtpu: 0.0.40
codegen_flags: <defaults>
</compile_context>

<pallas_src>
import functools
import math

import jax
import jax.numpy as jnp
from jax.experimental import pallas as pl
from jax.experimental.pallas import tpu as pltpu


# ----------------------------------------------------------------------------
# In-kernel helpers
# ----------------------------------------------------------------------------

def _mm(a, b):
    return jnp.dot(a, b, preferred_element_type=jnp.float32)


def _layer_norm(z, g, b, eps):
    mean = jnp.mean(z, axis=-1, keepdims=True)
    var = jnp.mean((z - mean) ** 2, axis=-1, keepdims=True)
    return (z - mean) * jax.lax.rsqrt(var + eps) * g + b


def _attention(q, k, v, H, Dh, scale):
    """Single-batch multi-head attention.

    q: (Sq, C), k/v: (Sk, C) with C = H*Dh.  Static loop over heads; scores
    contract the last dims (no k transpose), per-head outputs are collected
    as values and concatenated lane-dense (no masked scatter stores, no
    scratch round-trip) before being returned for the out-projection.
    """
    outs = []
    for h in range(H):
        cols = slice(h * Dh, (h + 1) * Dh)
        qh = q[:, cols]                                    # (Sq, Dh)
        kh = k[:, cols]                                    # (Sk, Dh)
        vh = v[:, cols]                                    # (Sk, Dh)
        s = jax.lax.dot_general(
            qh, kh, dimension_numbers=(((1,), (1,)), ((), ())),
            preferred_element_type=jnp.float32) * scale    # (Sq, Sk)
        m = jnp.max(s, axis=-1, keepdims=True)
        p = jnp.exp(s - m)
        p = p / jnp.sum(p, axis=-1, keepdims=True)         # exact softmax
        outs.append(_mm(p, vh))                            # (Sq, Dh)
    return jnp.concatenate(outs, axis=-1)                  # (Sq, C) lane-dense


# ----------------------------------------------------------------------------
# Fused stack kernels (grid = (B, num_layers))
# ----------------------------------------------------------------------------

def _encoder_stack_kernel(x_ref, pos_ref,
                          wqk_ref, bqk_ref, wv_ref, bv_ref, wo_ref, bo_ref,
                          n1g_ref, n1b_ref,
                          w1_ref, b1_ref, w2_ref, b2_ref,
                          n2g_ref, n2b_ref,
                          fng_ref, fnb_ref,
                          o_ref, state,
                          *, H, eps):
    l = pl.program_id(1)
    n_layers = pl.num_programs(1)
    C = x_ref.shape[-1]
    Dh = C // H
    scale = 1.0 / math.sqrt(Dh)

    @pl.when(l == 0)
    def _():
        state[...] = x_ref[...]                            # src for this batch

    x = state[...]                                         # (S, C)
    pos = pos_ref[...]                                     # (S, C)

    # --- self attention ------------------------------------------------------
    q_in = x + pos                                         # query == key input
    qk = _mm(q_in, wqk_ref[...]) + bqk_ref[...]            # fused Q/K proj (S, 2C)
    v = _mm(x, wv_ref[...]) + bv_ref[...]                  # (S, C)
    attn = _attention(qk[:, :C], qk[:, C:], v, H, Dh, scale)
    attn = _mm(attn, wo_ref[...]) + bo_ref[...]
    x1 = _layer_norm(x + attn, n1g_ref[...], n1b_ref[...], eps)

    # --- FFN -----------------------------------------------------------------
    hid = jnp.maximum(_mm(x1, w1_ref[...]) + b1_ref[...], 0.0)
    ff = _mm(hid, w2_ref[...]) + b2_ref[...]
    y = _layer_norm(x1 + ff, n2g_ref[...], n2b_ref[...], eps)

    state[...] = y                                         # carry to next layer

    @pl.when(l == n_layers - 1)
    def _():                                               # fused final encoder norm
        o_ref[...] = _layer_norm(y, fng_ref[...], fnb_ref[...], eps)


def _decoder_stack_kernel(mem_ref, pos_ref, qpos_ref,
                          sa_wqk_ref, sa_bqk_ref, sa_wv_ref, sa_bv_ref,
                          sa_wo_ref, sa_bo_ref,
                          n1g_ref, n1b_ref,
                          ca_wq_ref, ca_bq_ref, ca_wk_ref, ca_bk_ref,
                          ca_wv_ref, ca_bv_ref, ca_wo_ref, ca_bo_ref,
                          n2g_ref, n2b_ref,
                          w1_ref, b1_ref, w2_ref, b2_ref,
                          n3g_ref, n3b_ref,
                          fng_ref, fnb_ref,
                          o_ref, state,
                          *, H, eps):
    l = pl.program_id(1)
    n_layers = pl.num_programs(1)
    C = mem_ref.shape[-1]
    Dh = C // H
    scale = 1.0 / math.sqrt(Dh)

    @pl.when(l == 0)
    def _():
        state[...] = jnp.zeros_like(state)                 # tgt starts at zeros

    tgt = state[...]                                       # (Q, C)
    qpos = qpos_ref[...]                                   # (Q, C)
    mem = mem_ref[...]                                     # (S, C)  VMEM-resident
    pos = pos_ref[...]                                     # (S, C)  VMEM-resident

    # --- self attention ------------------------------------------------------
    q_in = tgt + qpos
    qk = _mm(q_in, sa_wqk_ref[...]) + sa_bqk_ref[...]
    v = _mm(tgt, sa_wv_ref[...]) + sa_bv_ref[...]
    sa = _attention(qk[:, :C], qk[:, C:], v, H, Dh, scale)
    sa = _mm(sa, sa_wo_ref[...]) + sa_bo_ref[...]
    t1 = _layer_norm(tgt + sa, n1g_ref[...], n1b_ref[...], eps)

    # --- cross attention -----------------------------------------------------
    q = _mm(t1 + qpos, ca_wq_ref[...]) + ca_bq_ref[...]
    k = _mm(mem + pos, ca_wk_ref[...]) + ca_bk_ref[...]
    cv = _mm(mem, ca_wv_ref[...]) + ca_bv_ref[...]
    ca = _attention(q, k, cv, H, Dh, scale)
    ca = _mm(ca, ca_wo_ref[...]) + ca_bo_ref[...]
    t2 = _layer_norm(t1 + ca, n2g_ref[...], n2b_ref[...], eps)

    # --- FFN -----------------------------------------------------------------
    hid = jnp.maximum(_mm(t2, w1_ref[...]) + b1_ref[...], 0.0)
    ff = _mm(hid, w2_ref[...]) + b2_ref[...]
    y = _layer_norm(t2 + ff, n3g_ref[...], n3b_ref[...], eps)

    state[...] = y

    @pl.when(l == n_layers - 1)
    def _():                                               # fused final decoder norm
        o_ref[...] = _layer_norm(y, fng_ref[...], fnb_ref[...], eps)


# ----------------------------------------------------------------------------
# pallas_call wrappers
# ----------------------------------------------------------------------------

_ENC_WEIGHT_NAMES = ("w_qk", "b_qk", "w_v", "b_v", "w_o", "b_o",
                     "n1_g", "n1_b",
                     "lin1_w", "lin1_b", "lin2_w", "lin2_b",
                     "n2_g", "n2_b")

_DEC_WEIGHT_NAMES = ("sa_w_qk", "sa_b_qk", "sa_w_v", "sa_b_v", "sa_w_o", "sa_b_o",
                     "n1_g", "n1_b",
                     "ca_w_q", "ca_b_q", "ca_w_k", "ca_b_k",
                     "ca_w_v", "ca_b_v", "ca_w_o", "ca_b_o",
                     "n2_g", "n2_b",
                     "lin1_w", "lin1_b", "lin2_w", "lin2_b",
                     "n3_g", "n3_b")


def _weight_specs(weights):
    # All stacked params are 3-D: (L, rows, cols).  Leading layer dim is
    # squeezed (block size 1, indexed by the layer grid axis).
    return [pl.BlockSpec((None,) + w.shape[1:], lambda b, l: (l, 0, 0))
            for w in weights]


def encoder_stack(src, pos, params, B, S, nhead, eps=1e-5):
    C = src.shape[-1]
    enc = params["enc"]
    L = enc["w_qk"].shape[0]
    weights = [enc[n] for n in _ENC_WEIGHT_NAMES]

    act_spec = pl.BlockSpec((S, C), lambda b, l: (b, 0))
    norm_spec = pl.BlockSpec((1, C), lambda b, l: (0, 0))

    return pl.pallas_call(
        functools.partial(_encoder_stack_kernel, H=nhead, eps=eps),
        out_shape=jax.ShapeDtypeStruct((B * S, C), jnp.float32),
        grid=(B, L),
        in_specs=[act_spec, act_spec] + _weight_specs(weights)
                 + [norm_spec, norm_spec],
        out_specs=pl.BlockSpec((S, C), lambda b, l: (b, 0)),
        scratch_shapes=[pltpu.VMEM((S, C), jnp.float32)],
        compiler_params=pltpu.CompilerParams(
            dimension_semantics=("parallel", "arbitrary")),
    )(src, pos, *weights, params["enc_norm_g"], params["enc_norm_b"])


def decoder_stack(memory, pos, qpos, params, B, Q, S, nhead, eps=1e-5):
    C = memory.shape[-1]
    dec = params["dec"]
    L = dec["sa_w_qk"].shape[0]
    weights = [dec[n] for n in _DEC_WEIGHT_NAMES]

    mem_spec = pl.BlockSpec((S, C), lambda b, l: (b, 0))
    q_spec = pl.BlockSpec((Q, C), lambda b, l: (b, 0))
    norm_spec = pl.BlockSpec((1, C), lambda b, l: (0, 0))

    return pl.pallas_call(
        functools.partial(_decoder_stack_kernel, H=nhead, eps=eps),
        out_shape=jax.ShapeDtypeStruct((B * Q, C), jnp.float32),
        grid=(B, L),
        in_specs=[mem_spec, mem_spec, q_spec] + _weight_specs(weights)
                 + [norm_spec, norm_spec],
        out_specs=pl.BlockSpec((Q, C), lambda b, l: (b, 0)),
        scratch_shapes=[pltpu.VMEM((Q, C), jnp.float32)],
        compiler_params=pltpu.CompilerParams(
            dimension_semantics=("parallel", "arbitrary")),
    )(memory, pos, qpos, *weights, params["dec_norm_g"], params["dec_norm_b"])


# ----------------------------------------------------------------------------
# Full forward (matches Transformer.forward semantics)
# ----------------------------------------------------------------------------

def transformer_forward(params, img_features, jv_tokens, pos_embed, nhead):
    HW, B, C = img_features.shape
    Q = jv_tokens.shape[0]

    # Batch-major row-flattened activations (B*S, C): makes per-batch row
    # blocking inside the fused kernels and the final transposes free.
    src = img_features.transpose(1, 0, 2).reshape(B * HW, C)
    pos = pos_embed.transpose(1, 0, 2).reshape(B * HW, C)
    qpos = jv_tokens.transpose(1, 0, 2).reshape(B * Q, C)

    memory = encoder_stack(src, pos, params, B, HW, nhead)          # 1 launch
    out = decoder_stack(memory, pos, qpos, params, B, Q, HW, nhead)  # 1 launch

    hs = out.reshape(B, Q, C)[None]          # == hs.transpose(1, 2): (1, B, Q, C)
    memory_out = memory.reshape(B, HW, C)    # == memory.transpose(0, 1): (B, HW, C)
    return hs, memory_out


# ----------------------------------------------------------------------------
# Deterministic parameter init (xavier_uniform on dim>1 params, like
# Transformer._reset_parameters; LayerNorm gamma=1/beta=0, MHA biases=0).
# Per-layer params are stacked along a leading layer axis for the fused grids.
# ----------------------------------------------------------------------------

def xavier(key, shape):
    fan_out, fan_in = shape
    a = math.sqrt(6.0 / (fan_in + fan_out))
    return jax.random.uniform(key, shape, jnp.float32, -a, a)


def _split_in_proj(key, C):
    in_proj = xavier(key, (3 * C, C))        # torch in_proj_weight layout (3C, C)
    return in_proj[:C].T, in_proj[C:2 * C].T, in_proj[2 * C:].T


def _ln(C):
    return jnp.ones((1, C), jnp.float32), jnp.zeros((1, C), jnp.float32)


def init_encoder_layer(key, C, F):
    k1, k2, k3, k4 = jax.random.split(key, 4)
    wq, wk, wv = _split_in_proj(k1, C)
    wo = xavier(k2, (C, C)).T
    zC = jnp.zeros((1, C), jnp.float32)
    g, b = _ln(C)
    return dict(
        w_qk=jnp.concatenate([wq, wk], axis=1),
        b_qk=jnp.zeros((1, 2 * C), jnp.float32),
        w_v=wv, b_v=zC, w_o=wo, b_o=zC,
        n1_g=g, n1_b=b,
        lin1_w=xavier(k3, (F, C)).T, lin1_b=jnp.zeros((1, F), jnp.float32),
        lin2_w=xavier(k4, (C, F)).T, lin2_b=zC,
        n2_g=g, n2_b=b)


def init_decoder_layer(key, C, F):
    k1, k2, k3, k4, k5 = jax.random.split(key, 5)
    zC = jnp.zeros((1, C), jnp.float32)
    g, b = _ln(C)
    wq, wk, wv = _split_in_proj(k1, C)
    sa_wo = xavier(k2, (C, C)).T
    cwq, cwk, cwv = _split_in_proj(k3, C)
    ca_wo = xavier(k4, (C, C)).T
    k5a, k5b = jax.random.split(k5)
    return dict(
        sa_w_qk=jnp.concatenate([wq, wk], axis=1),
        sa_b_qk=jnp.zeros((1, 2 * C), jnp.float32),
        sa_w_v=wv, sa_b_v=zC, sa_w_o=sa_wo, sa_b_o=zC,
        n1_g=g, n1_b=b,
        ca_w_q=cwq, ca_b_q=zC, ca_w_k=cwk, ca_b_k=zC,
        ca_w_v=cwv, ca_b_v=zC, ca_w_o=ca_wo, ca_b_o=zC,
        n2_g=g, n2_b=b,
        lin1_w=xavier(k5a, (F, C)).T, lin1_b=jnp.zeros((1, F), jnp.float32),
        lin2_w=xavier(k5b, (C, F)).T, lin2_b=zC,
        n3_g=g, n3_b=b)


def _stack_layers(layer_list):
    return {k: jnp.stack([lp[k] for lp in layer_list]) for k in layer_list[0]}


def init_transformer(key, C, F, n_enc, n_dec):
    keys = jax.random.split(key, n_enc + n_dec)
    enc = _stack_layers([init_encoder_layer(keys[i], C, F) for i in range(n_enc)])
    dec = _stack_layers([init_decoder_layer(keys[n_enc + i], C, F)
                         for i in range(n_dec)])
    g_e, b_e = _ln(C)
    g_d, b_d = _ln(C)
    return dict(enc=enc, dec=dec,
                enc_norm_g=g_e, enc_norm_b=b_e,
                dec_norm_g=g_d, dec_norm_b=b_d)


# TODO(synk): dropout layers are treated as identity (inference semantics);
# stochastic dropout would need pltpu.prng_* inside the fused kernels.
# TODO(synk): at production dims (C=512, FFN=2048), re-budget VMEM for the
# fused decoder (double-buffered stacked-weight blocks) and set
# pltpu.CompilerParams(vmem_limit_bytes=...) / row-tile the FFN if needed.

if __name__ == "__main__":
    HW, B, C = 16, 2, 32          # memory seq length, batch, model dim
    Q = 8                         # number of query (joint/vertex) tokens
    NHEAD = 4
    FFN = 64
    N_ENC, N_DEC = 2, 2

    root = jax.random.PRNGKey(0)
    k_param, k_img, k_tok, k_pos = jax.random.split(root, 4)

    params = init_transformer(k_param, C, FFN, N_ENC, N_DEC)

    img_features = jax.random.normal(k_img, (HW, B, C), jnp.float32)
    jv_tokens    = jax.random.normal(k_tok, (Q, B, C), jnp.float32)
    pos_embed    = jax.random.normal(k_pos, (HW, B, C), jnp.float32)

    fwd = jax.jit(functools.partial(transformer_forward, nhead=NHEAD))
    hs, memory = fwd(params, img_features, jv_tokens, pos_embed)
    jax.block_until_ready((hs, memory))

    assert hs.shape == (1, B, Q, C), hs.shape
    assert memory.shape == (B, HW, C), memory.shape
    assert bool(jnp.all(jnp.isfinite(hs))) and bool(jnp.all(jnp.isfinite(memory)))
    print("KERNEL_OK")
</pallas_src>

<mosaic_0001>
module attributes {stable_mosaic.version = 11 : i64} {
  func.func @_encoder_stack_kernel(%arg0: i32, %arg1: i32, %arg2: memref<16x32xf32, #tpu.memory_space<vmem>>, %arg3: memref<16x32xf32, #tpu.memory_space<vmem>>, %arg4: memref<1x32x64xf32, #tpu.memory_space<vmem>>, %arg5: memref<1x1x64xf32, #tpu.memory_space<vmem>>, %arg6: memref<1x32x32xf32, #tpu.memory_space<vmem>>, %arg7: memref<1x1x32xf32, #tpu.memory_space<vmem>>, %arg8: memref<1x32x32xf32, #tpu.memory_space<vmem>>, %arg9: memref<1x1x32xf32, #tpu.memory_space<vmem>>, %arg10: memref<1x1x32xf32, #tpu.memory_space<vmem>>, %arg11: memref<1x1x32xf32, #tpu.memory_space<vmem>>, %arg12: memref<1x32x64xf32, #tpu.memory_space<vmem>>, %arg13: memref<1x1x64xf32, #tpu.memory_space<vmem>>, %arg14: memref<1x64x32xf32, #tpu.memory_space<vmem>>, %arg15: memref<1x1x32xf32, #tpu.memory_space<vmem>>, %arg16: memref<1x1x32xf32, #tpu.memory_space<vmem>>, %arg17: memref<1x1x32xf32, #tpu.memory_space<vmem>>, %arg18: memref<1x32xf32, #tpu.memory_space<vmem>>, %arg19: memref<1x32xf32, #tpu.memory_space<vmem>>, %arg20: memref<16x32xf32, #tpu.memory_space<vmem>>, %arg21: memref<16x32xf32, #tpu.memory_space<vmem>>) attributes {dimension_semantics = [#tpu.dimension_semantics<parallel>, #tpu.dimension_semantics<arbitrary>], iteration_bounds = array<i64: 2, 2>, scalar_prefetch = 0 : i64, scratch_operands = 1 : i64, tpu.core_type = #tpu.core_type<tc>, window_params = [{transform_indices = @transform_0, window_bounds = array<i64: 16, 32>}, {transform_indices = @transform_1, window_bounds = array<i64: 16, 32>}, {transform_indices = @transform_2, window_bounds = array<i64: 1, 32, 64>}, {transform_indices = @transform_3, window_bounds = array<i64: 1, 1, 64>}, {transform_indices = @transform_4, window_bounds = array<i64: 1, 32, 32>}, {transform_indices = @transform_5, window_bounds = array<i64: 1, 1, 32>}, {transform_indices = @transform_6, window_bounds = array<i64: 1, 32, 32>}, {transform_indices = @transform_7, window_bounds = array<i64: 1, 1, 32>}, {transform_indices = @transform_8, window_bounds = array<i64: 1, 1, 32>}, {transform_indices = @transform_9, window_bounds = array<i64: 1, 1, 32>}, {transform_indices = @transform_10, window_bounds = array<i64: 1, 32, 64>}, {transform_indices = @transform_11, window_bounds = array<i64: 1, 1, 64>}, {transform_indices = @transform_12, window_bounds = array<i64: 1, 64, 32>}, {transform_indices = @transform_13, window_bounds = array<i64: 1, 1, 32>}, {transform_indices = @transform_14, window_bounds = array<i64: 1, 1, 32>}, {transform_indices = @transform_15, window_bounds = array<i64: 1, 1, 32>}, {pipeline_mode = #tpu.pipeline_mode<synchronous>, transform_indices = @transform_16, window_bounds = array<i64: 1, 32>}, {pipeline_mode = #tpu.pipeline_mode<synchronous>, transform_indices = @transform_17, window_bounds = array<i64: 1, 32>}, {transform_indices = @transform_18, window_bounds = array<i64: 16, 32>}]} {
    %c0_i32 = arith.constant 0 : i32
    %0 = arith.cmpi eq, %arg1, %c0_i32 : i32
    %1 = arith.extui %0 : i1 to i32
    %c0_i32_0 = arith.constant 0 : i32
    %2 = arith.cmpi ne, %1, %c0_i32_0 : i32
    scf.if %2 {
      %c0_84 = arith.constant 0 : index
      %c0_85 = arith.constant 0 : index
      %168 = vector.load %arg2[%c0_84, %c0_85] : memref<16x32xf32, #tpu.memory_space<vmem>>, vector<16x32xf32>
      %c0_86 = arith.constant 0 : index
      %c0_87 = arith.constant 0 : index
      %169 = vector.load %arg21[%c0_86, %c0_87] : memref<16x32xf32, #tpu.memory_space<vmem>>, vector<16x32xf32>
      tpu.vector_store %arg21[%c0_86, %c0_87], %168 {strides = array<i32>} : memref<16x32xf32, #tpu.memory_space<vmem>>, vector<16x32xf32>,
    } else {
    }
    %c0 = arith.constant 0 : index
    %c0_1 = arith.constant 0 : index
    %3 = vector.load %arg21[%c0, %c0_1] : memref<16x32xf32, #tpu.memory_space<vmem>>, vector<16x32xf32>
    %c0_2 = arith.constant 0 : index
    %c0_3 = arith.constant 0 : index
    %4 = vector.load %arg3[%c0_2, %c0_3] : memref<16x32xf32, #tpu.memory_space<vmem>>, vector<16x32xf32>
    %5 = arith.addf %3, %4 : vector<16x32xf32>
    %c0_4 = arith.constant 0 : index
    %c0_5 = arith.constant 0 : index
    %c0_6 = arith.constant 0 : index
    %6 = vector.load %arg4[%c0_4, %c0_5, %c0_6] : memref<1x32x64xf32, #tpu.memory_space<vmem>>, vector<1x32x64xf32>
    %7 = vector.shape_cast %6 : vector<1x32x64xf32> to vector<32x64xf32>
    %cst = arith.constant dense<0.000000e+00> : vector<16x64xf32>
    %8 = tpu.matmul %5, %7, %cst {dimension_numbers = #tpu.dot_dimension_numbers<[1], [0], [0], [1], [0, 0, 1, 1], [], []>} : vector<16x32xf32>, vector<32x64xf32>, vector<16x64xf32> -> vector<16x64xf32>
    %c0_7 = arith.constant 0 : index
    %c0_8 = arith.constant 0 : index
    %c0_9 = arith.constant 0 : index
    %9 = vector.load %arg5[%c0_7, %c0_8, %c0_9] : memref<1x1x64xf32, #tpu.memory_space<vmem>>, vector<1x1x64xf32>
    %10 = vector.shape_cast %9 : vector<1x1x64xf32> to vector<1x64xf32>
    %11 = vector.broadcast %10 : vector<1x64xf32> to vector<16x64xf32>
    %12 = arith.addf %8, %11 : vector<16x64xf32>
    %c0_10 = arith.constant 0 : index
    %c0_11 = arith.constant 0 : index
    %c0_12 = arith.constant 0 : index
    %13 = vector.load %arg6[%c0_10, %c0_11, %c0_12] : memref<1x32x32xf32, #tpu.memory_space<vmem>>, vector<1x32x32xf32>
    %14 = vector.shape_cast %13 : vector<1x32x32xf32> to vector<32x32xf32>
    %cst_13 = arith.constant dense<0.000000e+00> : vector<16x32xf32>
    %15 = tpu.matmul %3, %14, %cst_13 {dimension_numbers = #tpu.dot_dimension_numbers<[1], [0], [0], [1], [0, 0, 1, 1], [], []>} : vector<16x32xf32>, vector<32x32xf32>, vector<16x32xf32> -> vector<16x32xf32>
    %c0_14 = arith.constant 0 : index
    %c0_15 = arith.constant 0 : index
    %c0_16 = arith.constant 0 : index
    %16 = vector.load %arg7[%c0_14, %c0_15, %c0_16] : memref<1x1x32xf32, #tpu.memory_space<vmem>>, vector<1x1x32xf32>
    %17 = vector.shape_cast %16 : vector<1x1x32xf32> to vector<1x32xf32>
    %18 = vector.broadcast %17 : vector<1x32xf32> to vector<16x32xf32>
    %19 = arith.addf %15, %18 : vector<16x32xf32>
    %20 = vector.extract_strided_slice %12 {offsets = [0, 0], sizes = [16, 32], strides = [1, 1]} : vector<16x64xf32> to vector<16x32xf32>
    %21 = vector.extract_strided_slice %12 {offsets = [0, 32], sizes = [16, 32], strides = [1, 1]} : vector<16x64xf32> to vector<16x32xf32>
    %22 = vector.extract_strided_slice %20 {offsets = [0, 0], sizes = [16, 8], strides = [1, 1]} : vector<16x32xf32> to vector<16x8xf32>
    %23 = vector.extract_strided_slice %21 {offsets = [0, 0], sizes = [16, 8], strides = [1, 1]} : vector<16x32xf32> to vector<16x8xf32>
    %24 = vector.extract_strided_slice %19 {offsets = [0, 0], sizes = [16, 8], strides = [1, 1]} : vector<16x32xf32> to vector<16x8xf32>
    %cst_17 = arith.constant dense<0.000000e+00> : vector<16x16xf32>
    %25 = tpu.matmul %22, %23, %cst_17 {dimension_numbers = #tpu.dot_dimension_numbers<[1], [1], [0], [0], [0, 0, 1, 0], [], []>} : vector<16x8xf32>, vector<16x8xf32>, vector<16x16xf32> -> vector<16x16xf32>
    %cst_18 = arith.constant 0.353553385 : f32
    %26 = vector.broadcast %cst_18 : f32 to vector<16x16xf32>
    %27 = arith.mulf %25, %26 : vector<16x16xf32>
    %cst_19 = arith.constant dense<0xFF800000> : vector<16xf32>
    %28 = vector.multi_reduction <maximumf>, %27, %cst_19 [1] : vector<16x16xf32> to vector<16xf32>
    %29 = vector.shape_cast %28 : vector<16xf32> to vector<16x1xf32>
    %30 = vector.broadcast %29 : vector<16x1xf32> to vector<16x16xf32>
    %31 = arith.subf %27, %30 : vector<16x16xf32>
    %32 = math.exp %31 : vector<16x16xf32>
    %cst_20 = arith.constant dense<0.000000e+00> : vector<16xf32>
    %33 = vector.multi_reduction <add>, %32, %cst_20 [1] : vector<16x16xf32> to vector<16xf32>
    %34 = vector.shape_cast %33 : vector<16xf32> to vector<16x1xf32>
    %35 = vector.broadcast %34 : vector<16x1xf32> to vector<16x16xf32>
    %36 = arith.divf %32, %35 : vector<16x16xf32>
    %cst_21 = arith.constant dense<0.000000e+00> : vector<16x8xf32>
    %37 = tpu.matmul %36, %24, %cst_21 {dimension_numbers = #tpu.dot_dimension_numbers<[1], [0], [0], [1], [0, 0, 1, 1], [], []>} : vector<16x16xf32>, vector<16x8xf32>, vector<16x8xf32> -> vector<16x8xf32>
    %38 = vector.extract_strided_slice %20 {offsets = [0, 8], sizes = [16, 8], strides = [1, 1]} : vector<16x32xf32> to vector<16x8xf32>
    %39 = vector.extract_strided_slice %21 {offsets = [0, 8], sizes = [16, 8], strides = [1, 1]} : vector<16x32xf32> to vector<16x8xf32>
    %40 = vector.extract_strided_slice %19 {offsets = [0, 8], sizes = [16, 8], strides = [1, 1]} : vector<16x32xf32> to vector<16x8xf32>
    %cst_22 = arith.constant dense<0.000000e+00> : vector<16x16xf32>
    %41 = tpu.matmul %38, %39, %cst_22 {dimension_numbers = #tpu.dot_dimension_numbers<[1], [1], [0], [0], [0, 0, 1, 0], [], []>} : vector<16x8xf32>, vector<16x8xf32>, vector<16x16xf32> -> vector<16x16xf32>
    %cst_23 = arith.constant 0.353553385 : f32
    %42 = vector.broadcast %cst_23 : f32 to vector<16x16xf32>
    %43 = arith.mulf %41, %42 : vector<16x16xf32>
    %cst_24 = arith.constant dense<0xFF800000> : vector<16xf32>
    %44 = vector.multi_reduction <maximumf>, %43, %cst_24 [1] : vector<16x16xf32> to vector<16xf32>
    %45 = vector.shape_cast %44 : vector<16xf32> to vector<16x1xf32>
    %46 = vector.broadcast %45 : vector<16x1xf32> to vector<16x16xf32>
    %47 = arith.subf %43, %46 : vector<16x16xf32>
    %48 = math.exp %47 : vector<16x16xf32>
    %cst_25 = arith.constant dense<0.000000e+00> : vector<16xf32>
    %49 = vector.multi_reduction <add>, %48, %cst_25 [1] : vector<16x16xf32> to vector<16xf32>
    %50 = vector.shape_cast %49 : vector<16xf32> to vector<16x1xf32>
    %51 = vector.broadcast %50 : vector<16x1xf32> to vector<16x16xf32>
    %52 = arith.divf %48, %51 : vector<16x16xf32>
    %cst_26 = arith.constant dense<0.000000e+00> : vector<16x8xf32>
    %53 = tpu.matmul %52, %40, %cst_26 {dimension_numbers = #tpu.dot_dimension_numbers<[1], [0], [0], [1], [0, 0, 1, 1], [], []>} : vector<16x16xf32>, vector<16x8xf32>, vector<16x8xf32> -> vector<16x8xf32>
    %54 = vector.extract_strided_slice %20 {offsets = [0, 16], sizes = [16, 8], strides = [1, 1]} : vector<16x32xf32> to vector<16x8xf32>
    %55 = vector.extract_strided_slice %21 {offsets = [0, 16], sizes = [16, 8], strides = [1, 1]} : vector<16x32xf32> to vector<16x8xf32>
    %56 = vector.extract_strided_slice %19 {offsets = [0, 16], sizes = [16, 8], strides = [1, 1]} : vector<16x32xf32> to vector<16x8xf32>
    %cst_27 = arith.constant dense<0.000000e+00> : vector<16x16xf32>
    %57 = tpu.matmul %54, %55, %cst_27 {dimension_numbers = #tpu.dot_dimension_numbers<[1], [1], [0], [0], [0, 0, 1, 0], [], []>} : vector<16x8xf32>, vector<16x8xf32>, vector<16x16xf32> -> vector<16x16xf32>
    %cst_28 = arith.constant 0.353553385 : f32
    %58 = vector.broadcast %cst_28 : f32 to vector<16x16xf32>
    %59 = arith.mulf %57, %58 : vector<16x16xf32>
    %cst_29 = arith.constant dense<0xFF800000> : vector<16xf32>
    %60 = vector.multi_reduction <maximumf>, %59, %cst_29 [1] : vector<16x16xf32> to vector<16xf32>
    %61 = vector.shape_cast %60 : vector<16xf32> to vector<16x1xf32>
    %62 = vector.broadcast %61 : vector<16x1xf32> to vector<16x16xf32>
    %63 = arith.subf %59, %62 : vector<16x16xf32>
    %64 = math.exp %63 : vector<16x16xf32>
    %cst_30 = arith.constant dense<0.000000e+00> : vector<16xf32>
    %65 = vector.multi_reduction <add>, %64, %cst_30 [1] : vector<16x16xf32> to vector<16xf32>
    %66 = vector.shape_cast %65 : vector<16xf32> to vector<16x1xf32>
    %67 = vector.broadcast %66 : vector<16x1xf32> to vector<16x16xf32>
    %68 = arith.divf %64, %67 : vector<16x16xf32>
    %cst_31 = arith.constant dense<0.000000e+00> : vector<16x8xf32>
    %69 = tpu.matmul %68, %56, %cst_31 {dimension_numbers = #tpu.dot_dimension_numbers<[1], [0], [0], [1], [0, 0, 1, 1], [], []>} : vector<16x16xf32>, vector<16x8xf32>, vector<16x8xf32> -> vector<16x8xf32>
    %70 = vector.extract_strided_slice %20 {offsets = [0, 24], sizes = [16, 8], strides = [1, 1]} : vector<16x32xf32> to vector<16x8xf32>
    %71 = vector.extract_strided_slice %21 {offsets = [0, 24], sizes = [16, 8], strides = [1, 1]} : vector<16x32xf32> to vector<16x8xf32>
    %72 = vector.extract_strided_slice %19 {offsets = [0, 24], sizes = [16, 8], strides = [1, 1]} : vector<16x32xf32> to vector<16x8xf32>
    %cst_32 = arith.constant dense<0.000000e+00> : vector<16x16xf32>
    %73 = tpu.matmul %70, %71, %cst_32 {dimension_numbers = #tpu.dot_dimension_numbers<[1], [1], [0], [0], [0, 0, 1, 0], [], []>} : vector<16x8xf32>, vector<16x8xf32>, vector<16x16xf32> -> vector<16x16xf32>
    %cst_33 = arith.constant 0.353553385 : f32
    %74 = vector.broadcast %cst_33 : f32 to vector<16x16xf32>
    %75 = arith.mulf %73, %74 : vector<16x16xf32>
    %cst_34 = arith.constant dense<0xFF800000> : vector<16xf32>
    %76 = vector.multi_reduction <maximumf>, %75, %cst_34 [1] : vector<16x16xf32> to vector<16xf32>
    %77 = vector.shape_cast %76 : vector<16xf32> to vector<16x1xf32>
    %78 = vector.broadcast %77 : vector<16x1xf32> to vector<16x16xf32>
    %79 = arith.subf %75, %78 : vector<16x16xf32>
    %80 = math.exp %79 : vector<16x16xf32>
    %cst_35 = arith.constant dense<0.000000e+00> : vector<16xf32>
    %81 = vector.multi_reduction <add>, %80, %cst_35 [1] : vector<16x16xf32> to vector<16xf32>
    %82 = vector.shape_cast %81 : vector<16xf32> to vector<16x1xf32>
    %83 = vector.broadcast %82 : vector<16x1xf32> to vector<16x16xf32>
    %84 = arith.divf %80, %83 : vector<16x16xf32>
    %cst_36 = arith.constant dense<0.000000e+00> : vector<16x8xf32>
    %85 = tpu.matmul %84, %72, %cst_36 {dimension_numbers = #tpu.dot_dimension_numbers<[1], [0], [0], [1], [0, 0, 1, 1], [], []>} : vector<16x16xf32>, vector<16x8xf32>, vector<16x8xf32> -> vector<16x8xf32>
    %86 = tpu.concatenate %37, %53, %69, %85 in 1 : vector<16x8xf32>, vector<16x8xf32>, vector<16x8xf32>, vector<16x8xf32> -> vector<16x32xf32>
    %c0_37 = arith.constant 0 : index
    %c0_38 = arith.constant 0 : index
    %c0_39 = arith.constant 0 : index
    %87 = vector.load %arg8[%c0_37, %c0_38, %c0_39] : memref<1x32x32xf32, #tpu.memory_space<vmem>>, vector<1x32x32xf32>
    %88 = vector.shape_cast %87 : vector<1x32x32xf32> to vector<32x32xf32>
    %cst_40 = arith.constant dense<0.000000e+00> : vector<16x32xf32>
    %89 = tpu.matmul %86, %88, %cst_40 {dimension_numbers = #tpu.dot_dimension_numbers<[1], [0], [0], [1], [0, 0, 1, 1], [], []>} : vector<16x32xf32>, vector<32x32xf32>, vector<16x32xf32> -> vector<16x32xf32>
    %c0_41 = arith.constant 0 : index
    %c0_42 = arith.constant 0 : index
    %c0_43 = arith.constant 0 : index
    %90 = vector.load %arg9[%c0_41, %c0_42, %c0_43] : memref<1x1x32xf32, #tpu.memory_space<vmem>>, vector<1x1x32xf32>
    %91 = vector.shape_cast %90 : vector<1x1x32xf32> to vector<1x32xf32>
    %92 = vector.broadcast %91 : vector<1x32xf32> to vector<16x32xf32>
    %93 = arith.addf %89, %92 : vector<16x32xf32>
    %94 = arith.addf %3, %93 : vector<16x32xf32>
    %c0_44 = arith.constant 0 : index
    %c0_45 = arith.constant 0 : index
    %c0_46 = arith.constant 0 : index
    %95 = vector.load %arg10[%c0_44, %c0_45, %c0_46] : memref<1x1x32xf32, #tpu.memory_space<vmem>>, vector<1x1x32xf32>
    %96 = vector.shape_cast %95 : vector<1x1x32xf32> to vector<1x32xf32>
    %c0_47 = arith.constant 0 : index
    %c0_48 = arith.constant 0 : index
    %c0_49 = arith.constant 0 : index
    %97 = vector.load %arg11[%c0_47, %c0_48, %c0_49] : memref<1x1x32xf32, #tpu.memory_space<vmem>>, vector<1x1x32xf32>
    %98 = vector.shape_cast %97 : vector<1x1x32xf32> to vector<1x32xf32>
    %cst_50 = arith.constant dense<0.000000e+00> : vector<16xf32>
    %99 = vector.multi_reduction <add>, %94, %cst_50 [1] : vector<16x32xf32> to vector<16xf32>
    %100 = vector.shape_cast %99 : vector<16xf32> to vector<16x1xf32>
    %cst_51 = arith.constant 3.200000e+01 : f32
    %101 = vector.broadcast %cst_51 : f32 to vector<16x1xf32>
    %102 = arith.divf %100, %101 : vector<16x1xf32>
    %103 = vector.broadcast %102 : vector<16x1xf32> to vector<16x32xf32>
    %104 = arith.subf %94, %103 : vector<16x32xf32>
    %105 = arith.mulf %104, %104 : vector<16x32xf32>
    %cst_52 = arith.constant dense<0.000000e+00> : vector<16xf32>
    %106 = vector.multi_reduction <add>, %105, %cst_52 [1] : vector<16x32xf32> to vector<16xf32>
    %107 = vector.shape_cast %106 : vector<16xf32> to vector<16x1xf32>
    %cst_53 = arith.constant 3.200000e+01 : f32
    %108 = vector.broadcast %cst_53 : f32 to vector<16x1xf32>
    %109 = arith.divf %107, %108 : vector<16x1xf32>
    %110 = vector.broadcast %102 : vector<16x1xf32> to vector<16x32xf32>
    %111 = arith.subf %94, %110 : vector<16x32xf32>
    %cst_54 = arith.constant 9.99999974E-6 : f32
    %112 = vector.broadcast %cst_54 : f32 to vector<16x1xf32>
    %113 = arith.addf %109, %112 : vector<16x1xf32>
    %114 = math.rsqrt %113 : vector<16x1xf32>
    %115 = vector.broadcast %114 : vector<16x1xf32> to vector<16x32xf32>
    %116 = arith.mulf %111, %115 : vector<16x32xf32>
    %117 = vector.broadcast %96 : vector<1x32xf32> to vector<16x32xf32>
    %118 = arith.mulf %116, %117 : vector<16x32xf32>
    %119 = vector.broadcast %98 : vector<1x32xf32> to vector<16x32xf32>
    %120 = arith.addf %118, %119 : vector<16x32xf32>
    %c0_55 = arith.constant 0 : index
    %c0_56 = arith.constant 0 : index
    %c0_57 = arith.constant 0 : index
    %121 = vector.load %arg12[%c0_55, %c0_56, %c0_57] : memref<1x32x64xf32, #tpu.memory_space<vmem>>, vector<1x32x64xf32>
    %122 = vector.shape_cast %121 : vector<1x32x64xf32> to vector<32x64xf32>
    %cst_58 = arith.constant dense<0.000000e+00> : vector<16x64xf32>
    %123 = tpu.matmul %120, %122, %cst_58 {dimension_numbers = #tpu.dot_dimension_numbers<[1], [0], [0], [1], [0, 0, 1, 1], [], []>} : vector<16x32xf32>, vector<32x64xf32>, vector<16x64xf32> -> vector<16x64xf32>
    %c0_59 = arith.constant 0 : index
    %c0_60 = arith.constant 0 : index
    %c0_61 = arith.constant 0 : index
    %124 = vector.load %arg13[%c0_59, %c0_60, %c0_61] : memref<1x1x64xf32, #tpu.memory_space<vmem>>, vector<1x1x64xf32>
    %125 = vector.shape_cast %124 : vector<1x1x64xf32> to vector<1x64xf32>
    %126 = vector.broadcast %125 : vector<1x64xf32> to vector<16x64xf32>
    %127 = arith.addf %123, %126 : vector<16x64xf32>
    %cst_62 = arith.constant 0.000000e+00 : f32
    %128 = vector.broadcast %cst_62 : f32 to vector<16x64xf32>
    %129 = arith.maximumf %127, %128 : vector<16x64xf32>
    %c0_63 = arith.constant 0 : index
    %c0_64 = arith.constant 0 : index
    %c0_65 = arith.constant 0 : index
    %130 = vector.load %arg14[%c0_63, %c0_64, %c0_65] : memref<1x64x32xf32, #tpu.memory_space<vmem>>, vector<1x64x32xf32>
    %131 = vector.shape_cast %130 : vector<1x64x32xf32> to vector<64x32xf32>
    %cst_66 = arith.constant dense<0.000000e+00> : vector<16x32xf32>
    %132 = tpu.matmul %129, %131, %cst_66 {dimension_numbers = #tpu.dot_dimension_numbers<[1], [0], [0], [1], [0, 0, 1, 1], [], []>} : vector<16x64xf32>, vector<64x32xf32>, vector<16x32xf32> -> vector<16x32xf32>
    %c0_67 = arith.constant 0 : index
    %c0_68 = arith.constant 0 : index
    %c0_69 = arith.constant 0 : index
    %133 = vector.load %arg15[%c0_67, %c0_68, %c0_69] : memref<1x1x32xf32, #tpu.memory_space<vmem>>, vector<1x1x32xf32>
    %134 = vector.shape_cast %133 : vector<1x1x32xf32> to vector<1x32xf32>
    %135 = vector.broadcast %134 : vector<1x32xf32> to vector<16x32xf32>
    %136 = arith.addf %132, %135 : vector<16x32xf32>
    %137 = arith.addf %120, %136 : vector<16x32xf32>
    %c0_70 = arith.constant 0 : index
    %c0_71 = arith.constant 0 : index
    %c0_72 = arith.constant 0 : index
    %138 = vector.load %arg16[%c0_70, %c0_71, %c0_72] : memref<1x1x32xf32, #tpu.memory_space<vmem>>, vector<1x1x32xf32>
    %139 = vector.shape_cast %138 : vector<1x1x32xf32> to vector<1x32xf32>
    %c0_73 = arith.constant 0 : index
    %c0_74 = arith.constant 0 : index
    %c0_75 = arith.constant 0 : index
    %140 = vector.load %arg17[%c0_73, %c0_74, %c0_75] : memref<1x1x32xf32, #tpu.memory_space<vmem>>, vector<1x1x32xf32>
    %141 = vector.shape_cast %140 : vector<1x1x32xf32> to vector<1x32xf32>
    %cst_76 = arith.constant dense<0.000000e+00> : vector<16xf32>
    %142 = vector.multi_reduction <add>, %137, %cst_76 [1] : vector<16x32xf32> to vector<16xf32>
    %143 = vector.shape_cast %142 : vector<16xf32> to vector<16x1xf32>
    %cst_77 = arith.constant 3.200000e+01 : f32
    %144 = vector.broadcast %cst_77 : f32 to vector<16x1xf32>
    %145 = arith.divf %143, %144 : vector<16x1xf32>
    %146 = vector.broadcast %145 : vector<16x1xf32> to vector<16x32xf32>
    %147 = arith.subf %137, %146 : vector<16x32xf32>
    %148 = arith.mulf %147, %147 : vector<16x32xf32>
    %cst_78 = arith.constant dense<0.000000e+00> : vector<16xf32>
    %149 = vector.multi_reduction <add>, %148, %cst_78 [1] : vector<16x32xf32> to vector<16xf32>
    %150 = vector.shape_cast %149 : vector<16xf32> to vector<16x1xf32>
    %cst_79 = arith.constant 3.200000e+01 : f32
    %151 = vector.broadcast %cst_79 : f32 to vector<16x1xf32>
    %152 = arith.divf %150, %151 : vector<16x1xf32>
    %153 = vector.broadcast %145 : vector<16x1xf32> to vector<16x32xf32>
    %154 = arith.subf %137, %153 : vector<16x32xf32>
    %cst_80 = arith.constant 9.99999974E-6 : f32
    %155 = vector.broadcast %cst_80 : f32 to vector<16x1xf32>
    %156 = arith.addf %152, %155 : vector<16x1xf32>
    %157 = math.rsqrt %156 : vector<16x1xf32>
    %158 = vector.broadcast %157 : vector<16x1xf32> to vector<16x32xf32>
    %159 = arith.mulf %154, %158 : vector<16x32xf32>
    %160 = vector.broadcast %139 : vector<1x32xf32> to vector<16x32xf32>
    %161 = arith.mulf %159, %160 : vector<16x32xf32>
    %162 = vector.broadcast %141 : vector<1x32xf32> to vector<16x32xf32>
    %163 = arith.addf %161, %162 : vector<16x32xf32>
    %c0_81 = arith.constant 0 : index
    %c0_82 = arith.constant 0 : index
    %164 = vector.load %arg21[%c0_81, %c0_82] : memref<16x32xf32, #tpu.memory_space<vmem>>, vector<16x32xf32>
    tpu.vector_store %arg21[%c0_81, %c0_82], %163 {strides = array<i32>} : memref<16x32xf32, #tpu.memory_space<vmem>>, vector<16x32xf32>,
    %c1_i32 = arith.constant 1 : i32
    %165 = arith.cmpi eq, %arg1, %c1_i32 : i32
    %166 = arith.extui %165 : i1 to i32
    %c0_i32_83 = arith.constant 0 : i32
    %167 = arith.cmpi ne, %166, %c0_i32_83 : i32
    scf.if %167 {
      %c0_84 = arith.constant 0 : index
      %c0_85 = arith.constant 0 : index
      %168 = vector.load %arg18[%c0_84, %c0_85] : memref<1x32xf32, #tpu.memory_space<vmem>>, vector<1x32xf32>
      %c0_86 = arith.constant 0 : index
      %c0_87 = arith.constant 0 : index
      %169 = vector.load %arg19[%c0_86, %c0_87] : memref<1x32xf32, #tpu.memory_space<vmem>>, vector<1x32xf32>
      %cst_88 = arith.constant dense<0.000000e+00> : vector<16xf32>
      %170 = vector.multi_reduction <add>, %163, %cst_88 [1] : vector<16x32xf32> to vector<16xf32>
      %171 = vector.shape_cast %170 : vector<16xf32> to vector<16x1xf32>
      %cst_89 = arith.constant 3.200000e+01 : f32
      %172 = vector.broadcast %cst_89 : f32 to vector<16x1xf32>
      %173 = arith.divf %171, %172 : vector<16x1xf32>
      %174 = vector.broadcast %173 : vector<16x1xf32> to vector<16x32xf32>
      %175 = arith.subf %163, %174 : vector<16x32xf32>
      %176 = arith.mulf %175, %175 : vector<16x32xf32>
      %cst_90 = arith.constant dense<0.000000e+00> : vector<16xf32>
      %177 = vector.multi_reduction <add>, %176, %cst_90 [1] : vector<16x32xf32> to vector<16xf32>
      %178 = vector.shape_cast %177 : vector<16xf32> to vector<16x1xf32>
      %cst_91 = arith.constant 3.200000e+01 : f32
      %179 = vector.broadcast %cst_91 : f32 to vector<16x1xf32>
      %180 = arith.divf %178, %179 : vector<16x1xf32>
      %181 = vector.broadcast %173 : vector<16x1xf32> to vector<16x32xf32>
      %182 = arith.subf %163, %181 : vector<16x32xf32>
      %cst_92 = arith.constant 9.99999974E-6 : f32
      %183 = vector.broadcast %cst_92 : f32 to vector<16x1xf32>
      %184 = arith.addf %180, %183 : vector<16x1xf32>
      %185 = math.rsqrt %184 : vector<16x1xf32>
      %186 = vector.broadcast %185 : vector<16x1xf32> to vector<16x32xf32>
      %187 = arith.mulf %182, %186 : vector<16x32xf32>
      %188 = vector.broadcast %168 : vector<1x32xf32> to vector<16x32xf32>
      %189 = arith.mulf %187, %188 : vector<16x32xf32>
      %190 = vector.broadcast %169 : vector<1x32xf32> to vector<16x32xf32>
      %191 = arith.addf %189, %190 : vector<16x32xf32>
      %c0_93 = arith.constant 0 : index
      %c0_94 = arith.constant 0 : index
      %192 = vector.load %arg20[%c0_93, %c0_94] : memref<16x32xf32, #tpu.memory_space<vmem>>, vector<16x32xf32>
      tpu.vector_store %arg20[%c0_93, %c0_94], %191 {strides = array<i32>} : memref<16x32xf32, #tpu.memory_space<vmem>>, vector<16x32xf32>,
    } else {
    }
    return
  }
  func.func @transform_0(%arg0: i32, %arg1: i32) -> (i32, i32) {
    %c0_i32 = arith.constant 0 : i32
    %c0_i32_0 = arith.constant 0 : i32
    return %arg0, %c0_i32 : i32, i32
  }
  func.func @transform_1(%arg0: i32, %arg1: i32) -> (i32, i32) {
    %c0_i32 = arith.constant 0 : i32
    %c0_i32_0 = arith.constant 0 : i32
    return %arg0, %c0_i32 : i32, i32
  }
  func.func @transform_2(%arg0: i32, %arg1: i32) -> (i32, i32, i32) {
    %c0_i32 = arith.constant 0 : i32
    %c0_i32_0 = arith.constant 0 : i32
    %c0_i32_1 = arith.constant 0 : i32
    return %arg1, %c0_i32, %c0_i32_0 : i32, i32, i32
  }
  func.func @transform_3(%arg0: i32, %arg1: i32) -> (i32, i32, i32) {
    %c0_i32 = arith.constant 0 : i32
    %c0_i32_0 = arith.constant 0 : i32
    %c0_i32_1 = arith.constant 0 : i32
    return %arg1, %c0_i32, %c0_i32_0 : i32, i32, i32
  }
  func.func @transform_4(%arg0: i32, %arg1: i32) -> (i32, i32, i32) {
    %c0_i32 = arith.constant 0 : i32
    %c0_i32_0 = arith.constant 0 : i32
    %c0_i32_1 = arith.constant 0 : i32
    return %arg1, %c0_i32, %c0_i32_0 : i32, i32, i32
  }
  func.func @transform_5(%arg0: i32, %arg1: i32) -> (i32, i32, i32) {
    %c0_i32 = arith.constant 0 : i32
    %c0_i32_0 = arith.constant 0 : i32
    %c0_i32_1 = arith.constant 0 : i32
    return %arg1, %c0_i32, %c0_i32_0 : i32, i32, i32
  }
  func.func @transform_6(%arg0: i32, %arg1: i32) -> (i32, i32, i32) {
    %c0_i32 = arith.constant 0 : i32
    %c0_i32_0 = arith.constant 0 : i32
    %c0_i32_1 = arith.constant 0 : i32
    return %arg1, %c0_i32, %c0_i32_0 : i32, i32, i32
  }
  func.func @transform_7(%arg0: i32, %arg1: i32) -> (i32, i32, i32) {
    %c0_i32 = arith.constant 0 : i32
    %c0_i32_0 = arith.constant 0 : i32
    %c0_i32_1 = arith.constant 0 : i32
    return %arg1, %c0_i32, %c0_i32_0 : i32, i32, i32
  }
  func.func @transform_8(%arg0: i32, %arg1: i32) -> (i32, i32, i32) {
    %c0_i32 = arith.constant 0 : i32
    %c0_i32_0 = arith.constant 0 : i32
    %c0_i32_1 = arith.constant 0 : i32
    return %arg1, %c0_i32, %c0_i32_0 : i32, i32, i32
  }
  func.func @transform_9(%arg0: i32, %arg1: i32) -> (i32, i32, i32) {
    %c0_i32 = arith.constant 0 : i32
    %c0_i32_0 = arith.constant 0 : i32
    %c0_i32_1 = arith.constant 0 : i32
    return %arg1, %c0_i32, %c0_i32_0 : i32, i32, i32
  }
  func.func @transform_10(%arg0: i32, %arg1: i32) -> (i32, i32, i32) {
    %c0_i32 = arith.constant 0 : i32
    %c0_i32_0 = arith.constant 0 : i32
    %c0_i32_1 = arith.constant 0 : i32
    return %arg1, %c0_i32, %c0_i32_0 : i32, i32, i32
  }
  func.func @transform_11(%arg0: i32, %arg1: i32) -> (i32, i32, i32) {
    %c0_i32 = arith.constant 0 : i32
    %c0_i32_0 = arith.constant 0 : i32
    %c0_i32_1 = arith.constant 0 : i32
    return %arg1, %c0_i32, %c0_i32_0 : i32, i32, i32
  }
  func.func @transform_12(%arg0: i32, %arg1: i32) -> (i32, i32, i32) {
    %c0_i32 = arith.constant 0 : i32
    %c0_i32_0 = arith.constant 0 : i32
    %c0_i32_1 = arith.constant 0 : i32
    return %arg1, %c0_i32, %c0_i32_0 : i32, i32, i32
  }
  func.func @transform_13(%arg0: i32, %arg1: i32) -> (i32, i32, i32) {
    %c0_i32 = arith.constant 0 : i32
    %c0_i32_0 = arith.constant 0 : i32
    %c0_i32_1 = arith.constant 0 : i32
    return %arg1, %c0_i32, %c0_i32_0 : i32, i32, i32
  }
  func.func @transform_14(%arg0: i32, %arg1: i32) -> (i32, i32, i32) {
    %c0_i32 = arith.constant 0 : i32
    %c0_i32_0 = arith.constant 0 : i32
    %c0_i32_1 = arith.constant 0 : i32
    return %arg1, %c0_i32, %c0_i32_0 : i32, i32, i32
  }
  func.func @transform_15(%arg0: i32, %arg1: i32) -> (i32, i32, i32) {
    %c0_i32 = arith.constant 0 : i32
    %c0_i32_0 = arith.constant 0 : i32
    %c0_i32_1 = arith.constant 0 : i32
    return %arg1, %c0_i32, %c0_i32_0 : i32, i32, i32
  }
  func.func @transform_16(%arg0: i32, %arg1: i32) -> (i32, i32) {
    %c0_i32 = arith.constant 0 : i32
    %c0_i32_0 = arith.constant 0 : i32
    %c0_i32_1 = arith.constant 0 : i32
    return %c0_i32, %c0_i32_0 : i32, i32
  }
  func.func @transform_17(%arg0: i32, %arg1: i32) -> (i32, i32) {
    %c0_i32 = arith.constant 0 : i32
    %c0_i32_0 = arith.constant 0 : i32
    %c0_i32_1 = arith.constant 0 : i32
    return %c0_i32, %c0_i32_0 : i32, i32
  }
  func.func @transform_18(%arg0: i32, %arg1: i32) -> (i32, i32) {
    %c0_i32 = arith.constant 0 : i32
    %c0_i32_0 = arith.constant 0 : i32
    return %arg0, %c0_i32 : i32, i32
  }
}

module attributes {stable_mosaic.version = 11 : i64} {
  func.func @_decoder_stack_kernel(%arg0: i32, %arg1: i32, %arg2: memref<16x32xf32, #tpu.memory_space<vmem>>, %arg3: memref<16x32xf32, #tpu.memory_space<vmem>>, %arg4: memref<8x32xf32, #tpu.memory_space<vmem>>, %arg5: memref<1x32x64xf32, #tpu.memory_space<vmem>>, %arg6: memref<1x1x64xf32, #tpu.memory_space<vmem>>, %arg7: memref<1x32x32xf32, #tpu.memory_space<vmem>>, %arg8: memref<1x1x32xf32, #tpu.memory_space<vmem>>, %arg9: memref<1x32x32xf32, #tpu.memory_space<vmem>>, %arg10: memref<1x1x32xf32, #tpu.memory_space<vmem>>, %arg11: memref<1x1x32xf32, #tpu.memory_space<vmem>>, %arg12: memref<1x1x32xf32, #tpu.memory_space<vmem>>, %arg13: memref<1x32x32xf32, #tpu.memory_space<vmem>>, %arg14: memref<1x1x32xf32, #tpu.memory_space<vmem>>, %arg15: memref<1x32x32xf32, #tpu.memory_space<vmem>>, %arg16: memref<1x1x32xf32, #tpu.memory_space<vmem>>, %arg17: memref<1x32x32xf32, #tpu.memory_space<vmem>>, %arg18: memref<1x1x32xf32, #tpu.memory_space<vmem>>, %arg19: memref<1x32x32xf32, #tpu.memory_space<vmem>>, %arg20: memref<1x1x32xf32, #tpu.memory_space<vmem>>, %arg21: memref<1x1x32xf32, #tpu.memory_space<vmem>>, %arg22: memref<1x1x32xf32, #tpu.memory_space<vmem>>, %arg23: memref<1x32x64xf32, #tpu.memory_space<vmem>>, %arg24: memref<1x1x64xf32, #tpu.memory_space<vmem>>, %arg25: memref<1x64x32xf32, #tpu.memory_space<vmem>>, %arg26: memref<1x1x32xf32, #tpu.memory_space<vmem>>, %arg27: memref<1x1x32xf32, #tpu.memory_space<vmem>>, %arg28: memref<1x1x32xf32, #tpu.memory_space<vmem>>, %arg29: memref<1x32xf32, #tpu.memory_space<vmem>>, %arg30: memref<1x32xf32, #tpu.memory_space<vmem>>, %arg31: memref<8x32xf32, #tpu.memory_space<vmem>>, %arg32: memref<8x32xf32, #tpu.memory_space<vmem>>) attributes {dimension_semantics = [#tpu.dimension_semantics<parallel>, #tpu.dimension_semantics<arbitrary>], iteration_bounds = array<i64: 2, 2>, scalar_prefetch = 0 : i64, scratch_operands = 1 : i64, tpu.core_type = #tpu.core_type<tc>, window_params = [{transform_indices = @transform_0, window_bounds = array<i64: 16, 32>}, {transform_indices = @transform_1, window_bounds = array<i64: 16, 32>}, {transform_indices = @transform_2, window_bounds = array<i64: 8, 32>}, {transform_indices = @transform_3, window_bounds = array<i64: 1, 32, 64>}, {transform_indices = @transform_4, window_bounds = array<i64: 1, 1, 64>}, {transform_indices = @transform_5, window_bounds = array<i64: 1, 32, 32>}, {transform_indices = @transform_6, window_bounds = array<i64: 1, 1, 32>}, {transform_indices = @transform_7, window_bounds = array<i64: 1, 32, 32>}, {transform_indices = @transform_8, window_bounds = array<i64: 1, 1, 32>}, {transform_indices = @transform_9, window_bounds = array<i64: 1, 1, 32>}, {transform_indices = @transform_10, window_bounds = array<i64: 1, 1, 32>}, {transform_indices = @transform_11, window_bounds = array<i64: 1, 32, 32>}, {transform_indices = @transform_12, window_bounds = array<i64: 1, 1, 32>}, {transform_indices = @transform_13, window_bounds = array<i64: 1, 32, 32>}, {transform_indices = @transform_14, window_bounds = array<i64: 1, 1, 32>}, {transform_indices = @transform_15, window_bounds = array<i64: 1, 32, 32>}, {transform_indices = @transform_16, window_bounds = array<i64: 1, 1, 32>}, {transform_indices = @transform_17, window_bounds = array<i64: 1, 32, 32>}, {transform_indices = @transform_18, window_bounds = array<i64: 1, 1, 32>}, {transform_indices = @transform_19, window_bounds = array<i64: 1, 1, 32>}, {transform_indices = @transform_20, window_bounds = array<i64: 1, 1, 32>}, {transform_indices = @transform_21, window_bounds = array<i64: 1, 32, 64>}, {transform_indices = @transform_22, window_bounds = array<i64: 1, 1, 64>}, {transform_indices = @transform_23, window_bounds = array<i64: 1, 64, 32>}, {transform_indices = @transform_24, window_bounds = array<i64: 1, 1, 32>}, {transform_indices = @transform_25, window_bounds = array<i64: 1, 1, 32>}, {transform_indices = @transform_26, window_bounds = array<i64: 1, 1, 32>}, {pipeline_mode = #tpu.pipeline_mode<synchronous>, transform_indices = @transform_27, window_bounds = array<i64: 1, 32>}, {pipeline_mode = #tpu.pipeline_mode<synchronous>, transform_indices = @transform_28, window_bounds = array<i64: 1, 32>}, {transform_indices = @transform_29, window_bounds = array<i64: 8, 32>}]} {
    %c0_i32 = arith.constant 0 : i32
    %0 = arith.cmpi eq, %arg1, %c0_i32 : i32
    %1 = arith.extui %0 : i1 to i32
    %c0_i32_0 = arith.constant 0 : i32
    %2 = arith.cmpi ne, %1, %c0_i32_0 : i32
    scf.if %2 {
      %cst_147 = arith.constant 0.000000e+00 : f32
      %292 = vector.broadcast %cst_147 : f32 to vector<8x32xf32>
      %c0_148 = arith.constant 0 : index
      %c0_149 = arith.constant 0 : index
      %293 = vector.load %arg32[%c0_148, %c0_149] : memref<8x32xf32, #tpu.memory_space<vmem>>, vector<8x32xf32>
      tpu.vector_store %arg32[%c0_148, %c0_149], %292 {strides = array<i32>} : memref<8x32xf32, #tpu.memory_space<vmem>>, vector<8x32xf32>,
    } else {
    }
    %c0 = arith.constant 0 : index
    %c0_1 = arith.constant 0 : index
    %3 = vector.load %arg32[%c0, %c0_1] : memref<8x32xf32, #tpu.memory_space<vmem>>, vector<8x32xf32>
    %c0_2 = arith.constant 0 : index
    %c0_3 = arith.constant 0 : index
    %4 = vector.load %arg4[%c0_2, %c0_3] : memref<8x32xf32, #tpu.memory_space<vmem>>, vector<8x32xf32>
    %c0_4 = arith.constant 0 : index
    %c0_5 = arith.constant 0 : index
    %5 = vector.load %arg2[%c0_4, %c0_5] : memref<16x32xf32, #tpu.memory_space<vmem>>, vector<16x32xf32>
    %c0_6 = arith.constant 0 : index
    %c0_7 = arith.constant 0 : index
    %6 = vector.load %arg3[%c0_6, %c0_7] : memref<16x32xf32, #tpu.memory_space<vmem>>, vector<16x32xf32>
    %7 = arith.addf %3, %4 : vector<8x32xf32>
    %c0_8 = arith.constant 0 : index
    %c0_9 = arith.constant 0 : index
    %c0_10 = arith.constant 0 : index
    %8 = vector.load %arg5[%c0_8, %c0_9, %c0_10] : memref<1x32x64xf32, #tpu.memory_space<vmem>>, vector<1x32x64xf32>
    %9 = vector.shape_cast %8 : vector<1x32x64xf32> to vector<32x64xf32>
    %cst = arith.constant dense<0.000000e+00> : vector<8x64xf32>
    %10 = tpu.matmul %7, %9, %cst {dimension_numbers = #tpu.dot_dimension_numbers<[1], [0], [0], [1], [0, 0, 1, 1], [], []>} : vector<8x32xf32>, vector<32x64xf32>, vector<8x64xf32> -> vector<8x64xf32>
    %c0_11 = arith.constant 0 : index
    %c0_12 = arith.constant 0 : index
    %c0_13 = arith.constant 0 : index
    %11 = vector.load %arg6[%c0_11, %c0_12, %c0_13] : memref<1x1x64xf32, #tpu.memory_space<vmem>>, vector<1x1x64xf32>
    %12 = vector.shape_cast %11 : vector<1x1x64xf32> to vector<1x64xf32>
    %13 = vector.broadcast %12 : vector<1x64xf32> to vector<8x64xf32>
    %14 = arith.addf %10, %13 : vector<8x64xf32>
    %c0_14 = arith.constant 0 : index
    %c0_15 = arith.constant 0 : index
    %c0_16 = arith.constant 0 : index
    %15 = vector.load %arg7[%c0_14, %c0_15, %c0_16] : memref<1x32x32xf32, #tpu.memory_space<vmem>>, vector<1x32x32xf32>
    %16 = vector.shape_cast %15 : vector<1x32x32xf32> to vector<32x32xf32>
    %cst_17 = arith.constant dense<0.000000e+00> : vector<8x32xf32>
    %17 = tpu.matmul %3, %16, %cst_17 {dimension_numbers = #tpu.dot_dimension_numbers<[1], [0], [0], [1], [0, 0, 1, 1], [], []>} : vector<8x32xf32>, vector<32x32xf32>, vector<8x32xf32> -> vector<8x32xf32>
    %c0_18 = arith.constant 0 : index
    %c0_19 = arith.constant 0 : index
    %c0_20 = arith.constant 0 : index
    %18 = vector.load %arg8[%c0_18, %c0_19, %c0_20] : memref<1x1x32xf32, #tpu.memory_space<vmem>>, vector<1x1x32xf32>
    %19 = vector.shape_cast %18 : vector<1x1x32xf32> to vector<1x32xf32>
    %20 = vector.broadcast %19 : vector<1x32xf32> to vector<8x32xf32>
    %21 = arith.addf %17, %20 : vector<8x32xf32>
    %22 = vector.extract_strided_slice %14 {offsets = [0, 0], sizes = [8, 32], strides = [1, 1]} : vector<8x64xf32> to vector<8x32xf32>
    %23 = vector.extract_strided_slice %14 {offsets = [0, 32], sizes = [8, 32], strides = [1, 1]} : vector<8x64xf32> to vector<8x32xf32>
    %24 = vector.extract_strided_slice %22 {offsets = [0, 0], sizes = [8, 8], strides = [1, 1]} : vector<8x32xf32> to vector<8x8xf32>
    %25 = vector.extract_strided_slice %23 {offsets = [0, 0], sizes = [8, 8], strides = [1, 1]} : vector<8x32xf32> to vector<8x8xf32>
    %26 = vector.extract_strided_slice %21 {offsets = [0, 0], sizes = [8, 8], strides = [1, 1]} : vector<8x32xf32> to vector<8x8xf32>
    %cst_21 = arith.constant dense<0.000000e+00> : vector<8x8xf32>
    %27 = tpu.matmul %24, %25, %cst_21 {dimension_numbers = #tpu.dot_dimension_numbers<[1], [1], [0], [0], [0, 0, 1, 0], [], []>} : vector<8x8xf32>, vector<8x8xf32>, vector<8x8xf32> -> vector<8x8xf32>
    %cst_22 = arith.constant 0.353553385 : f32
    %28 = vector.broadcast %cst_22 : f32 to vector<8x8xf32>
    %29 = arith.mulf %27, %28 : vector<8x8xf32>
    %cst_23 = arith.constant dense<0xFF800000> : vector<8xf32>
    %30 = vector.multi_reduction <maximumf>, %29, %cst_23 [1] : vector<8x8xf32> to vector<8xf32>
    %31 = vector.shape_cast %30 : vector<8xf32> to vector<8x1xf32>
    %32 = vector.broadcast %31 : vector<8x1xf32> to vector<8x8xf32>
    %33 = arith.subf %29, %32 : vector<8x8xf32>
    %34 = math.exp %33 : vector<8x8xf32>
    %cst_24 = arith.constant dense<0.000000e+00> : vector<8xf32>
    %35 = vector.multi_reduction <add>, %34, %cst_24 [1] : vector<8x8xf32> to vector<8xf32>
    %36 = vector.shape_cast %35 : vector<8xf32> to vector<8x1xf32>
    %37 = vector.broadcast %36 : vector<8x1xf32> to vector<8x8xf32>
    %38 = arith.divf %34, %37 : vector<8x8xf32>
    %cst_25 = arith.constant dense<0.000000e+00> : vector<8x8xf32>
    %39 = tpu.matmul %38, %26, %cst_25 {dimension_numbers = #tpu.dot_dimension_numbers<[1], [0], [0], [1], [0, 0, 1, 1], [], []>} : vector<8x8xf32>, vector<8x8xf32>, vector<8x8xf32> -> vector<8x8xf32>
    %40 = vector.extract_strided_slice %22 {offsets = [0, 8], sizes = [8, 8], strides = [1, 1]} : vector<8x32xf32> to vector<8x8xf32>
    %41 = vector.extract_strided_slice %23 {offsets = [0, 8], sizes = [8, 8], strides = [1, 1]} : vector<8x32xf32> to vector<8x8xf32>
    %42 = vector.extract_strided_slice %21 {offsets = [0, 8], sizes = [8, 8], strides = [1, 1]} : vector<8x32xf32> to vector<8x8xf32>
    %cst_26 = arith.constant dense<0.000000e+00> : vector<8x8xf32>
    %43 = tpu.matmul %40, %41, %cst_26 {dimension_numbers = #tpu.dot_dimension_numbers<[1], [1], [0], [0], [0, 0, 1, 0], [], []>} : vector<8x8xf32>, vector<8x8xf32>, vector<8x8xf32> -> vector<8x8xf32>
    %cst_27 = arith.constant 0.353553385 : f32
    %44 = vector.broadcast %cst_27 : f32 to vector<8x8xf32>
    %45 = arith.mulf %43, %44 : vector<8x8xf32>
    %cst_28 = arith.constant dense<0xFF800000> : vector<8xf32>
    %46 = vector.multi_reduction <maximumf>, %45, %cst_28 [1] : vector<8x8xf32> to vector<8xf32>
    %47 = vector.shape_cast %46 : vector<8xf32> to vector<8x1xf32>
    %48 = vector.broadcast %47 : vector<8x1xf32> to vector<8x8xf32>
    %49 = arith.subf %45, %48 : vector<8x8xf32>
    %50 = math.exp %49 : vector<8x8xf32>
    %cst_29 = arith.constant dense<0.000000e+00> : vector<8xf32>
    %51 = vector.multi_reduction <add>, %50, %cst_29 [1] : vector<8x8xf32> to vector<8xf32>
    %52 = vector.shape_cast %51 : vector<8xf32> to vector<8x1xf32>
    %53 = vector.broadcast %52 : vector<8x1xf32> to vector<8x8xf32>
    %54 = arith.divf %50, %53 : vector<8x8xf32>
    %cst_30 = arith.constant dense<0.000000e+00> : vector<8x8xf32>
    %55 = tpu.matmul %54, %42, %cst_30 {dimension_numbers = #tpu.dot_dimension_numbers<[1], [0], [0], [1], [0, 0, 1, 1], [], []>} : vector<8x8xf32>, vector<8x8xf32>, vector<8x8xf32> -> vector<8x8xf32>
    %56 = vector.extract_strided_slice %22 {offsets = [0, 16], sizes = [8, 8], strides = [1, 1]} : vector<8x32xf32> to vector<8x8xf32>
    %57 = vector.extract_strided_slice %23 {offsets = [0, 16], sizes = [8, 8], strides = [1, 1]} : vector<8x32xf32> to vector<8x8xf32>
    %58 = vector.extract_strided_slice %21 {offsets = [0, 16], sizes = [8, 8], strides = [1, 1]} : vector<8x32xf32> to vector<8x8xf32>
    %cst_31 = arith.constant dense<0.000000e+00> : vector<8x8xf32>
    %59 = tpu.matmul %56, %57, %cst_31 {dimension_numbers = #tpu.dot_dimension_numbers<[1], [1], [0], [0], [0, 0, 1, 0], [], []>} : vector<8x8xf32>, vector<8x8xf32>, vector<8x8xf32> -> vector<8x8xf32>
    %cst_32 = arith.constant 0.353553385 : f32
    %60 = vector.broadcast %cst_32 : f32 to vector<8x8xf32>
    %61 = arith.mulf %59, %60 : vector<8x8xf32>
    %cst_33 = arith.constant dense<0xFF800000> : vector<8xf32>
    %62 = vector.multi_reduction <maximumf>, %61, %cst_33 [1] : vector<8x8xf32> to vector<8xf32>
    %63 = vector.shape_cast %62 : vector<8xf32> to vector<8x1xf32>
    %64 = vector.broadcast %63 : vector<8x1xf32> to vector<8x8xf32>
    %65 = arith.subf %61, %64 : vector<8x8xf32>
    %66 = math.exp %65 : vector<8x8xf32>
    %cst_34 = arith.constant dense<0.000000e+00> : vector<8xf32>
    %67 = vector.multi_reduction <add>, %66, %cst_34 [1] : vector<8x8xf32> to vector<8xf32>
    %68 = vector.shape_cast %67 : vector<8xf32> to vector<8x1xf32>
    %69 = vector.broadcast %68 : vector<8x1xf32> to vector<8x8xf32>
    %70 = arith.divf %66, %69 : vector<8x8xf32>
    %cst_35 = arith.constant dense<0.000000e+00> : vector<8x8xf32>
    %71 = tpu.matmul %70, %58, %cst_35 {dimension_numbers = #tpu.dot_dimension_numbers<[1], [0], [0], [1], [0, 0, 1, 1], [], []>} : vector<8x8xf32>, vector<8x8xf32>, vector<8x8xf32> -> vector<8x8xf32>
    %72 = vector.extract_strided_slice %22 {offsets = [0, 24], sizes = [8, 8], strides = [1, 1]} : vector<8x32xf32> to vector<8x8xf32>
    %73 = vector.extract_strided_slice %23 {offsets = [0, 24], sizes = [8, 8], strides = [1, 1]} : vector<8x32xf32> to vector<8x8xf32>
    %74 = vector.extract_strided_slice %21 {offsets = [0, 24], sizes = [8, 8], strides = [1, 1]} : vector<8x32xf32> to vector<8x8xf32>
    %cst_36 = arith.constant dense<0.000000e+00> : vector<8x8xf32>
    %75 = tpu.matmul %72, %73, %cst_36 {dimension_numbers = #tpu.dot_dimension_numbers<[1], [1], [0], [0], [0, 0, 1, 0], [], []>} : vector<8x8xf32>, vector<8x8xf32>, vector<8x8xf32> -> vector<8x8xf32>
    %cst_37 = arith.constant 0.353553385 : f32
    %76 = vector.broadcast %cst_37 : f32 to vector<8x8xf32>
    %77 = arith.mulf %75, %76 : vector<8x8xf32>
    %cst_38 = arith.constant dense<0xFF800000> : vector<8xf32>
    %78 = vector.multi_reduction <maximumf>, %77, %cst_38 [1] : vector<8x8xf32> to vector<8xf32>
    %79 = vector.shape_cast %78 : vector<8xf32> to vector<8x1xf32>
    %80 = vector.broadcast %79 : vector<8x1xf32> to vector<8x8xf32>
    %81 = arith.subf %77, %80 : vector<8x8xf32>
    %82 = math.exp %81 : vector<8x8xf32>
    %cst_39 = arith.constant dense<0.000000e+00> : vector<8xf32>
    %83 = vector.multi_reduction <add>, %82, %cst_39 [1] : vector<8x8xf32> to vector<8xf32>
    %84 = vector.shape_cast %83 : vector<8xf32> to vector<8x1xf32>
    %85 = vector.broadcast %84 : vector<8x1xf32> to vector<8x8xf32>
    %86 = arith.divf %82, %85 : vector<8x8xf32>
    %cst_40 = arith.constant dense<0.000000e+00> : vector<8x8xf32>
    %87 = tpu.matmul %86, %74, %cst_40 {dimension_numbers = #tpu.dot_dimension_numbers<[1], [0], [0], [1], [0, 0, 1, 1], [], []>} : vector<8x8xf32>, vector<8x8xf32>, vector<8x8xf32> -> vector<8x8xf32>
    %88 = tpu.concatenate %39, %55, %71, %87 in 1 : vector<8x8xf32>, vector<8x8xf32>, vector<8x8xf32>, vector<8x8xf32> -> vector<8x32xf32>
    %c0_41 = arith.constant 0 : index
    %c0_42 = arith.constant 0 : index
    %c0_43 = arith.constant 0 : index
    %89 = vector.load %arg9[%c0_41, %c0_42, %c0_43] : memref<1x32x32xf32, #tpu.memory_space<vmem>>, vector<1x32x32xf32>
    %90 = vector.shape_cast %89 : vector<1x32x32xf32> to vector<32x32xf32>
    %cst_44 = arith.constant dense<0.000000e+00> : vector<8x32xf32>
    %91 = tpu.matmul %88, %90, %cst_44 {dimension_numbers = #tpu.dot_dimension_numbers<[1], [0], [0], [1], [0, 0, 1, 1], [], []>} : vector<8x32xf32>, vector<32x32xf32>, vector<8x32xf32> -> vector<8x32xf32>
    %c0_45 = arith.constant 0 : index
    %c0_46 = arith.constant 0 : index
    %c0_47 = arith.constant 0 : index
    %92 = vector.load %arg10[%c0_45, %c0_46, %c0_47] : memref<1x1x32xf32, #tpu.memory_space<vmem>>, vector<1x1x32xf32>
    %93 = vector.shape_cast %92 : vector<1x1x32xf32> to vector<1x32xf32>
    %94 = vector.broadcast %93 : vector<1x32xf32> to vector<8x32xf32>
    %95 = arith.addf %91, %94 : vector<8x32xf32>
    %96 = arith.addf %3, %95 : vector<8x32xf32>
    %c0_48 = arith.constant 0 : index
    %c0_49 = arith.constant 0 : index
    %c0_50 = arith.constant 0 : index
    %97 = vector.load %arg11[%c0_48, %c0_49, %c0_50] : memref<1x1x32xf32, #tpu.memory_space<vmem>>, vector<1x1x32xf32>
    %98 = vector.shape_cast %97 : vector<1x1x32xf32> to vector<1x32xf32>
    %c0_51 = arith.constant 0 : index
    %c0_52 = arith.constant 0 : index
    %c0_53 = arith.constant 0 : index
    %99 = vector.load %arg12[%c0_51, %c0_52, %c0_53] : memref<1x1x32xf32, #tpu.memory_space<vmem>>, vector<1x1x32xf32>
    %100 = vector.shape_cast %99 : vector<1x1x32xf32> to vector<1x32xf32>
    %cst_54 = arith.constant dense<0.000000e+00> : vector<8xf32>
    %101 = vector.multi_reduction <add>, %96, %cst_54 [1] : vector<8x32xf32> to vector<8xf32>
    %102 = vector.shape_cast %101 : vector<8xf32> to vector<8x1xf32>
    %cst_55 = arith.constant 3.200000e+01 : f32
    %103 = vector.broadcast %cst_55 : f32 to vector<8x1xf32>
    %104 = arith.divf %102, %103 : vector<8x1xf32>
    %105 = vector.broadcast %104 : vector<8x1xf32> to vector<8x32xf32>
    %106 = arith.subf %96, %105 : vector<8x32xf32>
    %107 = arith.mulf %106, %106 : vector<8x32xf32>
    %cst_56 = arith.constant dense<0.000000e+00> : vector<8xf32>
    %108 = vector.multi_reduction <add>, %107, %cst_56 [1] : vector<8x32xf32> to vector<8xf32>
    %109 = vector.shape_cast %108 : vector<8xf32> to vector<8x1xf32>
    %cst_57 = arith.constant 3.200000e+01 : f32
    %110 = vector.broadcast %cst_57 : f32 to vector<8x1xf32>
    %111 = arith.divf %109, %110 : vector<8x1xf32>
    %112 = vector.broadcast %104 : vector<8x1xf32> to vector<8x32xf32>
    %113 = arith.subf %96, %112 : vector<8x32xf32>
    %cst_58 = arith.constant 9.99999974E-6 : f32
    %114 = vector.broadcast %cst_58 : f32 to vector<8x1xf32>
    %115 = arith.addf %111, %114 : vector<8x1xf32>
    %116 = math.rsqrt %115 : vector<8x1xf32>
    %117 = vector.broadcast %116 : vector<8x1xf32> to vector<8x32xf32>
    %118 = arith.mulf %113, %117 : vector<8x32xf32>
    %119 = vector.broadcast %98 : vector<1x32xf32> to vector<8x32xf32>
    %120 = arith.mulf %118, %119 : vector<8x32xf32>
    %121 = vector.broadcast %100 : vector<1x32xf32> to vector<8x32xf32>
    %122 = arith.addf %120, %121 : vector<8x32xf32>
    %123 = arith.addf %122, %4 : vector<8x32xf32>
    %c0_59 = arith.constant 0 : index
    %c0_60 = arith.constant 0 : index
    %c0_61 = arith.constant 0 : index
    %124 = vector.load %arg13[%c0_59, %c0_60, %c0_61] : memref<1x32x32xf32, #tpu.memory_space<vmem>>, vector<1x32x32xf32>
    %125 = vector.shape_cast %124 : vector<1x32x32xf32> to vector<32x32xf32>
    %cst_62 = arith.constant dense<0.000000e+00> : vector<8x32xf32>
    %126 = tpu.matmul %123, %125, %cst_62 {dimension_numbers = #tpu.dot_dimension_numbers<[1], [0], [0], [1], [0, 0, 1, 1], [], []>} : vector<8x32xf32>, vector<32x32xf32>, vector<8x32xf32> -> vector<8x32xf32>
    %c0_63 = arith.constant 0 : index
    %c0_64 = arith.constant 0 : index
    %c0_65 = arith.constant 0 : index
    %127 = vector.load %arg14[%c0_63, %c0_64, %c0_65] : memref<1x1x32xf32, #tpu.memory_space<vmem>>, vector<1x1x32xf32>
    %128 = vector.shape_cast %127 : vector<1x1x32xf32> to vector<1x32xf32>
    %129 = vector.broadcast %128 : vector<1x32xf32> to vector<8x32xf32>
    %130 = arith.addf %126, %129 : vector<8x32xf32>
    %131 = arith.addf %5, %6 : vector<16x32xf32>
    %c0_66 = arith.constant 0 : index
    %c0_67 = arith.constant 0 : index
    %c0_68 = arith.constant 0 : index
    %132 = vector.load %arg15[%c0_66, %c0_67, %c0_68] : memref<1x32x32xf32, #tpu.memory_space<vmem>>, vector<1x32x32xf32>
    %133 = vector.shape_cast %132 : vector<1x32x32xf32> to vector<32x32xf32>
    %cst_69 = arith.constant dense<0.000000e+00> : vector<16x32xf32>
    %134 = tpu.matmul %131, %133, %cst_69 {dimension_numbers = #tpu.dot_dimension_numbers<[1], [0], [0], [1], [0, 0, 1, 1], [], []>} : vector<16x32xf32>, vector<32x32xf32>, vector<16x32xf32> -> vector<16x32xf32>
    %c0_70 = arith.constant 0 : index
    %c0_71 = arith.constant 0 : index
    %c0_72 = arith.constant 0 : index
    %135 = vector.load %arg16[%c0_70, %c0_71, %c0_72] : memref<1x1x32xf32, #tpu.memory_space<vmem>>, vector<1x1x32xf32>
    %136 = vector.shape_cast %135 : vector<1x1x32xf32> to vector<1x32xf32>
    %137 = vector.broadcast %136 : vector<1x32xf32> to vector<16x32xf32>
    %138 = arith.addf %134, %137 : vector<16x32xf32>
    %c0_73 = arith.constant 0 : index
    %c0_74 = arith.constant 0 : index
    %c0_75 = arith.constant 0 : index
    %139 = vector.load %arg17[%c0_73, %c0_74, %c0_75] : memref<1x32x32xf32, #tpu.memory_space<vmem>>, vector<1x32x32xf32>
    %140 = vector.shape_cast %139 : vector<1x32x32xf32> to vector<32x32xf32>
    %cst_76 = arith.constant dense<0.000000e+00> : vector<16x32xf32>
    %141 = tpu.matmul %5, %140, %cst_76 {dimension_numbers = #tpu.dot_dimension_numbers<[1], [0], [0], [1], [0, 0, 1, 1], [], []>} : vector<16x32xf32>, vector<32x32xf32>, vector<16x32xf32> -> vector<16x32xf32>
    %c0_77 = arith.constant 0 : index
    %c0_78 = arith.constant 0 : index
    %c0_79 = arith.constant 0 : index
    %142 = vector.load %arg18[%c0_77, %c0_78, %c0_79] : memref<1x1x32xf32, #tpu.memory_space<vmem>>, vector<1x1x32xf32>
    %143 = vector.shape_cast %142 : vector<1x1x32xf32> to vector<1x32xf32>
    %144 = vector.broadcast %143 : vector<1x32xf32> to vector<16x32xf32>
    %145 = arith.addf %141, %144 : vector<16x32xf32>
    %146 = vector.extract_strided_slice %130 {offsets = [0, 0], sizes = [8, 8], strides = [1, 1]} : vector<8x32xf32> to vector<8x8xf32>
    %147 = vector.extract_strided_slice %138 {offsets = [0, 0], sizes = [16, 8], strides = [1, 1]} : vector<16x32xf32> to vector<16x8xf32>
    %148 = vector.extract_strided_slice %145 {offsets = [0, 0], sizes = [16, 8], strides = [1, 1]} : vector<16x32xf32> to vector<16x8xf32>
    %cst_80 = arith.constant dense<0.000000e+00> : vector<8x16xf32>
    %149 = tpu.matmul %146, %147, %cst_80 {dimension_numbers = #tpu.dot_dimension_numbers<[1], [1], [0], [0], [0, 0, 1, 0], [], []>} : vector<8x8xf32>, vector<16x8xf32>, vector<8x16xf32> -> vector<8x16xf32>
    %cst_81 = arith.constant 0.353553385 : f32
    %150 = vector.broadcast %cst_81 : f32 to vector<8x16xf32>
    %151 = arith.mulf %149, %150 : vector<8x16xf32>
    %cst_82 = arith.constant dense<0xFF800000> : vector<8xf32>
    %152 = vector.multi_reduction <maximumf>, %151, %cst_82 [1] : vector<8x16xf32> to vector<8xf32>
    %153 = vector.shape_cast %152 : vector<8xf32> to vector<8x1xf32>
    %154 = vector.broadcast %153 : vector<8x1xf32> to vector<8x16xf32>
    %155 = arith.subf %151, %154 : vector<8x16xf32>
    %156 = math.exp %155 : vector<8x16xf32>
    %cst_83 = arith.constant dense<0.000000e+00> : vector<8xf32>
    %157 = vector.multi_reduction <add>, %156, %cst_83 [1] : vector<8x16xf32> to vector<8xf32>
    %158 = vector.shape_cast %157 : vector<8xf32> to vector<8x1xf32>
    %159 = vector.broadcast %158 : vector<8x1xf32> to vector<8x16xf32>
    %160 = arith.divf %156, %159 : vector<8x16xf32>
    %cst_84 = arith.constant dense<0.000000e+00> : vector<8x8xf32>
    %161 = tpu.matmul %160, %148, %cst_84 {dimension_numbers = #tpu.dot_dimension_numbers<[1], [0], [0], [1], [0, 0, 1, 1], [], []>} : vector<8x16xf32>, vector<16x8xf32>, vector<8x8xf32> -> vector<8x8xf32>
    %162 = vector.extract_strided_slice %130 {offsets = [0, 8], sizes = [8, 8], strides = [1, 1]} : vector<8x32xf32> to vector<8x8xf32>
    %163 = vector.extract_strided_slice %138 {offsets = [0, 8], sizes = [16, 8], strides = [1, 1]} : vector<16x32xf32> to vector<16x8xf32>
    %164 = vector.extract_strided_slice %145 {offsets = [0, 8], sizes = [16, 8], strides = [1, 1]} : vector<16x32xf32> to vector<16x8xf32>
    %cst_85 = arith.constant dense<0.000000e+00> : vector<8x16xf32>
    %165 = tpu.matmul %162, %163, %cst_85 {dimension_numbers = #tpu.dot_dimension_numbers<[1], [1], [0], [0], [0, 0, 1, 0], [], []>} : vector<8x8xf32>, vector<16x8xf32>, vector<8x16xf32> -> vector<8x16xf32>
    %cst_86 = arith.constant 0.353553385 : f32
    %166 = vector.broadcast %cst_86 : f32 to vector<8x16xf32>
    %167 = arith.mulf %165, %166 : vector<8x16xf32>
    %cst_87 = arith.constant dense<0xFF800000> : vector<8xf32>
    %168 = vector.multi_reduction <maximumf>, %167, %cst_87 [1] : vector<8x16xf32> to vector<8xf32>
    %169 = vector.shape_cast %168 : vector<8xf32> to vector<8x1xf32>
    %170 = vector.broadcast %169 : vector<8x1xf32> to vector<8x16xf32>
    %171 = arith.subf %167, %170 : vector<8x16xf32>
    %172 = math.exp %171 : vector<8x16xf32>
    %cst_88 = arith.constant dense<0.000000e+00> : vector<8xf32>
    %173 = vector.multi_reduction <add>, %172, %cst_88 [1] : vector<8x16xf32> to vector<8xf32>
    %174 = vector.shape_cast %173 : vector<8xf32> to vector<8x1xf32>
    %175 = vector.broadcast %174 : vector<8x1xf32> to vector<8x16xf32>
    %176 = arith.divf %172, %175 : vector<8x16xf32>
    %cst_89 = arith.constant dense<0.000000e+00> : vector<8x8xf32>
    %177 = tpu.matmul %176, %164, %cst_89 {dimension_numbers = #tpu.dot_dimension_numbers<[1], [0], [0], [1], [0, 0, 1, 1], [], []>} : vector<8x16xf32>, vector<16x8xf32>, vector<8x8xf32> -> vector<8x8xf32>
    %178 = vector.extract_strided_slice %130 {offsets = [0, 16], sizes = [8, 8], strides = [1, 1]} : vector<8x32xf32> to vector<8x8xf32>
    %179 = vector.extract_strided_slice %138 {offsets = [0, 16], sizes = [16, 8], strides = [1, 1]} : vector<16x32xf32> to vector<16x8xf32>
    %180 = vector.extract_strided_slice %145 {offsets = [0, 16], sizes = [16, 8], strides = [1, 1]} : vector<16x32xf32> to vector<16x8xf32>
    %cst_90 = arith.constant dense<0.000000e+00> : vector<8x16xf32>
    %181 = tpu.matmul %178, %179, %cst_90 {dimension_numbers = #tpu.dot_dimension_numbers<[1], [1], [0], [0], [0, 0, 1, 0], [], []>} : vector<8x8xf32>, vector<16x8xf32>, vector<8x16xf32> -> vector<8x16xf32>
    %cst_91 = arith.constant 0.353553385 : f32
    %182 = vector.broadcast %cst_91 : f32 to vector<8x16xf32>
    %183 = arith.mulf %181, %182 : vector<8x16xf32>
    %cst_92 = arith.constant dense<0xFF800000> : vector<8xf32>
    %184 = vector.multi_reduction <maximumf>, %183, %cst_92 [1] : vector<8x16xf32> to vector<8xf32>
    %185 = vector.shape_cast %184 : vector<8xf32> to vector<8x1xf32>
    %186 = vector.broadcast %185 : vector<8x1xf32> to vector<8x16xf32>
    %187 = arith.subf %183, %186 : vector<8x16xf32>
    %188 = math.exp %187 : vector<8x16xf32>
    %cst_93 = arith.constant dense<0.000000e+00> : vector<8xf32>
    %189 = vector.multi_reduction <add>, %188, %cst_93 [1] : vector<8x16xf32> to vector<8xf32>
    %190 = vector.shape_cast %189 : vector<8xf32> to vector<8x1xf32>
    %191 = vector.broadcast %190 : vector<8x1xf32> to vector<8x16xf32>
    %192 = arith.divf %188, %191 : vector<8x16xf32>
    %cst_94 = arith.constant dense<0.000000e+00> : vector<8x8xf32>
    %193 = tpu.matmul %192, %180, %cst_94 {dimension_numbers = #tpu.dot_dimension_numbers<[1], [0], [0], [1], [0, 0, 1, 1], [], []>} : vector<8x16xf32>, vector<16x8xf32>, vector<8x8xf32> -> vector<8x8xf32>
    %194 = vector.extract_strided_slice %130 {offsets = [0, 24], sizes = [8, 8], strides = [1, 1]} : vector<8x32xf32> to vector<8x8xf32>
    %195 = vector.extract_strided_slice %138 {offsets = [0, 24], sizes = [16, 8], strides = [1, 1]} : vector<16x32xf32> to vector<16x8xf32>
    %196 = vector.extract_strided_slice %145 {offsets = [0, 24], sizes = [16, 8], strides = [1, 1]} : vector<16x32xf32> to vector<16x8xf32>
    %cst_95 = arith.constant dense<0.000000e+00> : vector<8x16xf32>
    %197 = tpu.matmul %194, %195, %cst_95 {dimension_numbers = #tpu.dot_dimension_numbers<[1], [1], [0], [0], [0, 0, 1, 0], [], []>} : vector<8x8xf32>, vector<16x8xf32>, vector<8x16xf32> -> vector<8x16xf32>
    %cst_96 = arith.constant 0.353553385 : f32
    %198 = vector.broadcast %cst_96 : f32 to vector<8x16xf32>
    %199 = arith.mulf %197, %198 : vector<8x16xf32>
    %cst_97 = arith.constant dense<0xFF800000> : vector<8xf32>
    %200 = vector.multi_reduction <maximumf>, %199, %cst_97 [1] : vector<8x16xf32> to vector<8xf32>
    %201 = vector.shape_cast %200 : vector<8xf32> to vector<8x1xf32>
    %202 = vector.broadcast %201 : vector<8x1xf32> to vector<8x16xf32>
    %203 = arith.subf %199, %202 : vector<8x16xf32>
    %204 = math.exp %203 : vector<8x16xf32>
    %cst_98 = arith.constant dense<0.000000e+00> : vector<8xf32>
    %205 = vector.multi_reduction <add>, %204, %cst_98 [1] : vector<8x16xf32> to vector<8xf32>
    %206 = vector.shape_cast %205 : vector<8xf32> to vector<8x1xf32>
    %207 = vector.broadcast %206 : vector<8x1xf32> to vector<8x16xf32>
    %208 = arith.divf %204, %207 : vector<8x16xf32>
    %cst_99 = arith.constant dense<0.000000e+00> : vector<8x8xf32>
    %209 = tpu.matmul %208, %196, %cst_99 {dimension_numbers = #tpu.dot_dimension_numbers<[1], [0], [0], [1], [0, 0, 1, 1], [], []>} : vector<8x16xf32>, vector<16x8xf32>, vector<8x8xf32> -> vector<8x8xf32>
    %210 = tpu.concatenate %161, %177, %193, %209 in 1 : vector<8x8xf32>, vector<8x8xf32>, vector<8x8xf32>, vector<8x8xf32> -> vector<8x32xf32>
    %c0_100 = arith.constant 0 : index
    %c0_101 = arith.constant 0 : index
    %c0_102 = arith.constant 0 : index
    %211 = vector.load %arg19[%c0_100, %c0_101, %c0_102] : memref<1x32x32xf32, #tpu.memory_space<vmem>>, vector<1x32x32xf32>
    %212 = vector.shape_cast %211 : vector<1x32x32xf32> to vector<32x32xf32>
    %cst_103 = arith.constant dense<0.000000e+00> : vector<8x32xf32>
    %213 = tpu.matmul %210, %212, %cst_103 {dimension_numbers = #tpu.dot_dimension_numbers<[1], [0], [0], [1], [0, 0, 1, 1], [], []>} : vector<8x32xf32>, vector<32x32xf32>, vector<8x32xf32> -> vector<8x32xf32>
    %c0_104 = arith.constant 0 : index
    %c0_105 = arith.constant 0 : index
    %c0_106 = arith.constant 0 : index
    %214 = vector.load %arg20[%c0_104, %c0_105, %c0_106] : memref<1x1x32xf32, #tpu.memory_space<vmem>>, vector<1x1x32xf32>
    %215 = vector.shape_cast %214 : vector<1x1x32xf32> to vector<1x32xf32>
    %216 = vector.broadcast %215 : vector<1x32xf32> to vector<8x32xf32>
    %217 = arith.addf %213, %216 : vector<8x32xf32>
    %218 = arith.addf %122, %217 : vector<8x32xf32>
    %c0_107 = arith.constant 0 : index
    %c0_108 = arith.constant 0 : index
    %c0_109 = arith.constant 0 : index
    %219 = vector.load %arg21[%c0_107, %c0_108, %c0_109] : memref<1x1x32xf32, #tpu.memory_space<vmem>>, vector<1x1x32xf32>
    %220 = vector.shape_cast %219 : vector<1x1x32xf32> to vector<1x32xf32>
    %c0_110 = arith.constant 0 : index
    %c0_111 = arith.constant 0 : index
    %c0_112 = arith.constant 0 : index
    %221 = vector.load %arg22[%c0_110, %c0_111, %c0_112] : memref<1x1x32xf32, #tpu.memory_space<vmem>>, vector<1x1x32xf32>
    %222 = vector.shape_cast %221 : vector<1x1x32xf32> to vector<1x32xf32>
    %cst_113 = arith.constant dense<0.000000e+00> : vector<8xf32>
    %223 = vector.multi_reduction <add>, %218, %cst_113 [1] : vector<8x32xf32> to vector<8xf32>
    %224 = vector.shape_cast %223 : vector<8xf32> to vector<8x1xf32>
    %cst_114 = arith.constant 3.200000e+01 : f32
    %225 = vector.broadcast %cst_114 : f32 to vector<8x1xf32>
    %226 = arith.divf %224, %225 : vector<8x1xf32>
    %227 = vector.broadcast %226 : vector<8x1xf32> to vector<8x32xf32>
    %228 = arith.subf %218, %227 : vector<8x32xf32>
    %229 = arith.mulf %228, %228 : vector<8x32xf32>
    %cst_115 = arith.constant dense<0.000000e+00> : vector<8xf32>
    %230 = vector.multi_reduction <add>, %229, %cst_115 [1] : vector<8x32xf32> to vector<8xf32>
    %231 = vector.shape_cast %230 : vector<8xf32> to vector<8x1xf32>
    %cst_116 = arith.constant 3.200000e+01 : f32
    %232 = vector.broadcast %cst_116 : f32 to vector<8x1xf32>
    %233 = arith.divf %231, %232 : vector<8x1xf32>
    %234 = vector.broadcast %226 : vector<8x1xf32> to vector<8x32xf32>
    %235 = arith.subf %218, %234 : vector<8x32xf32>
    %cst_117 = arith.constant 9.99999974E-6 : f32
    %236 = vector.broadcast %cst_117 : f32 to vector<8x1xf32>
    %237 = arith.addf %233, %236 : vector<8x1xf32>
    %238 = math.rsqrt %237 : vector<8x1xf32>
    %239 = vector.broadcast %238 : vector<8x1xf32> to vector<8x32xf32>
    %240 = arith.mulf %235, %239 : vector<8x32xf32>
    %241 = vector.broadcast %220 : vector<1x32xf32> to vector<8x32xf32>
    %242 = arith.mulf %240, %241 : vector<8x32xf32>
    %243 = vector.broadcast %222 : vector<1x32xf32> to vector<8x32xf32>
    %244 = arith.addf %242, %243 : vector<8x32xf32>
    %c0_118 = arith.constant 0 : index
    %c0_119 = arith.constant 0 : index
    %c0_120 = arith.constant 0 : index
    %245 = vector.load %arg23[%c0_118, %c0_119, %c0_120] : memref<1x32x64xf32, #tpu.memory_space<vmem>>, vector<1x32x64xf32>
    %246 = vector.shape_cast %245 : vector<1x32x64xf32> to vector<32x64xf32>
    %cst_121 = arith.constant dense<0.000000e+00> : vector<8x64xf32>
    %247 = tpu.matmul %244, %246, %cst_121 {dimension_numbers = #tpu.dot_dimension_numbers<[1], [0], [0], [1], [0, 0, 1, 1], [], []>} : vector<8x32xf32>, vector<32x64xf32>, vector<8x64xf32> -> vector<8x64xf32>
    %c0_122 = arith.constant 0 : index
    %c0_123 = arith.constant 0 : index
    %c0_124 = arith.constant 0 : index
    %248 = vector.load %arg24[%c0_122, %c0_123, %c0_124] : memref<1x1x64xf32, #tpu.memory_space<vmem>>, vector<1x1x64xf32>
    %249 = vector.shape_cast %248 : vector<1x1x64xf32> to vector<1x64xf32>
    %250 = vector.broadcast %249 : vector<1x64xf32> to vector<8x64xf32>
    %251 = arith.addf %247, %250 : vector<8x64xf32>
    %cst_125 = arith.constant 0.000000e+00 : f32
    %252 = vector.broadcast %cst_125 : f32 to vector<8x64xf32>
    %253 = arith.maximumf %251, %252 : vector<8x64xf32>
    %c0_126 = arith.constant 0 : index
    %c0_127 = arith.constant 0 : index
    %c0_128 = arith.constant 0 : index
    %254 = vector.load %arg25[%c0_126, %c0_127, %c0_128] : memref<1x64x32xf32, #tpu.memory_space<vmem>>, vector<1x64x32xf32>
    %255 = vector.shape_cast %254 : vector<1x64x32xf32> to vector<64x32xf32>
    %cst_129 = arith.constant dense<0.000000e+00> : vector<8x32xf32>
    %256 = tpu.matmul %253, %255, %cst_129 {dimension_numbers = #tpu.dot_dimension_numbers<[1], [0], [0], [1], [0, 0, 1, 1], [], []>} : vector<8x64xf32>, vector<64x32xf32>, vector<8x32xf32> -> vector<8x32xf32>
    %c0_130 = arith.constant 0 : index
    %c0_131 = arith.constant 0 : index
    %c0_132 = arith.constant 0 : index
    %257 = vector.load %arg26[%c0_130, %c0_131, %c0_132] : memref<1x1x32xf32, #tpu.memory_space<vmem>>, vector<1x1x32xf32>
    %258 = vector.shape_cast %257 : vector<1x1x32xf32> to vector<1x32xf32>
    %259 = vector.broadcast %258 : vector<1x32xf32> to vector<8x32xf32>
    %260 = arith.addf %256, %259 : vector<8x32xf32>
    %261 = arith.addf %244, %260 : vector<8x32xf32>
    %c0_133 = arith.constant 0 : index
    %c0_134 = arith.constant 0 : index
    %c0_135 = arith.constant 0 : index
    %262 = vector.load %arg27[%c0_133, %c0_134, %c0_135] : memref<1x1x32xf32, #tpu.memory_space<vmem>>, vector<1x1x32xf32>
    %263 = vector.shape_cast %262 : vector<1x1x32xf32> to vector<1x32xf32>
    %c0_136 = arith.constant 0 : index
    %c0_137 = arith.constant 0 : index
    %c0_138 = arith.constant 0 : index
    %264 = vector.load %arg28[%c0_136, %c0_137, %c0_138] : memref<1x1x32xf32, #tpu.memory_space<vmem>>, vector<1x1x32xf32>
    %265 = vector.shape_cast %264 : vector<1x1x32xf32> to vector<1x32xf32>
    %cst_139 = arith.constant dense<0.000000e+00> : vector<8xf32>
    %266 = vector.multi_reduction <add>, %261, %cst_139 [1] : vector<8x32xf32> to vector<8xf32>
    %267 = vector.shape_cast %266 : vector<8xf32> to vector<8x1xf32>
    %cst_140 = arith.constant 3.200000e+01 : f32
    %268 = vector.broadcast %cst_140 : f32 to vector<8x1xf32>
    %269 = arith.divf %267, %268 : vector<8x1xf32>
    %270 = vector.broadcast %269 : vector<8x1xf32> to vector<8x32xf32>
    %271 = arith.subf %261, %270 : vector<8x32xf32>
    %272 = arith.mulf %271, %271 : vector<8x32xf32>
    %cst_141 = arith.constant dense<0.000000e+00> : vector<8xf32>
    %273 = vector.multi_reduction <add>, %272, %cst_141 [1] : vector<8x32xf32> to vector<8xf32>
    %274 = vector.shape_cast %273 : vector<8xf32> to vector<8x1xf32>
    %cst_142 = arith.constant 3.200000e+01 : f32
    %275 = vector.broadcast %cst_142 : f32 to vector<8x1xf32>
    %276 = arith.divf %274, %275 : vector<8x1xf32>
    %277 = vector.broadcast %269 : vector<8x1xf32> to vector<8x32xf32>
    %278 = arith.subf %261, %277 : vector<8x32xf32>
    %cst_143 = arith.constant 9.99999974E-6 : f32
    %279 = vector.broadcast %cst_143 : f32 to vector<8x1xf32>
    %280 = arith.addf %276, %279 : vector<8x1xf32>
    %281 = math.rsqrt %280 : vector<8x1xf32>
    %282 = vector.broadcast %281 : vector<8x1xf32> to vector<8x32xf32>
    %283 = arith.mulf %278, %282 : vector<8x32xf32>
    %284 = vector.broadcast %263 : vector<1x32xf32> to vector<8x32xf32>
    %285 = arith.mulf %283, %284 : vector<8x32xf32>
    %286 = vector.broadcast %265 : vector<1x32xf32> to vector<8x32xf32>
    %287 = arith.addf %285, %286 : vector<8x32xf32>
    %c0_144 = arith.constant 0 : index
    %c0_145 = arith.constant 0 : index
    %288 = vector.load %arg32[%c0_144, %c0_145] : memref<8x32xf32, #tpu.memory_space<vmem>>, vector<8x32xf32>
    tpu.vector_store %arg32[%c0_144, %c0_145], %287 {strides = array<i32>} : memref<8x32xf32, #tpu.memory_space<vmem>>, vector<8x32xf32>,
    %c1_i32 = arith.constant 1 : i32
    %289 = arith.cmpi eq, %arg1, %c1_i32 : i32
    %290 = arith.extui %289 : i1 to i32
    %c0_i32_146 = arith.constant 0 : i32
    %291 = arith.cmpi ne, %290, %c0_i32_146 : i32
    scf.if %291 {
      %c0_147 = arith.constant 0 : index
      %c0_148 = arith.constant 0 : index
      %292 = vector.load %arg29[%c0_147, %c0_148] : memref<1x32xf32, #tpu.memory_space<vmem>>, vector<1x32xf32>
      %c0_149 = arith.constant 0 : index
      %c0_150 = arith.constant 0 : index
      %293 = vector.load %arg30[%c0_149, %c0_150] : memref<1x32xf32, #tpu.memory_space<vmem>>, vector<1x32xf32>
      %cst_151 = arith.constant dense<0.000000e+00> : vector<8xf32>
      %294 = vector.multi_reduction <add>, %287, %cst_151 [1] : vector<8x32xf32> to vector<8xf32>
      %295 = vector.shape_cast %294 : vector<8xf32> to vector<8x1xf32>
      %cst_152 = arith.constant 3.200000e+01 : f32
      %296 = vector.broadcast %cst_152 : f32 to vector<8x1xf32>
      %297 = arith.divf %295, %296 : vector<8x1xf32>
      %298 = vector.broadcast %297 : vector<8x1xf32> to vector<8x32xf32>
      %299 = arith.subf %287, %298 : vector<8x32xf32>
      %300 = arith.mulf %299, %299 : vector<8x32xf32>
      %cst_153 = arith.constant dense<0.000000e+00> : vector<8xf32>
      %301 = vector.multi_reduction <add>, %300, %cst_153 [1] : vector<8x32xf32> to vector<8xf32>
      %302 = vector.shape_cast %301 : vector<8xf32> to vector<8x1xf32>
      %cst_154 = arith.constant 3.200000e+01 : f32
      %303 = vector.broadcast %cst_154 : f32 to vector<8x1xf32>
      %304 = arith.divf %302, %303 : vector<8x1xf32>
      %305 = vector.broadcast %297 : vector<8x1xf32> to vector<8x32xf32>
      %306 = arith.subf %287, %305 : vector<8x32xf32>
      %cst_155 = arith.constant 9.99999974E-6 : f32
      %307 = vector.broadcast %cst_155 : f32 to vector<8x1xf32>
      %308 = arith.addf %304, %307 : vector<8x1xf32>
      %309 = math.rsqrt %308 : vector<8x1xf32>
      %310 = vector.broadcast %309 : vector<8x1xf32> to vector<8x32xf32>
      %311 = arith.mulf %306, %310 : vector<8x32xf32>
      %312 = vector.broadcast %292 : vector<1x32xf32> to vector<8x32xf32>
      %313 = arith.mulf %311, %312 : vector<8x32xf32>
      %314 = vector.broadcast %293 : vector<1x32xf32> to vector<8x32xf32>
      %315 = arith.addf %313, %314 : vector<8x32xf32>
      %c0_156 = arith.constant 0 : index
      %c0_157 = arith.constant 0 : index
      %316 = vector.load %arg31[%c0_156, %c0_157] : memref<8x32xf32, #tpu.memory_space<vmem>>, vector<8x32xf32>
      tpu.vector_store %arg31[%c0_156, %c0_157], %315 {strides = array<i32>} : memref<8x32xf32, #tpu.memory_space<vmem>>, vector<8x32xf32>,
    } else {
    }
    return
  }
  func.func @transform_0(%arg0: i32, %arg1: i32) -> (i32, i32) {
    %c0_i32 = arith.constant 0 : i32
    %c0_i32_0 = arith.constant 0 : i32
    return %arg0, %c0_i32 : i32, i32
  }
  func.func @transform_1(%arg0: i32, %arg1: i32) -> (i32, i32) {
    %c0_i32 = arith.constant 0 : i32
    %c0_i32_0 = arith.constant 0 : i32
    return %arg0, %c0_i32 : i32, i32
  }
  func.func @transform_2(%arg0: i32, %arg1: i32) -> (i32, i32) {
    %c0_i32 = arith.constant 0 : i32
    %c0_i32_0 = arith.constant 0 : i32
    return %arg0, %c0_i32 : i32, i32
  }
  func.func @transform_3(%arg0: i32, %arg1: i32) -> (i32, i32, i32) {
    %c0_i32 = arith.constant 0 : i32
    %c0_i32_0 = arith.constant 0 : i32
    %c0_i32_1 = arith.constant 0 : i32
    return %arg1, %c0_i32, %c0_i32_0 : i32, i32, i32
  }
  func.func @transform_4(%arg0: i32, %arg1: i32) -> (i32, i32, i32) {
    %c0_i32 = arith.constant 0 : i32
    %c0_i32_0 = arith.constant 0 : i32
    %c0_i32_1 = arith.constant 0 : i32
    return %arg1, %c0_i32, %c0_i32_0 : i32, i32, i32
  }
  func.func @transform_5(%arg0: i32, %arg1: i32) -> (i32, i32, i32) {
    %c0_i32 = arith.constant 0 : i32
    %c0_i32_0 = arith.constant 0 : i32
    %c0_i32_1 = arith.constant 0 : i32
    return %arg1, %c0_i32, %c0_i32_0 : i32, i32, i32
  }
  func.func @transform_6(%arg0: i32, %arg1: i32) -> (i32, i32, i32) {
    %c0_i32 = arith.constant 0 : i32
    %c0_i32_0 = arith.constant 0 : i32
    %c0_i32_1 = arith.constant 0 : i32
    return %arg1, %c0_i32, %c0_i32_0 : i32, i32, i32
  }
  func.func @transform_7(%arg0: i32, %arg1: i32) -> (i32, i32, i32) {
    %c0_i32 = arith.constant 0 : i32
    %c0_i32_0 = arith.constant 0 : i32
    %c0_i32_1 = arith.constant 0 : i32
    return %arg1, %c0_i32, %c0_i32_0 : i32, i32, i32
  }
  func.func @transform_8(%arg0: i32, %arg1: i32) -> (i32, i32, i32) {
    %c0_i32 = arith.constant 0 : i32
    %c0_i32_0 = arith.constant 0 : i32
    %c0_i32_1 = arith.constant 0 : i32
    return %arg1, %c0_i32, %c0_i32_0 : i32, i32, i32
  }
  func.func @transform_9(%arg0: i32, %arg1: i32) -> (i32, i32, i32) {
    %c0_i32 = arith.constant 0 : i32
    %c0_i32_0 = arith.constant 0 : i32
    %c0_i32_1 = arith.constant 0 : i32
    return %arg1, %c0_i32, %c0_i32_0 : i32, i32, i32
  }
  func.func @transform_10(%arg0: i32, %arg1: i32) -> (i32, i32, i32) {
    %c0_i32 = arith.constant 0 : i32
    %c0_i32_0 = arith.constant 0 : i32
    %c0_i32_1 = arith.constant 0 : i32
    return %arg1, %c0_i32, %c0_i32_0 : i32, i32, i32
  }
  func.func @transform_11(%arg0: i32, %arg1: i32) -> (i32, i32, i32) {
    %c0_i32 = arith.constant 0 : i32
    %c0_i32_0 = arith.constant 0 : i32
    %c0_i32_1 = arith.constant 0 : i32
    return %arg1, %c0_i32, %c0_i32_0 : i32, i32, i32
  }
  func.func @transform_12(%arg0: i32, %arg1: i32) -> (i32, i32, i32) {
    %c0_i32 = arith.constant 0 : i32
    %c0_i32_0 = arith.constant 0 : i32
    %c0_i32_1 = arith.constant 0 : i32
    return %arg1, %c0_i32, %c0_i32_0 : i32, i32, i32
  }
  func.func @transform_13(%arg0: i32, %arg1: i32) -> (i32, i32, i32) {
    %c0_i32 = arith.constant 0 : i32
    %c0_i32_0 = arith.constant 0 : i32
    %c0_i32_1 = arith.constant 0 : i32
    return %arg1, %c0_i32, %c0_i32_0 : i32, i32, i32
  }
  func.func @transform_14(%arg0: i32, %arg1: i32) -> (i32, i32, i32) {
    %c0_i32 = arith.constant 0 : i32
    %c0_i32_0 = arith.constant 0 : i32
    %c0_i32_1 = arith.constant 0 : i32
    return %arg1, %c0_i32, %c0_i32_0 : i32, i32, i32
  }
  func.func @transform_15(%arg0: i32, %arg1: i32) -> (i32, i32, i32) {
    %c0_i32 = arith.constant 0 : i32
    %c0_i32_0 = arith.constant 0 : i32
    %c0_i32_1 = arith.constant 0 : i32
    return %arg1, %c0_i32, %c0_i32_0 : i32, i32, i32
  }
  func.func @transform_16(%arg0: i32, %arg1: i32) -> (i32, i32, i32) {
    %c0_i32 = arith.constant 0 : i32
    %c0_i32_0 = arith.constant 0 : i32
    %c0_i32_1 = arith.constant 0 : i32
    return %arg1, %c0_i32, %c0_i32_0 : i32, i32, i32
  }
  func.func @transform_17(%arg0: i32, %arg1: i32) -> (i32, i32, i32) {
    %c0_i32 = arith.constant 0 : i32
    %c0_i32_0 = arith.constant 0 : i32
    %c0_i32_1 = arith.constant 0 : i32
    return %arg1, %c0_i32, %c0_i32_0 : i32, i32, i32
  }
  func.func @transform_18(%arg0: i32, %arg1: i32) -> (i32, i32, i32) {
    %c0_i32 = arith.constant 0 : i32
    %c0_i32_0 = arith.constant 0 : i32
    %c0_i32_1 = arith.constant 0 : i32
    return %arg1, %c0_i32, %c0_i32_0 : i32, i32, i32
  }
  func.func @transform_19(%arg0: i32, %arg1: i32) -> (i32, i32, i32) {
    %c0_i32 = arith.constant 0 : i32
    %c0_i32_0 = arith.constant 0 : i32
    %c0_i32_1 = arith.constant 0 : i32
    return %arg1, %c0_i32, %c0_i32_0 : i32, i32, i32
  }
  func.func @transform_20(%arg0: i32, %arg1: i32) -> (i32, i32, i32) {
    %c0_i32 = arith.constant 0 : i32
    %c0_i32_0 = arith.constant 0 : i32
    %c0_i32_1 = arith.constant 0 : i32
    return %arg1, %c0_i32, %c0_i32_0 : i32, i32, i32
  }
  func.func @transform_21(%arg0: i32, %arg1: i32) -> (i32, i32, i32) {
    %c0_i32 = arith.constant 0 : i32
    %c0_i32_0 = arith.constant 0 : i32
    %c0_i32_1 = arith.constant 0 : i32
    return %arg1, %c0_i32, %c0_i32_0 : i32, i32, i32
  }
  func.func @transform_22(%arg0: i32, %arg1: i32) -> (i32, i32, i32) {
    %c0_i32 = arith.constant 0 : i32
    %c0_i32_0 = arith.constant 0 : i32
    %c0_i32_1 = arith.constant 0 : i32
    return %arg1, %c0_i32, %c0_i32_0 : i32, i32, i32
  }
  func.func @transform_23(%arg0: i32, %arg1: i32) -> (i32, i32, i32) {
    %c0_i32 = arith.constant 0 : i32
    %c0_i32_0 = arith.constant 0 : i32
    %c0_i32_1 = arith.constant 0 : i32
    return %arg1, %c0_i32, %c0_i32_0 : i32, i32, i32
  }
  func.func @transform_24(%arg0: i32, %arg1: i32) -> (i32, i32, i32) {
    %c0_i32 = arith.constant 0 : i32
    %c0_i32_0 = arith.constant 0 : i32
    %c0_i32_1 = arith.constant 0 : i32
    return %arg1, %c0_i32, %c0_i32_0 : i32, i32, i32
  }
  func.func @transform_25(%arg0: i32, %arg1: i32) -> (i32, i32, i32) {
    %c0_i32 = arith.constant 0 : i32
    %c0_i32_0 = arith.constant 0 : i32
    %c0_i32_1 = arith.constant 0 : i32
    return %arg1, %c0_i32, %c0_i32_0 : i32, i32, i32
  }
  func.func @transform_26(%arg0: i32, %arg1: i32) -> (i32, i32, i32) {
    %c0_i32 = arith.constant 0 : i32
    %c0_i32_0 = arith.constant 0 : i32
    %c0_i32_1 = arith.constant 0 : i32
    return %arg1, %c0_i32, %c0_i32_0 : i32, i32, i32
  }
  func.func @transform_27(%arg0: i32, %arg1: i32) -> (i32, i32) {
    %c0_i32 = arith.constant 0 : i32
    %c0_i32_0 = arith.constant 0 : i32
    %c0_i32_1 = arith.constant 0 : i32
    return %c0_i32, %c0_i32_0 : i32, i32
  }
  func.func @transform_28(%arg0: i32, %arg1: i32) -> (i32, i32) {
    %c0_i32 = arith.constant 0 : i32
    %c0_i32_0 = arith.constant 0 : i32
    %c0_i32_1 = arith.constant 0 : i32
    return %c0_i32, %c0_i32_0 : i32, i32
  }
  func.func @transform_29(%arg0: i32, %arg1: i32) -> (i32, i32) {
    %c0_i32 = arith.constant 0 : i32
    %c0_i32_0 = arith.constant 0 : i32
    return %arg0, %c0_i32 : i32, i32
  }
}

</mosaic_0001>

<llo_original>
// kernel: transformer_forward.2
$region0: #{transformer_forward.2}
  #allocation0 [shape = 'u32[]', space=smem, size = 0x4, offset = 0x4, fixed_abs, tag = 'smem constant byte address 0x4 - core index']
  #allocation1 [shape = 'u32[72,128]{1,0:T(1,128)}', space=vmem, size = 0x9000, scoped, tag = 'internal scratch']
  #allocation2 [shape = 'f32[16,32]{1,0:T(8,128)}', space=vmem, size = 0x2000, scoped, tag = 'scratch operand']
  %s0 = inlined_call_operand.vmem [shape: f32[32,32], index: 0, kind: input, shape index: {}]
  %s1 = inlined_call_operand.vmem [shape: f32[32,32], index: 1, kind: input, shape index: {}]
  %s2 = inlined_call_operand.vmem [shape: f32[2,32,64], index: 2, kind: input, shape index: {}]
  %s3 = inlined_call_operand.vmem [shape: f32[2,1,64], index: 3, kind: input, shape index: {}]
  %s4 = inlined_call_operand.vmem [shape: f32[2,32,32], index: 4, kind: input, shape index: {}]
  %s5 = inlined_call_operand.vmem [shape: f32[2,1,32], index: 5, kind: input, shape index: {}]
  %s6 = inlined_call_operand.hbm [shape: f32[2,32,32], index: 6, kind: input, shape index: {}]
  %s7 = inlined_call_operand.vmem [shape: f32[2,1,32], index: 7, kind: input, shape index: {}]
  %s8 = inlined_call_operand.vmem [shape: f32[2,1,32], index: 8, kind: input, shape index: {}]
  %s9 = inlined_call_operand.vmem [shape: f32[2,1,32], index: 9, kind: input, shape index: {}]
  %s10 = inlined_call_operand.hbm [shape: f32[2,32,64], index: 10, kind: input, shape index: {}]
  %s11 = inlined_call_operand.vmem [shape: f32[2,1,64], index: 11, kind: input, shape index: {}]
  %s12 = inlined_call_operand.vmem [shape: f32[2,64,32], index: 12, kind: input, shape index: {}]
  %s13 = inlined_call_operand.vmem [shape: f32[2,1,32], index: 13, kind: input, shape index: {}]
  %s14 = inlined_call_operand.vmem [shape: f32[2,1,32], index: 14, kind: input, shape index: {}]
  %s15 = inlined_call_operand.vmem [shape: f32[2,1,32], index: 15, kind: input, shape index: {}]
  %s16 = inlined_call_operand.vmem [shape: f32[1,32], index: 16, kind: input, shape index: {}]
  %s17 = inlined_call_operand.vmem [shape: f32[1,32], index: 17, kind: input, shape index: {}]
  %s18 = inlined_call_operand.vmem [shape: f32[32,32], index: 18, kind: output, shape index: {}]
  %s19 = sld [smem:[#allocation0]]
  $region121: #{transformer_forward.2} parent=0
    _
  %s21 = ssub.s32 1, %s19
  %s22 = scalar_select 0, %s21, %s19
  $region1: #{transformer_forward.2} parent=0
    #allocation3 [shape = 'u8[32768]{0}', space=vmem, size = 0x8000, scoped, tag = 'input window, operand 6']
    #allocation4 [shape = 's32[2]{0}', space=sflag, size = 0x8, scoped, tag = 'scoped memory for transformer_forward.2']
    #allocation5 [shape = 'u8[32768]{0}', space=vmem, size = 0x8000, scoped, tag = 'input window, operand 10']
    #allocation6 [shape = 's32[2]{0}', space=sflag, size = 0x8, scoped, tag = 'scoped memory for transformer_forward.2']
    %23 = vsyncpa [#allocation4], 0
    %s24 = scalar_lea.sflag [#allocation4], 1
    %25 = vsyncpa %s24, 0
    %26 = vsyncpa [#allocation6], 0
    %s27 = scalar_lea.sflag [#allocation6], 1
    %28 = vsyncpa %s27, 0
    loop: start=0, step=1, limit=6
    $region2: #{transformer_forward.2} parent=1 // loop_pre_header
      _
    $region3: #{transformer_forward.2} parent=1 // loop_header
      %s30 = sphi 0, %s34
      %p31 = scmp.ge.s32.totalorder %s30, 6
      %s37 = sphi 0, %s49
      %s38 = sphi 0, %s45
      %s39 = sphi 0, %s37
      %s40 = sphi 0, %s38
      %s41 = sphi 0, %s39
      %s42 = sphi 0, %s40
      %s52 = sphi 0, %s54
      %s55 = sphi 0, %s52
      %s56 = sphi 0, %s55
      %s72 = sphi 0, %s56
      %s78 = sphi 0, %s80
      %s81 = sphi 0, %s78
      %s82 = sphi 0, %s81
      %s98 = sphi 0, %s82
      %s104 = sphi 0, %s106
      %s107 = sphi 0, %s104
      %s108 = sphi 0, %s107
      %s124 = sphi 0, %s108
      %s130 = sphi 0, %s132
      %s133 = sphi 0, %s130
      %s134 = sphi 0, %s133
      %s150 = sphi 0, %s134
      %s156 = sphi 0, %s158
      %s159 = sphi 0, %s156
      %s160 = sphi 0, %s159
      %s176 = sphi 0, %s160
      %s182 = sphi 0, %s184
      %s185 = sphi 0, %s182
      %s186 = sphi 0, %s185
      %s202 = sphi 0, %s186
      %s208 = sphi 0, %s210
      %s211 = sphi 0, %s208
      %s212 = sphi 0, %s211
      %s228 = sphi 0, %s212
      %s234 = sphi 0, %s236
      %s237 = sphi 0, %s234
      %s238 = sphi 0, %s237
      %s254 = sphi 0, %s238
      %s260 = sphi 0, %s262
      %s263 = sphi 0, %s260
      %s264 = sphi 0, %s263
      %s280 = sphi 0, %s264
      %s286 = sphi 0, %s288
      %s289 = sphi 0, %s286
      %s290 = sphi 0, %s289
      %s306 = sphi 0, %s290
      %s312 = sphi 0, %s314
      %s315 = sphi 0, %s312
      %s316 = sphi 0, %s315
      %s332 = sphi 0, %s316
      %s338 = sphi 0, %s340
      %s341 = sphi 0, %s338
      %s342 = sphi 0, %s341
      %s358 = sphi 0, %s342
      %s364 = sphi 0, %s366
      %s367 = sphi 0, %s364
      %s368 = sphi 0, %s367
      %s384 = sphi 0, %s368
      %s390 = sphi 0, %s392
      %s393 = sphi 0, %s390
      %s394 = sphi 0, %s393
      %s410 = sphi 0, %s394
      %s416 = sphi 0, %s418
      %s419 = sphi 0, %s416
      %s420 = sphi 0, %s419
      %s436 = sphi 0, %s420
      %s442 = sphi 0, %s444
      %s445 = sphi 0, %s442
      %s446 = sphi 0, %s445
      %s462 = sphi 0, %s446
      %s466 = sphi 0, %s466
      %s468 = sphi 0, %s466
      %s469 = sphi 0, %s468
      %s483 = sphi 0, %s469
      %s487 = sphi 0, %s487
      %s489 = sphi 0, %s487
      %s490 = sphi 0, %s489
      %s504 = sphi 0, %s490
      %s510 = sphi 0, %s512
      %s513 = sphi 0, %s510
      %s514 = sphi 0, %s513
      %s530 = sphi 0, %s514
    $region4: #{transformer_forward.2} parent=1 // loop_header_branch
      %33 = sbr.rel (%p31) target = $region8
    $region5: #{transformer_forward.2} parent=1 // loop_body
      %s35 = ssub.s32 %s30, 1
      %s36 = ssub.s32 %s30, 2
      %s43 = sadd.s32 1, %s38
      %p44 = scmp.ge.s32.totalorder %s43, 2
      %s45 = scalar_select %p44, 0, %s43
      %s46 = sadd.s32 1, %s37
      %s47 = scalar_select %p44, %s46, %s37
      %p48 = scmp.ge.s32.totalorder %s47, 2
      %s49 = scalar_select %p48, 0, %s47
      %s50 = ssub.s32 %s37, %s49
      %p51 = scmp.eq.s32.totalorder %s50, 0
      %s53 = sadd.s32 %s52, 1
      %s54 = scalar_select %p51, %s52, %s53
      %p57 = pneg %p51
      %p58 = scmp.eq.s32.totalorder %s30, 3
      %p59 = por %p57, %p58
      %p60 = scmp.ne.s32.totalorder %s52, %s55
      %p61 = scmp.eq.s32.totalorder %s30, 0
      %p62 = por %p60, %p61
      %p63 = scmp.ne.s32.totalorder %s52, %s55
      %p64 = scmp.eq.s32.totalorder %s35, 3
      %p65 = por %p63, %p64
      %p66 = scmp.ne.s32.totalorder %s55, %s56
      %p67 = scmp.eq.s32.totalorder %s35, 0
      %p68 = por %p66, %p67
      %p69 = scmp.ne.s32.totalorder %s55, %s56
      %p70 = scmp.eq.s32.totalorder %s36, 3
      %p71 = por %p69, %p70
      %p73 = scmp.ne.s32.totalorder %s56, %s72
      %p74 = scmp.eq.s32.totalorder %s36, 0
      %p75 = por %p73, %p74
      %s76 = ssub.s32 %s37, %s49
      %p77 = scmp.eq.s32.totalorder %s76, 0
      %s79 = sadd.s32 %s78, 1
      %s80 = scalar_select %p77, %s78, %s79
      %p83 = pneg %p77
      %p84 = scmp.eq.s32.totalorder %s30, 3
      %p85 = por %p83, %p84
      %p86 = scmp.ne.s32.totalorder %s78, %s81
      %p87 = scmp.eq.s32.totalorder %s30, 0
      %p88 = por %p86, %p87
      %p89 = scmp.ne.s32.totalorder %s78, %s81
      %p90 = scmp.eq.s32.totalorder %s35, 3
      %p91 = por %p89, %p90
      %p92 = scmp.ne.s32.totalorder %s81, %s82
      %p93 = scmp.eq.s32.totalorder %s35, 0
      %p94 = por %p92, %p93
      %p95 = scmp.ne.s32.totalorder %s81, %s82
      %p96 = scmp.eq.s32.totalorder %s36, 3
      %p97 = por %p95, %p96
      %p99 = scmp.ne.s32.totalorder %s82, %s98
      %p100 = scmp.eq.s32.totalorder %s36, 0
      %p101 = por %p99, %p100
      %s102 = ssub.s32 %s38, %s45
      %p103 = scmp.eq.s32.totalorder %s102, 0
      %s105 = sadd.s32 %s104, 1
      %s106 = scalar_select %p103, %s104, %s105
      %p109 = pneg %p103
      %p110 = scmp.eq.s32.totalorder %s30, 3
      %p111 = por %p109, %p110
      %p112 = scmp.ne.s32.totalorder %s104, %s107
      %p113 = scmp.eq.s32.totalorder %s30, 0
      %p114 = por %p112, %p113
      %p115 = scmp.ne.s32.totalorder %s104, %s107
      %p116 = scmp.eq.s32.totalorder %s35, 3
      %p117 = por %p115, %p116
      %p118 = scmp.ne.s32.totalorder %s107, %s108
      %p119 = scmp.eq.s32.totalorder %s35, 0
      %p120 = por %p118, %p119
      %p121 = scmp.ne.s32.totalorder %s107, %s108
      %p122 = scmp.eq.s32.totalorder %s36, 3
      %p123 = por %p121, %p122
      %p125 = scmp.ne.s32.totalorder %s108, %s124
      %p126 = scmp.eq.s32.totalorder %s36, 0
      %p127 = por %p125, %p126
      %s128 = ssub.s32 %s38, %s45
      %p129 = scmp.eq.s32.totalorder %s128, 0
      %s131 = sadd.s32 %s130, 1
      %s132 = scalar_select %p129, %s130, %s131
      %p135 = pneg %p129
      %p136 = scmp.eq.s32.totalorder %s30, 3
      %p137 = por %p135, %p136
      %p138 = scmp.ne.s32.totalorder %s130, %s133
      %p139 = scmp.eq.s32.totalorder %s30, 0
      %p140 = por %p138, %p139
      %p141 = scmp.ne.s32.totalorder %s130, %s133
      %p142 = scmp.eq.s32.totalorder %s35, 3
      %p143 = por %p141, %p142
      %p144 = scmp.ne.s32.totalorder %s133, %s134
      %p145 = scmp.eq.s32.totalorder %s35, 0
      %p146 = por %p144, %p145
      %p147 = scmp.ne.s32.totalorder %s133, %s134
      %p148 = scmp.eq.s32.totalorder %s36, 3
      %p149 = por %p147, %p148
      %p151 = scmp.ne.s32.totalorder %s134, %s150
      %p152 = scmp.eq.s32.totalorder %s36, 0
      %p153 = por %p151, %p152
      %s154 = ssub.s32 %s38, %s45
      %p155 = scmp.eq.s32.totalorder %s154, 0
      %s157 = sadd.s32 %s156, 1
      %s158 = scalar_select %p155, %s156, %s157
      %p161 = pneg %p155
      %p162 = scmp.eq.s32.totalorder %s30, 3
      %p163 = por %p161, %p162
      %p164 = scmp.ne.s32.totalorder %s156, %s159
      %p165 = scmp.eq.s32.totalorder %s30, 0
      %p166 = por %p164, %p165
      %p167 = scmp.ne.s32.totalorder %s156, %s159
      %p168 = scmp.eq.s32.totalorder %s35, 3
      %p169 = por %p167, %p168
      %p170 = scmp.ne.s32.totalorder %s159, %s160
      %p171 = scmp.eq.s32.totalorder %s35, 0
      %p172 = por %p170, %p171
      %p173 = scmp.ne.s32.totalorder %s159, %s160
      %p174 = scmp.eq.s32.totalorder %s36, 3
      %p175 = por %p173, %p174
      %p177 = scmp.ne.s32.totalorder %s160, %s176
      %p178 = scmp.eq.s32.totalorder %s36, 0
      %p179 = por %p177, %p178
      %s180 = ssub.s32 %s38, %s45
      %p181 = scmp.eq.s32.totalorder %s180, 0
      %s183 = sadd.s32 %s182, 1
      %s184 = scalar_select %p181, %s182, %s183
      %p187 = pneg %p181
      %p188 = scmp.eq.s32.totalorder %s30, 3
      %p189 = por %p187, %p188
      %p190 = scmp.ne.s32.totalorder %s182, %s185
      %p191 = scmp.eq.s32.totalorder %s30, 0
      %p192 = por %p190, %p191
      %p193 = scmp.ne.s32.totalorder %s182, %s185
      %p194 = scmp.eq.s32.totalorder %s35, 3
      %p195 = por %p193, %p194
      %p196 = scmp.ne.s32.totalorder %s185, %s186
      %p197 = scmp.eq.s32.totalorder %s35, 0
      %p198 = por %p196, %p197
      %p199 = scmp.ne.s32.totalorder %s185, %s186
      %p200 = scmp.eq.s32.totalorder %s36, 3
      %p201 = por %p199, %p200
      %p203 = scmp.ne.s32.totalorder %s186, %s202
      %p204 = scmp.eq.s32.totalorder %s36, 0
      %p205 = por %p203, %p204
      %s206 = ssub.s32 %s38, %s45
      %p207 = scmp.eq.s32.totalorder %s206, 0
      %s209 = sadd.s32 %s208, 1
      %s210 = scalar_select %p207, %s208, %s209
      %p213 = pneg %p207
      %p214 = scmp.eq.s32.totalorder %s30, 3
      %p215 = por %p213, %p214
      %p216 = scmp.ne.s32.totalorder %s208, %s211
      %p217 = scmp.eq.s32.totalorder %s30, 0
      %p218 = por %p216, %p217
      %p219 = scmp.ne.s32.totalorder %s208, %s211
      %p220 = scmp.eq.s32.totalorder %s35, 3
      %p221 = por %p219, %p220
      %p222 = scmp.ne.s32.totalorder %s211, %s212
      %p223 = scmp.eq.s32.totalorder %s35, 0
      %p224 = por %p222, %p223
      %p225 = scmp.ne.s32.totalorder %s211, %s212
      %p226 = scmp.eq.s32.totalorder %s36, 3
      %p227 = por %p225, %p226
      %p229 = scmp.ne.s32.totalorder %s212, %s228
      %p230 = scmp.eq.s32.totalorder %s36, 0
      %p231 = por %p229, %p230
      %s232 = ssub.s32 %s38, %s45
      %p233 = scmp.eq.s32.totalorder %s232, 0
      %s235 = sadd.s32 %s234, 1
      %s236 = scalar_select %p233, %s234, %s235
      %p239 = pneg %p233
      %p240 = scmp.eq.s32.totalorder %s30, 3
      %p241 = por %p239, %p240
      %p242 = scmp.ne.s32.totalorder %s234, %s237
      %p243 = scmp.eq.s32.totalorder %s30, 0
      %p244 = por %p242, %p243
      %p245 = scmp.ne.s32.totalorder %s234, %s237
      %p246 = scmp.eq.s32.totalorder %s35, 3
      %p247 = por %p245, %p246
      %p248 = scmp.ne.s32.totalorder %s237, %s238
      %p249 = scmp.eq.s32.totalorder %s35, 0
      %p250 = por %p248, %p249
      %p251 = scmp.ne.s32.totalorder %s237, %s238
      %p252 = scmp.eq.s32.totalorder %s36, 3
      %p253 = por %p251, %p252
      %p255 = scmp.ne.s32.totalorder %s238, %s254
      %p256 = scmp.eq.s32.totalorder %s36, 0
      %p257 = por %p255, %p256
      %s258 = ssub.s32 %s38, %s45
      %p259 = scmp.eq.s32.totalorder %s258, 0
      %s261 = sadd.s32 %s260, 1
      %s262 = scalar_select %p259, %s260, %s261
      %p265 = pneg %p259
      %p266 = scmp.eq.s32.totalorder %s30, 3
      %p267 = por %p265, %p266
      %p268 = scmp.ne.s32.totalorder %s260, %s263
      %p269 = scmp.eq.s32.totalorder %s30, 0
      %p270 = por %p268, %p269
      %p271 = scmp.ne.s32.totalorder %s260, %s263
      %p272 = scmp.eq.s32.totalorder %s35, 3
      %p273 = por %p271, %p272
      %p274 = scmp.ne.s32.totalorder %s263, %s264
      %p275 = scmp.eq.s32.totalorder %s35, 0
      %p276 = por %p274, %p275
      %p277 = scmp.ne.s32.totalorder %s263, %s264
      %p278 = scmp.eq.s32.totalorder %s36, 3
      %p279 = por %p277, %p278
      %p281 = scmp.ne.s32.totalorder %s264, %s280
      %p282 = scmp.eq.s32.totalorder %s36, 0
      %p283 = por %p281, %p282
      %s284 = ssub.s32 %s38, %s45
      %p285 = scmp.eq.s32.totalorder %s284, 0
      %s287 = sadd.s32 %s286, 1
      %s288 = scalar_select %p285, %s286, %s287
      %p291 = pneg %p285
      %p292 = scmp.eq.s32.totalorder %s30, 3
      %p293 = por %p291, %p292
      %p294 = scmp.ne.s32.totalorder %s286, %s289
      %p295 = scmp.eq.s32.totalorder %s30, 0
      %p296 = por %p294, %p295
      %p297 = scmp.ne.s32.totalorder %s286, %s289
      %p298 = scmp.eq.s32.totalorder %s35, 3
      %p299 = por %p297, %p298
      %p300 = scmp.ne.s32.totalorder %s289, %s290
      %p301 = scmp.eq.s32.totalorder %s35, 0
      %p302 = por %p300, %p301
      %p303 = scmp.ne.s32.totalorder %s289, %s290
      %p304 = scmp.eq.s32.totalorder %s36, 3
      %p305 = por %p303, %p304
      %p307 = scmp.ne.s32.totalorder %s290, %s306
      %p308 = scmp.eq.s32.totalorder %s36, 0
      %p309 = por %p307, %p308
      %s310 = ssub.s32 %s38, %s45
      %p311 = scmp.eq.s32.totalorder %s310, 0
      %s313 = sadd.s32 %s312, 1
      %s314 = scalar_select %p311, %s312, %s313
      %p317 = pneg %p311
      %p318 = scmp.eq.s32.totalorder %s30, 3
      %p319 = por %p317, %p318
      %p320 = scmp.ne.s32.totalorder %s312, %s315
      %p321 = scmp.eq.s32.totalorder %s30, 0
      %p322 = por %p320, %p321
      %p323 = scmp.ne.s32.totalorder %s312, %s315
      %p324 = scmp.eq.s32.totalorder %s35, 3
      %p325 = por %p323, %p324
      %p326 = scmp.ne.s32.totalorder %s315, %s316
      %p327 = scmp.eq.s32.totalorder %s35, 0
      %p328 = por %p326, %p327
      %p329 = scmp.ne.s32.totalorder %s315, %s316
      %p330 = scmp.eq.s32.totalorder %s36, 3
      %p331 = por %p329, %p330
      %p333 = scmp.ne.s32.totalorder %s316, %s332
      %p334 = scmp.eq.s32.totalorder %s36, 0
      %p335 = por %p333, %p334
      %s336 = ssub.s32 %s38, %s45
      %p337 = scmp.eq.s32.totalorder %s336, 0
      %s339 = sadd.s32 %s338, 1
      %s340 = scalar_select %p337, %s338, %s339
      %p343 = pneg %p337
      %p344 = scmp.eq.s32.totalorder %s30, 3
      %p345 = por %p343, %p344
      %p346 = scmp.ne.s32.totalorder %s338, %s341
      %p347 = scmp.eq.s32.totalorder %s30, 0
      %p348 = por %p346, %p347
      %p349 = scmp.ne.s32.totalorder %s338, %s341
      %p350 = scmp.eq.s32.totalorder %s35, 3
      %p351 = por %p349, %p350
      %p352 = scmp.ne.s32.totalorder %s341, %s342
      %p353 = scmp.eq.s32.totalorder %s35, 0
      %p354 = por %p352, %p353
      %p355 = scmp.ne.s32.totalorder %s341, %s342
      %p356 = scmp.eq.s32.totalorder %s36, 3
      %p357 = por %p355, %p356
      %p359 = scmp.ne.s32.totalorder %s342, %s358
      %p360 = scmp.eq.s32.totalorder %s36, 0
      %p361 = por %p359, %p360
      %s362 = ssub.s32 %s38, %s45
      %p363 = scmp.eq.s32.totalorder %s362, 0
      %s365 = sadd.s32 %s364, 1
      %s366 = scalar_select %p363, %s364, %s365
      %p369 = pneg %p363
      %p370 = scmp.eq.s32.totalorder %s30, 3
      %p371 = por %p369, %p370
      %p372 = scmp.ne.s32.totalorder %s364, %s367
      %p373 = scmp.eq.s32.totalorder %s30, 0
      %p374 = por %p372, %p373
      %p375 = scmp.ne.s32.totalorder %s364, %s367
      %p376 = scmp.eq.s32.totalorder %s35, 3
      %p377 = por %p375, %p376
      %p378 = scmp.ne.s32.totalorder %s367, %s368
      %p379 = scmp.eq.s32.totalorder %s35, 0
      %p380 = por %p378, %p379
      %p381 = scmp.ne.s32.totalorder %s367, %s368
      %p382 = scmp.eq.s32.totalorder %s36, 3
      %p383 = por %p381, %p382
      %p385 = scmp.ne.s32.totalorder %s368, %s384
      %p386 = scmp.eq.s32.totalorder %s36, 0
      %p387 = por %p385, %p386
      %s388 = ssub.s32 %s38, %s45
      %p389 = scmp.eq.s32.totalorder %s388, 0
      %s391 = sadd.s32 %s390, 1
      %s392 = scalar_select %p389, %s390, %s391
      %p395 = pneg %p389
      %p396 = scmp.eq.s32.totalorder %s30, 3
      %p397 = por %p395, %p396
      %p398 = scmp.ne.s32.totalorder %s390, %s393
      %p399 = scmp.eq.s32.totalorder %s30, 0
      %p400 = por %p398, %p399
      %p401 = scmp.ne.s32.totalorder %s390, %s393
      %p402 = scmp.eq.s32.totalorder %s35, 3
      %p403 = por %p401, %p402
      %p404 = scmp.ne.s32.totalorder %s393, %s394
      %p405 = scmp.eq.s32.totalorder %s35, 0
      %p406 = por %p404, %p405
      %p407 = scmp.ne.s32.totalorder %s393, %s394
      %p408 = scmp.eq.s32.totalorder %s36, 3
      %p409 = por %p407, %p408
      %p411 = scmp.ne.s32.totalorder %s394, %s410
      %p412 = scmp.eq.s32.totalorder %s36, 0
      %p413 = por %p411, %p412
      %s414 = ssub.s32 %s38, %s45
      %p415 = scmp.eq.s32.totalorder %s414, 0
      %s417 = sadd.s32 %s416, 1
      %s418 = scalar_select %p415, %s416, %s417
      %p421 = pneg %p415
      %p422 = scmp.eq.s32.totalorder %s30, 3
      %p423 = por %p421, %p422
      %p424 = scmp.ne.s32.totalorder %s416, %s419
      %p425 = scmp.eq.s32.totalorder %s30, 0
      %p426 = por %p424, %p425
      %p427 = scmp.ne.s32.totalorder %s416, %s419
      %p428 = scmp.eq.s32.totalorder %s35, 3
      %p429 = por %p427, %p428
      %p430 = scmp.ne.s32.totalorder %s419, %s420
      %p431 = scmp.eq.s32.totalorder %s35, 0
      %p432 = por %p430, %p431
      %p433 = scmp.ne.s32.totalorder %s419, %s420
      %p434 = scmp.eq.s32.totalorder %s36, 3
      %p435 = por %p433, %p434
      %p437 = scmp.ne.s32.totalorder %s420, %s436
      %p438 = scmp.eq.s32.totalorder %s36, 0
      %p439 = por %p437, %p438
      %s440 = ssub.s32 %s38, %s45
      %p441 = scmp.eq.s32.totalorder %s440, 0
      %s443 = sadd.s32 %s442, 1
      %s444 = scalar_select %p441, %s442, %s443
      %p447 = pneg %p441
      %p448 = scmp.eq.s32.totalorder %s30, 3
      %p449 = por %p447, %p448
      %p450 = scmp.ne.s32.totalorder %s442, %s445
      %p451 = scmp.eq.s32.totalorder %s30, 0
      %p452 = por %p450, %p451
      %p453 = scmp.ne.s32.totalorder %s442, %s445
      %p454 = scmp.eq.s32.totalorder %s35, 3
      %p455 = por %p453, %p454
      %p456 = scmp.ne.s32.totalorder %s445, %s446
      %p457 = scmp.eq.s32.totalorder %s35, 0
      %p458 = por %p456, %p457
      %p459 = scmp.ne.s32.totalorder %s445, %s446
      %p460 = scmp.eq.s32.totalorder %s36, 3
      %p461 = por %p459, %p460
      %p463 = scmp.ne.s32.totalorder %s446, %s462
      %p464 = scmp.eq.s32.totalorder %s36, 0
      %p465 = por %p463, %p464
      %s467 = sadd.s32 %s466, 1
      %p470 = scmp.eq.s32.totalorder %s30, 3
      %p471 = scmp.ne.s32.totalorder %s466, %s468
      %p472 = scmp.eq.s32.totalorder %s30, 0
      %p473 = por %p471, %p472
      %p474 = scmp.ne.s32.totalorder %s466, %s468
      %p475 = scmp.eq.s32.totalorder %s35, 3
      %p476 = por %p474, %p475
      %p477 = scmp.ne.s32.totalorder %s468, %s469
      %p478 = scmp.eq.s32.totalorder %s35, 0
      %p479 = por %p477, %p478
      %p480 = scmp.ne.s32.totalorder %s468, %s469
      %p481 = scmp.eq.s32.totalorder %s36, 3
      %p482 = por %p480, %p481
      %p484 = scmp.ne.s32.totalorder %s469, %s483
      %p485 = scmp.eq.s32.totalorder %s36, 0
      %p486 = por %p484, %p485
      %s488 = sadd.s32 %s487, 1
      %p491 = scmp.eq.s32.totalorder %s30, 3
      %p492 = scmp.ne.s32.totalorder %s487, %s489
      %p493 = scmp.eq.s32.totalorder %s30, 0
      %p494 = por %p492, %p493
      %p495 = scmp.ne.s32.totalorder %s487, %s489
      %p496 = scmp.eq.s32.totalorder %s35, 3
      %p497 = por %p495, %p496
      %p498 = scmp.ne.s32.totalorder %s489, %s490
      %p499 = scmp.eq.s32.totalorder %s35, 0
      %p500 = por %p498, %p499
      %p501 = scmp.ne.s32.totalorder %s489, %s490
      %p502 = scmp.eq.s32.totalorder %s36, 3
      %p503 = por %p501, %p502
      %p505 = scmp.ne.s32.totalorder %s490, %s504
      %p506 = scmp.eq.s32.totalorder %s36, 0
      %p507 = por %p505, %p506
      %s508 = ssub.s32 %s37, %s49
      %p509 = scmp.eq.s32.totalorder %s508, 0
      %s511 = sadd.s32 %s510, 1
      %s512 = scalar_select %p509, %s510, %s511
      %p515 = pneg %p509
      %p516 = scmp.eq.s32.totalorder %s30, 3
      %p517 = por %p515, %p516
      %p518 = scmp.ne.s32.totalorder %s510, %s513
      %p519 = scmp.eq.s32.totalorder %s30, 0
      %p520 = por %p518, %p519
      %p521 = scmp.ne.s32.totalorder %s510, %s513
      %p522 = scmp.eq.s32.totalorder %s35, 3
      %p523 = por %p521, %p522
      %p524 = scmp.ne.s32.totalorder %s513, %s514
      %p525 = scmp.eq.s32.totalorder %s35, 0
      %p526 = por %p524, %p525
      %p527 = scmp.ne.s32.totalorder %s513, %s514
      %p528 = scmp.eq.s32.totalorder %s36, 3
      %p529 = por %p527, %p528
      %p531 = scmp.ne.s32.totalorder %s514, %s530
      %p532 = scmp.eq.s32.totalorder %s36, 0
      %p533 = por %p531, %p532
      %p534 = scmp.le.s32.totalorder 1, %s30
      %p535 = scmp.lt.s32.totalorder %s30, 5
      %p536 = pnand %p534, %p535
      %p537 = pneg %p536
      // Predicated region
      $region9: #{transformer_forward.2} parent=5 // pred_check
        _
      $region10: #{transformer_forward.2} parent=5 // pred_check_branch
        %539 = sbr.rel (%p536) target = $region12
      $region11: #{transformer_forward.2} parent=5 // pred_region
        %s540 = ssub.s32 %s30, 1
        // Predicated region
        $region13: #{transformer_forward.2} parent=11 // pred_check
          %p541 = pneg %p479
        $region14: #{transformer_forward.2} parent=11 // pred_check_branch
          %543 = sbr.rel (%p541) target = $region16
        $region15: #{transformer_forward.2} parent=11 // pred_region
          _
        $region16: #{transformer_forward.2} parent=11 // pred_fallthru
          _
        // Predicated region
        $region17: #{transformer_forward.2} parent=11 // pred_check
          %p544 = pneg %p500
        $region18: #{transformer_forward.2} parent=11 // pred_check_branch
          %546 = sbr.rel (%p544) target = $region20
        $region19: #{transformer_forward.2} parent=11 // pred_region
          _
        $region20: #{transformer_forward.2} parent=11 // pred_fallthru
          _
      $region12: #{transformer_forward.2} parent=5 // pred_fallthru
        _
      %p547 = scmp.lt.s32.totalorder %s30, 4
      // Predicated region
      $region21: #{transformer_forward.2} parent=5 // pred_check
        %p548 = pneg %p547
      $region22: #{transformer_forward.2} parent=5 // pred_check_branch
        %550 = sbr.rel (%p548) target = $region24
      $region23: #{transformer_forward.2} parent=5 // pred_region
        // Predicated region
        $region25: #{transformer_forward.2} parent=23 // pred_check
          %p551 = pneg %p62
        $region26: #{transformer_forward.2} parent=23 // pred_check_branch
          %553 = sbr.rel (%p551) target = $region28
        $region27: #{transformer_forward.2} parent=23 // pred_region
          %s554 = smul.u32 2, %s37
          %p555 = scmp.lt.s32.totalorder %s554, 3
          %s556 = scalar_select %p555, %s554, 3
          %s557 = smul.addr %s556, 8
          %s558 = scalar_lea.vmem %s0, %s557
          %s559 = smul.u32 2, %s37
        $region28: #{transformer_forward.2} parent=23 // pred_fallthru
          _
        // Predicated region
        $region29: #{transformer_forward.2} parent=23 // pred_check
          %p560 = pneg %p88
        $region30: #{transformer_forward.2} parent=23 // pred_check_branch
          %562 = sbr.rel (%p560) target = $region32
        $region31: #{transformer_forward.2} parent=23 // pred_region
          %s563 = smul.u32 2, %s37
          %p564 = scmp.lt.s32.totalorder %s563, 3
          %s565 = scalar_select %p564, %s563, 3
          %s566 = smul.addr %s565, 8
          %s567 = scalar_lea.vmem %s1, %s566
          %s568 = smul.u32 2, %s37
        $region32: #{transformer_forward.2} parent=23 // pred_fallthru
          _
        // Predicated region
        $region33: #{transformer_forward.2} parent=23 // pred_check
          %p569 = pneg %p114
        $region34: #{transformer_forward.2} parent=23 // pred_check_branch
          %571 = sbr.rel (%p569) target = $region36
        $region35: #{transformer_forward.2} parent=23 // pred_region
          %p572 = scmp.lt.s32.totalorder %s38, 1
          %s573 = scalar_select %p572, %s38, 1
          %s574 = smul.addr %s573, 4
          %s575 = smul.addr %s574, 8
          %s576 = scalar_lea.vmem %s2, %s575
        $region36: #{transformer_forward.2} parent=23 // pred_fallthru
          _
        // Predicated region
        $region37: #{transformer_forward.2} parent=23 // pred_check
          %p577 = pneg %p140
        $region38: #{transformer_forward.2} parent=23 // pred_check_branch
          %579 = sbr.rel (%p577) target = $region40
        $region39: #{transformer_forward.2} parent=23 // pred_region
          %p580 = scmp.lt.s32.totalorder %s38, 1
          %s581 = scalar_select %p580, %s38, 1
          %s582 = scalar_lea.vmem %s3, %s581
        $region40: #{transformer_forward.2} parent=23 // pred_fallthru
          _
        // Predicated region
        $region41: #{transformer_forward.2} parent=23 // pred_check
          %p583 = pneg %p166
        $region42: #{transformer_forward.2} parent=23 // pred_check_branch
          %585 = sbr.rel (%p583) target = $region44
        $region43: #{transformer_forward.2} parent=23 // pred_region
          %p586 = scmp.lt.s32.totalorder %s38, 1
          %s587 = scalar_select %p586, %s38, 1
          %s588 = smul.addr %s587, 4
          %s589 = smul.addr %s588, 8
          %s590 = scalar_lea.vmem %s4, %s589
        $region44: #{transformer_forward.2} parent=23 // pred_fallthru
          _
        // Predicated region
        $region45: #{transformer_forward.2} parent=23 // pred_check
          %p591 = pneg %p192
        $region46: #{transformer_forward.2} parent=23 // pred_check_branch
          %593 = sbr.rel (%p591) target = $region48
        $region47: #{transformer_forward.2} parent=23 // pred_region
          %p594 = scmp.lt.s32.totalorder %s38, 1
          %s595 = scalar_select %p594, %s38, 1
          %s596 = scalar_lea.vmem %s5, %s595
        $region48: #{transformer_forward.2} parent=23 // pred_fallthru
          _
        // Predicated region
        $region49: #{transformer_forward.2} parent=23 // pred_check
          %p597 = pneg %p218
        $region50: #{transformer_forward.2} parent=23 // pred_check_branch
          %599 = sbr.rel (%p597) target = $region52
        $region51: #{transformer_forward.2} parent=23 // pred_region
          %s600 = sand.u32 %s208, 1
          %s601 = scalar_lea.sflag [#allocation4], %s600
          %s602 = sand.u32 %s208, 1
          %s603 = smul.addr %s602, 32
          %s604 = scalar_lea.vmem [#allocation3], %s603
          %606 = vsyncadd %s601, 0
          %s607 = smul.addr %s38, 4
          %s608 = smul.addr %s607, 8
          %s609 = scalar_lea.hbm %s6, %s608
          %s610 = sshll.u32 %s609, 4
          %s611 = int_to_ptr.hbm [resolvable:$true] %s610
          %s612 = sshll.u32 %s604, 4
          %s613 = int_to_ptr.vmem [resolvable:$true] %s612
          %618 = dma.hbm_to_vmem [thread:$0]  %s611, 512, %s613, %s601, 128, 128, 8
        $region52: #{transformer_forward.2} parent=23 // pred_fallthru
          _
        // Predicated region
        $region53: #{transformer_forward.2} parent=23 // pred_check
          %p619 = pneg %p244
        $region54: #{transformer_forward.2} parent=23 // pred_check_branch
          %621 = sbr.rel (%p619) target = $region56
        $region55: #{transformer_forward.2} parent=23 // pred_region
          %p622 = scmp.lt.s32.totalorder %s38, 1
          %s623 = scalar_select %p622, %s38, 1
          %s624 = scalar_lea.vmem %s7, %s623
        $region56: #{transformer_forward.2} parent=23 // pred_fallthru
          _
        // Predicated region
        $region57: #{transformer_forward.2} parent=23 // pred_check
          %p625 = pneg %p270
        $region58: #{transformer_forward.2} parent=23 // pred_check_branch
          %627 = sbr.rel (%p625) target = $region60
        $region59: #{transformer_forward.2} parent=23 // pred_region
          %p628 = scmp.lt.s32.totalorder %s38, 1
          %s629 = scalar_select %p628, %s38, 1
          %s630 = scalar_lea.vmem %s8, %s629
        $region60: #{transformer_forward.2} parent=23 // pred_fallthru
          _
        // Predicated region
        $region61: #{transformer_forward.2} parent=23 // pred_check
          %p631 = pneg %p296
        $region62: #{transformer_forward.2} parent=23 // pred_check_branch
          %633 = sbr.rel (%p631) target = $region64
        $region63: #{transformer_forward.2} parent=23 // pred_region
          %p634 = scmp.lt.s32.totalorder %s38, 1
          %s635 = scalar_select %p634, %s38, 1
          %s636 = scalar_lea.vmem %s9, %s635
        $region64: #{transformer_forward.2} parent=23 // pred_fallthru
          _
        // Predicated region
        $region65: #{transformer_forward.2} parent=23 // pred_check
          %p637 = pneg %p322
        $region66: #{transformer_forward.2} parent=23 // pred_check_branch
          %639 = sbr.rel (%p637) target = $region68
        $region67: #{transformer_forward.2} parent=23 // pred_region
          %s640 = sand.u32 %s312, 1
          %s641 = scalar_lea.sflag [#allocation6], %s640
          %s642 = sand.u32 %s312, 1
          %s643 = smul.addr %s642, 32
          %s644 = scalar_lea.vmem [#allocation5], %s643
          %646 = vsyncadd %s641, 0
          %s647 = smul.addr %s38, 4
          %s648 = smul.addr %s647, 8
          %s649 = scalar_lea.hbm %s10, %s648
          %s650 = sshll.u32 %s649, 4
          %s651 = int_to_ptr.hbm [resolvable:$true] %s650
          %s652 = sshll.u32 %s644, 4
          %s653 = int_to_ptr.vmem [resolvable:$true] %s652
          %658 = dma.hbm_to_vmem [thread:$0]  %s651, 512, %s653, %s641, 128, 128, 8
        $region68: #{transformer_forward.2} parent=23 // pred_fallthru
          _
        // Predicated region
        $region69: #{transformer_forward.2} parent=23 // pred_check
          %p659 = pneg %p348
        $region70: #{transformer_forward.2} parent=23 // pred_check_branch
          %661 = sbr.rel (%p659) target = $region72
        $region71: #{transformer_forward.2} parent=23 // pred_region
          %p662 = scmp.lt.s32.totalorder %s38, 1
          %s663 = scalar_select %p662, %s38, 1
          %s664 = scalar_lea.vmem %s11, %s663
        $region72: #{transformer_forward.2} parent=23 // pred_fallthru
          _
        // Predicated region
        $region73: #{transformer_forward.2} parent=23 // pred_check
          %p665 = pneg %p374
        $region74: #{transformer_forward.2} parent=23 // pred_check_branch
          %667 = sbr.rel (%p665) target = $region76
        $region75: #{transformer_forward.2} parent=23 // pred_region
          %p668 = scmp.lt.s32.totalorder %s38, 1
          %s669 = scalar_select %p668, %s38, 1
          %s670 = smul.addr %s669, 8
          %s671 = smul.addr %s670, 8
          %s672 = scalar_lea.vmem %s12, %s671
        $region76: #{transformer_forward.2} parent=23 // pred_fallthru
          _
        // Predicated region
        $region77: #{transformer_forward.2} parent=23 // pred_check
          %p673 = pneg %p400
        $region78: #{transformer_forward.2} parent=23 // pred_check_branch
          %675 = sbr.rel (%p673) target = $region80
        $region79: #{transformer_forward.2} parent=23 // pred_region
          %p676 = scmp.lt.s32.totalorder %s38, 1
          %s677 = scalar_select %p676, %s38, 1
          %s678 = scalar_lea.vmem %s13, %s677
        $region80: #{transformer_forward.2} parent=23 // pred_fallthru
          _
        // Predicated region
        $region81: #{transformer_forward.2} parent=23 // pred_check
          %p679 = pneg %p426
        $region82: #{transformer_forward.2} parent=23 // pred_check_branch
          %681 = sbr.rel (%p679) target = $region84
        $region83: #{transformer_forward.2} parent=23 // pred_region
          %p682 = scmp.lt.s32.totalorder %s38, 1
          %s683 = scalar_select %p682, %s38, 1
          %s684 = scalar_lea.vmem %s14, %s683
        $region84: #{transformer_forward.2} parent=23 // pred_fallthru
          _
        // Predicated region
        $region85: #{transformer_forward.2} parent=23 // pred_check
          %p685 = pneg %p452
        $region86: #{transformer_forward.2} parent=23 // pred_check_branch
          %687 = sbr.rel (%p685) target = $region88
        $region87: #{transformer_forward.2} parent=23 // pred_region
          %p688 = scmp.lt.s32.totalorder %s38, 1
          %s689 = scalar_select %p688, %s38, 1
          %s690 = scalar_lea.vmem %s15, %s689
        $region88: #{transformer_forward.2} parent=23 // pred_fallthru
          _
      $region24: #{transformer_forward.2} parent=5 // pred_fallthru
        _
      %p691 = scmp.le.s32.totalorder 1, %s30
      %p692 = scmp.lt.s32.totalorder %s30, 5
      %p693 = pnand %p691, %p692
      %p694 = pneg %p693
      // Predicated region
      $region89: #{transformer_forward.2} parent=5 // pred_check
        _
      $region90: #{transformer_forward.2} parent=5 // pred_check_branch
        %696 = sbr.rel (%p693) target = $region92
      $region91: #{transformer_forward.2} parent=5 // pred_region
        %s697 = ssub.s32 %s30, 1
        %s698 = sand.u32 %s211, 1
        %s699 = scalar_lea.sflag [#allocation4], %s698
        %s700 = sand.u32 %s211, 1
        %s701 = smul.addr %s700, 32
        %s702 = scalar_lea.vmem [#allocation3], %s701
        // Predicated region
        $region93: #{transformer_forward.2} parent=91 // pred_check
          %p703 = pneg %p224
        $region94: #{transformer_forward.2} parent=91 // pred_check_branch
          %705 = sbr.rel (%p703) target = $region96
        $region95: #{transformer_forward.2} parent=91 // pred_region
          %707 = dma.done %s699, 512
        $region96: #{transformer_forward.2} parent=91 // pred_fallthru
          _
        %s708 = sand.u32 %s315, 1
        %s709 = scalar_lea.sflag [#allocation6], %s708
        %s710 = sand.u32 %s315, 1
        %s711 = smul.addr %s710, 32
        %s712 = scalar_lea.vmem [#allocation5], %s711
        // Predicated region
        $region97: #{transformer_forward.2} parent=91 // pred_check
          %p713 = pneg %p328
        $region98: #{transformer_forward.2} parent=91 // pred_check_branch
          %715 = sbr.rel (%p713) target = $region100
        $region99: #{transformer_forward.2} parent=91 // pred_region
          %717 = dma.done %s709, 512
        $region100: #{transformer_forward.2} parent=91 // pred_fallthru
          _
        %s718 = smul.u32 2, %s39
        %p719 = scmp.lt.s32.totalorder %s718, 3
        %s720 = scalar_select %p719, %s718, 3
        %s721 = smul.addr %s720, 8
        %s722 = scalar_lea.vmem %s0, %s721
        %p723 = pneg %p68
        %p724 = pneg %p65
        %s725 = smul.u32 2, %s39
        %p726 = scmp.lt.s32.totalorder %s725, 3
        %s727 = scalar_select %p726, %s725, 3
        %s728 = smul.addr %s727, 8
        %s729 = scalar_lea.vmem %s1, %s728
        %p730 = pneg %p94
        %p731 = pneg %p91
        %p732 = scmp.lt.s32.totalorder %s40, 1
        %s733 = scalar_select %p732, %s40, 1
        %s734 = smul.addr %s733, 4
        %s735 = smul.addr %s734, 8
        %s736 = scalar_lea.vmem %s2, %s735
        %p737 = pneg %p120
        %p738 = pneg %p117
        %p739 = scmp.lt.s32.totalorder %s40, 1
        %s740 = scalar_select %p739, %s40, 1
        %s741 = scalar_lea.vmem %s3, %s740
        %p742 = pneg %p146
        %p743 = pneg %p143
        %p744 = scmp.lt.s32.totalorder %s40, 1
        %s745 = scalar_select %p744, %s40, 1
        %s746 = smul.addr %s745, 4
        %s747 = smul.addr %s746, 8
        %s748 = scalar_lea.vmem %s4, %s747
        %p749 = pneg %p172
        %p750 = pneg %p169
        %p751 = scmp.lt.s32.totalorder %s40, 1
        %s752 = scalar_select %p751, %s40, 1
        %s753 = scalar_lea.vmem %s5, %s752
        %p754 = pneg %p198
        %p755 = pneg %p195
        %s756 = sand.u32 %s211, 1
        %s757 = scalar_lea.sflag [#allocation4], %s756
        %s758 = sand.u32 %s211, 1
        %s759 = smul.addr %s758, 32
        %s760 = scalar_lea.vmem [#allocation3], %s759
        %p761 = pneg %p224
        %p762 = pneg %p221
        %p763 = scmp.lt.s32.totalorder %s40, 1
        %s764 = scalar_select %p763, %s40, 1
        %s765 = scalar_lea.vmem %s7, %s764
        %p766 = pneg %p250
        %p767 = pneg %p247
        %p768 = scmp.lt.s32.totalorder %s40, 1
        %s769 = scalar_select %p768, %s40, 1
        %s770 = scalar_lea.vmem %s8, %s769
        %p771 = pneg %p276
        %p772 = pneg %p273
        %p773 = scmp.lt.s32.totalorder %s40, 1
        %s774 = scalar_select %p773, %s40, 1
        %s775 = scalar_lea.vmem %s9, %s774
        %p776 = pneg %p302
        %p777 = pneg %p299
        %s778 = sand.u32 %s315, 1
        %s779 = scalar_lea.sflag [#allocation6], %s778
        %s780 = sand.u32 %s315, 1
        %s781 = smul.addr %s780, 32
        %s782 = scalar_lea.vmem [#allocation5], %s781
        %p783 = pneg %p328
        %p784 = pneg %p325
        %p785 = scmp.lt.s32.totalorder %s40, 1
        %s786 = scalar_select %p785, %s40, 1
        %s787 = scalar_lea.vmem %s11, %s786
        %p788 = pneg %p354
        %p789 = pneg %p351
        %p790 = scmp.lt.s32.totalorder %s40, 1
        %s791 = scalar_select %p790, %s40, 1
        %s792 = smul.addr %s791, 8
        %s793 = smul.addr %s792, 8
        %s794 = scalar_lea.vmem %s12, %s793
        %p795 = pneg %p380
        %p796 = pneg %p377
        %p797 = scmp.lt.s32.totalorder %s40, 1
        %s798 = scalar_select %p797, %s40, 1
        %s799 = scalar_lea.vmem %s13, %s798
        %p800 = pneg %p406
        %p801 = pneg %p403
        %p802 = scmp.lt.s32.totalorder %s40, 1
        %s803 = scalar_select %p802, %s40, 1
        %s804 = scalar_lea.vmem %s14, %s803
        %p805 = pneg %p432
        %p806 = pneg %p429
        %p807 = scmp.lt.s32.totalorder %s40, 1
        %s808 = scalar_select %p807, %s40, 1
        %s809 = scalar_lea.vmem %s15, %s808
        %p810 = pneg %p458
        %p811 = pneg %p455
        %p812 = pneg %p479
        %p813 = pneg %p476
        %p814 = pneg %p500
        %p815 = pneg %p497
        %p816 = pneg %p526
        %p817 = pneg %p523
        %s818 = smul.u32 2, %s39
        %p819 = scmp.lt.s32.totalorder %s818, 3
        %s820 = scalar_select %p819, %s818, 3
        %s821 = smul.addr %s820, 8
        %s822 = scalar_lea.vmem %s18, %s821
        %s823 = smul.u32 2, %s39
        %p824 = scmp.lt.s32.totalorder %s823, 3
        %s825 = scalar_select %p824, %s823, 3
        %s826 = smul.addr %s825, 8
        %s827 = scalar_lea.vmem %s0, %s826
        %s828 = smul.u32 2, %s39
        %s829 = smul.u32 2, %s39
        %p830 = scmp.lt.s32.totalorder %s829, 3
        %s831 = scalar_select %p830, %s829, 3
        %s832 = smul.addr %s831, 8
        %s833 = scalar_lea.vmem %s1, %s832
        %s834 = smul.u32 2, %s39
        %p835 = scmp.lt.s32.totalorder %s40, 1
        %s836 = scalar_select %p835, %s40, 1
        %s837 = smul.addr %s836, 4
        %s838 = smul.addr %s837, 8
        %s839 = scalar_lea.vmem %s2, %s838
        %p840 = scmp.lt.s32.totalorder %s40, 1
        %s841 = scalar_select %p840, %s40, 1
        %s842 = scalar_lea.vmem %s3, %s841
        %p843 = scmp.lt.s32.totalorder %s40, 1
        %s844 = scalar_select %p843, %s40, 1
        %s845 = smul.addr %s844, 4
        %s846 = smul.addr %s845, 8
        %s847 = scalar_lea.vmem %s4, %s846
        %p848 = scmp.lt.s32.totalorder %s40, 1
        %s849 = scalar_select %p848, %s40, 1
        %s850 = scalar_lea.vmem %s5, %s849
        %p851 = scmp.lt.s32.totalorder %s40, 1
        %s852 = scalar_select %p851, %s40, 1
        %s853 = scalar_lea.vmem %s7, %s852
        %p854 = scmp.lt.s32.totalorder %s40, 1
        %s855 = scalar_select %p854, %s40, 1
        %s856 = scalar_lea.vmem %s8, %s855
        %p857 = scmp.lt.s32.totalorder %s40, 1
        %s858 = scalar_select %p857, %s40, 1
        %s859 = scalar_lea.vmem %s9, %s858
        %p860 = scmp.lt.s32.totalorder %s40, 1
        %s861 = scalar_select %p860, %s40, 1
        %s862 = scalar_lea.vmem %s11, %s861
        %p863 = scmp.lt.s32.totalorder %s40, 1
        %s864 = scalar_select %p863, %s40, 1
        %s865 = smul.addr %s864, 8
        %s866 = smul.addr %s865, 8
        %s867 = scalar_lea.vmem %s12, %s866
        %p868 = scmp.lt.s32.totalorder %s40, 1
        %s869 = scalar_select %p868, %s40, 1
        %s870 = scalar_lea.vmem %s13, %s869
        %p871 = scmp.lt.s32.totalorder %s40, 1
        %s872 = scalar_select %p871, %s40, 1
        %s873 = scalar_lea.vmem %s14, %s872
        %p874 = scmp.lt.s32.totalorder %s40, 1
        %s875 = scalar_select %p874, %s40, 1
        %s876 = scalar_lea.vmem %s15, %s875
        %s877 = smul.u32 2, %s39
        %p878 = scmp.lt.s32.totalorder %s877, 3
        %s879 = scalar_select %p878, %s877, 3
        %s880 = smul.addr %s879, 8
        %s881 = scalar_lea.vmem %s18, %s880
        %s882 = smul.u32 2, %s39
        %p883 = scmp.eq.s32.totalorder %s40, 0
        // Predicated region
        $region101: #{transformer_forward.2} parent=91 // pred_check
          %p884 = pneg %p883
        $region102: #{transformer_forward.2} parent=91 // pred_check_branch
          %886 = sbr.rel (%p884) target = $region104
        $region103: #{transformer_forward.2} parent=91 // pred_region
          %v887 = vld [vmem:[%s827] sm:$0xff]
          %v888 = vld [vmem:[%s827 + $0x8] sm:$0xff]
          %vm889 = vcmask 261120
          %890 = vst.msk [vmem:[#allocation2] sm:$0xff] %vm889, %v887
          %891 = vst.msk [vmem:[#allocation2 + $0x8] sm:$0xff] %vm889, %v888
        $region104: #{transformer_forward.2} parent=91 // pred_fallthru
          _
        %v892 = vld [vmem:[#allocation2] sm:$0xff]
        %v893 = vld [vmem:[#allocation2 + $0x8] sm:$0xff]
        %v894 = vld [vmem:[%s833] sm:$0xff]
        %v895 = vld [vmem:[%s833 + $0x8] sm:$0xff]
        %v896 = vadd.f32 %v892, %v894
        %v897 = vadd.f32 %v893, %v895
        %v898 = vld [vmem:[%s839] sm:$0xff]
        %v899 = vld [vmem:[%s839 + $0x8] sm:$0xff]
        %v900 = vld [vmem:[%s839 + $0x10] sm:$0xff]
        %v901 = vld [vmem:[%s839 + $0x18] sm:$0xff]
        %v902 = vld [vmem:[%s842] sm:$0x1]
        %v904 = vperm.slane %v902, 0
        %vm906 = vcmask 261120
        %v908 = vsel %vm906, %v896, 0
        %v911 = vsel %vm906, %v897, 0
        %913 = vmatpush.msra.mxu0 0.0
        %914 = vmatpush.msra.mxu0 0.0
        %915 = vmatpush.msra.mxu0 0.0
        %916 = vmatpush.msra.mxu0 0.0
        %917 = vmatpush.msra.mxu0 0.0
        %918 = vmatpush.msra.mxu0 0.0
        %919 = vmatpush.msra.mxu0 0.0
        %920 = vmatpush.msra.mxu0 0.0
        %921 = vmatpush.msra.mxu0 0.0
        %922 = vmatpush.msra.mxu0 0.0
        %923 = vmatpush.msra.mxu0 0.0
        %924 = vmatpush.msra.mxu0 0.0
        %925 = vmatpush.msra.mxu0 %v901
        %926 = vmatpush.msra.mxu0 %v900
        %927 = vmatpush.msra.mxu0 %v899
        %928 = vmatpush.msra.mxu0 %v898
        %929 = vmatmul.f32.gmra.mxu0 %v908
        %v930 = vpop.f32.mrf.mxu0
        %v931 = vadd.f32 %v904, %v930
        %932 = vmatmul.f32.gmra.mxu0 %v911
        %v933 = vpop.f32.mrf.mxu0
        %v934 = vadd.f32 %v904, %v933
        %935 = vdwg.mxu0
        %v936 = vld [vmem:[%s847] sm:$0xff]
        %v937 = vld [vmem:[%s847 + $0x8] sm:$0xff]
        %v938 = vld [vmem:[%s847 + $0x10] sm:$0xff]
        %v939 = vld [vmem:[%s847 + $0x18] sm:$0xff]
        %v940 = vld [vmem:[%s850] sm:$0x1]
        %v942 = vperm.slane %v940, 0
        %v945 = vsel %vm906, %v892, 0
        %v948 = vsel %vm906, %v893, 0
        %950 = vmatpush.msra.mxu0 0.0
        %951 = vmatpush.msra.mxu0 0.0
        %952 = vmatpush.msra.mxu0 0.0
        %953 = vmatpush.msra.mxu0 0.0
        %954 = vmatpush.msra.mxu0 0.0
        %955 = vmatpush.msra.mxu0 0.0
        %956 = vmatpush.msra.mxu0 0.0
        %957 = vmatpush.msra.mxu0 0.0
        %958 = vmatpush.msra.mxu0 0.0
        %959 = vmatpush.msra.mxu0 0.0
        %960 = vmatpush.msra.mxu0 0.0
        %961 = vmatpush.msra.mxu0 0.0
        %962 = vmatpush.msra.mxu0 %v939
        %963 = vmatpush.msra.mxu0 %v938
        %964 = vmatpush.msra.mxu0 %v937
        %965 = vmatpush.msra.mxu0 %v936
        %966 = vmatmul.f32.gmra.mxu0 %v945
        %v967 = vpop.f32.mrf.mxu0
        %v968 = vadd.f32 %v942, %v967
        %969 = vmatmul.f32.gmra.mxu0 %v948
        %v970 = vpop.f32.mrf.mxu0
        %v971 = vadd.f32 %v942, %v970
        %972 = vdwg.mxu0
        %975 = vrot.lane.b32.xlu0 %v931, 96
        %v976 = vpop.permute.xlu0 %975
        %977 = vrot.lane.b32.xlu0 %v934, 96
        %v978 = vpop.permute.xlu0 %977
        %vm979 = vcmask 64512
        %v980 = vsel %vm979, %v931, 0
        %v982 = vsel %vm979, %v934, 0
        %v984 = vsel %vm979, %v976, 0
        %v986 = vsel %vm979, %v978, 0
        %988 = vmatpush.xpose.msra.mxu0 0.0
        %989 = vmatpush.xpose.msra.mxu0 0.0
        %990 = vmatpush.xpose.msra.mxu0 0.0
        %991 = vmatpush.xpose.msra.mxu0 0.0
        %992 = vmatpush.xpose.msra.mxu0 0.0
        %993 = vmatpush.xpose.msra.mxu0 0.0
        %994 = vmatpush.xpose.msra.mxu0 0.0
        %995 = vmatpush.xpose.msra.mxu0 0.0
        %996 = vmatpush.xpose.msra.mxu0 0.0
        %997 = vmatpush.xpose.msra.mxu0 0.0
        %998 = vmatpush.xpose.msra.mxu0 0.0
        %999 = vmatpush.xpose.msra.mxu0 0.0
        %1000 = vmatpush.xpose.msra.mxu0 0.0
        %1001 = vmatpush.xpose.msra.mxu0 0.0
        %1002 = vmatpush.xpose.msra.mxu0 %v986
        %1003 = vmatpush.xpose.msra.mxu0 %v984
        %1004 = vmatmul.f32.gmra.mxu0 %v980
        %v1005 = vpop.f32.mrf.mxu0
        %v1006 = vadd.f32 0.0, %v1005
        %1007 = vmatmul.f32.gmra.mxu0 %v982
        %v1008 = vpop.f32.mrf.mxu0
        %v1009 = vadd.f32 0.0, %v1008
        %1010 = vdwg.mxu0
        %v1011 = vmul.f32 %v1006, 0.35355338
        %v1012 = vmul.f32 %v1009, 0.35355338
        %vm1013 = vcmask 130048
        %v1014 = vsel %vm1013, %v1011, -inf
        %1015 = vmax.xlane.f32.xlu0 %v1014
        %v1016 = vpop.xlane.xlu0 %1015
        %v1017 = vsel %vm1013, %v1012, -inf
        %1018 = vmax.xlane.f32.xlu0 %v1017
        %v1019 = vpop.xlane.xlu0 %1018
        %v1020 = vsub.f32 %v1011, %v1016
        %v1021 = vsub.f32 %v1012, %v1019
        %v1022 = vmul.f32 %v1020, 1.442695
        %v1023 = vpow.pop %v1022
        %v1024 = vmul.f32 %v1021, 1.442695
        %v1025 = vpow.pop %v1024
        %v1026 = vsel %vm1013, %v1023, 0.0
        %1027 = vadd.xlane.f32.xlu0 %v1026
        %v1028 = vpop.xlane.xlu0 %1027
        %v1029 = vsel %vm1013, %v1025, 0.0
        %1030 = vadd.xlane.f32.xlu0 %v1029
        %v1031 = vpop.xlane.xlu0 %1030
        %v1032 = vrcp.pop %v1028
        %v1033 = vmul.f32 %v1028, %v1032
        %v1034 = vsub.f32 1.0, %v1033
        %v1035 = vmul.f32 %v1032, %v1034
        %v1036 = vadd.f32 %v1032, %v1035
        %vm1037 = vweird.f32 %v1028
        %vm1038 = vweird.f32 %v1032
        %vm1039 = vmor %vm1037, %vm1038
        %v1040 = vsel %vm1039, %v1032, %v1036
        %v1041 = vand.u32 2147483647, %v1028
        %vm1042 = vcmp.eq.f32.partialorder %v1041, 8.507059e+37
        %v1043 = vand.u32 %v1028, 2147483648
        %v1044 = vor.u32 1.1754944e-38, %v1043
        %v1045 = vsel %vm1042, %v1044, %v1040
        %v1046 = vmul.f32 %v1023, %v1045
        %v1047 = vrcp.pop %v1031
        %v1048 = vmul.f32 %v1031, %v1047
        %v1049 = vsub.f32 1.0, %v1048
        %v1050 = vmul.f32 %v1047, %v1049
        %v1051 = vadd.f32 %v1047, %v1050
        %vm1052 = vweird.f32 %v1031
        %vm1053 = vweird.f32 %v1047
        %vm1054 = vmor %vm1052, %vm1053
        %v1055 = vsel %vm1054, %v1047, %v1051
        %v1056 = vand.u32 2147483647, %v1031
        %vm1057 = vcmp.eq.f32.partialorder %v1056, 8.507059e+37
        %v1058 = vand.u32 %v1031, 2147483648
        %v1059 = vor.u32 1.1754944e-38, %v1058
        %v1060 = vsel %vm1057, %v1059, %v1055
        %v1061 = vmul.f32 %v1025, %v1060
        %v1063 = vsel %vm1013, %v1046, 0
        %v1066 = vsel %vm1013, %v1061, 0
        %1068 = vmatpush.msra.mxu0 0.0
        %1069 = vmatpush.msra.mxu0 0.0
        %1070 = vmatpush.msra.mxu0 0.0
        %1071 = vmatpush.msra.mxu0 0.0
        %1072 = vmatpush.msra.mxu0 0.0
        %1073 = vmatpush.msra.mxu0 0.0
        %1074 = vmatpush.msra.mxu0 0.0
        %1075 = vmatpush.msra.mxu0 0.0
        %1076 = vmatpush.msra.mxu0 0.0
        %1077 = vmatpush.msra.mxu0 0.0
        %1078 = vmatpush.msra.mxu0 0.0
        %1079 = vmatpush.msra.mxu0 0.0
        %1080 = vmatpush.msra.mxu0 0.0
        %1081 = vmatpush.msra.mxu0 0.0
        %1082 = vmatpush.msra.mxu0 %v971
        %1083 = vmatpush.msra.mxu0 %v968
        %1084 = vmatmul.f32.gmra.mxu0 %v1063
        %v1085 = vpop.f32.mrf.mxu0
        %v1086 = vadd.f32 0.0, %v1085
        %1087 = vmatmul.f32.gmra.mxu0 %v1066
        %v1088 = vpop.f32.mrf.mxu0
        %v1089 = vadd.f32 0.0, %v1088
        %1090 = vdwg.mxu0
        %1091 = vrot.lane.b32.xlu0 %v931, 120
        %v1092 = vpop.permute.xlu0 %1091
        %1093 = vrot.lane.b32.xlu0 %v934, 120
        %v1094 = vpop.permute.xlu0 %1093
        %1095 = vrot.lane.b32.xlu0 %v931, 88
        %v1096 = vpop.permute.xlu0 %1095
        %1097 = vrot.lane.b32.xlu0 %v934, 88
        %v1098 = vpop.permute.xlu0 %1097
        %v1099 = vsel %vm979, %v1092, 0
        %v1101 = vsel %vm979, %v1094, 0
        %v1103 = vsel %vm979, %v1096, 0
        %v1105 = vsel %vm979, %v1098, 0
        %1107 = vmatpush.xpose.msra.mxu0 0.0
        %1108 = vmatpush.xpose.msra.mxu0 0.0
        %1109 = vmatpush.xpose.msra.mxu0 0.0
        %1110 = vmatpush.xpose.msra.mxu0 0.0
        %1111 = vmatpush.xpose.msra.mxu0 0.0
        %1112 = vmatpush.xpose.msra.mxu0 0.0
        %1113 = vmatpush.xpose.msra.mxu0 0.0
        %1114 = vmatpush.xpose.msra.mxu0 0.0
        %1115 = vmatpush.xpose.msra.mxu0 0.0
        %1116 = vmatpush.xpose.msra.mxu0 0.0
        %1117 = vmatpush.xpose.msra.mxu0 0.0
        %1118 = vmatpush.xpose.msra.mxu0 0.0
        %1119 = vmatpush.xpose.msra.mxu0 0.0
        %1120 = vmatpush.xpose.msra.mxu0 0.0
        %1121 = vmatpush.xpose.msra.mxu0 %v1105
        %1122 = vmatpush.xpose.msra.mxu0 %v1103
        %1123 = vmatmul.f32.gmra.mxu0 %v1099
        %v1124 = vpop.f32.mrf.mxu0
        %v1125 = vadd.f32 0.0, %v1124
        %1126 = vmatmul.f32.gmra.mxu0 %v1101
        %v1127 = vpop.f32.mrf.mxu0
        %v1128 = vadd.f32 0.0, %v1127
        %1129 = vdwg.mxu0
        %v1130 = vmul.f32 %v1125, 0.35355338
        %v1131 = vmul.f32 %v1128, 0.35355338
        %v1132 = vsel %vm1013, %v1130, -inf
        %1133 = vmax.xlane.f32.xlu0 %v1132
        %v1134 = vpop.xlane.xlu0 %1133
        %v1135 = vsel %vm1013, %v1131, -inf
        %1136 = vmax.xlane.f32.xlu0 %v1135
        %v1137 = vpop.xlane.xlu0 %1136
        %v1138 = vsub.f32 %v1130, %v1134
        %v1139 = vsub.f32 %v1131, %v1137
        %v1140 = vmul.f32 %v1138, 1.442695
        %v1141 = vpow.pop %v1140
        %v1142 = vmul.f32 %v1139, 1.442695
        %v1143 = vpow.pop %v1142
        %v1144 = vsel %vm1013, %v1141, 0.0
        %1145 = vadd.xlane.f32.xlu0 %v1144
        %v1146 = vpop.xlane.xlu0 %1145
        %v1147 = vsel %vm1013, %v1143, 0.0
        %1148 = vadd.xlane.f32.xlu0 %v1147
        %v1149 = vpop.xlane.xlu0 %1148
        %v1150 = vrcp.pop %v1146
        %v1151 = vmul.f32 %v1146, %v1150
        %v1152 = vsub.f32 1.0, %v1151
        %v1153 = vmul.f32 %v1150, %v1152
        %v1154 = vadd.f32 %v1150, %v1153
        %vm1155 = vweird.f32 %v1146
        %vm1156 = vweird.f32 %v1150
        %vm1157 = vmor %vm1155, %vm1156
        %v1158 = vsel %vm1157, %v1150, %v1154
        %v1159 = vand.u32 2147483647, %v1146
        %vm1160 = vcmp.eq.f32.partialorder %v1159, 8.507059e+37
        %v1161 = vand.u32 %v1146, 2147483648
        %v1162 = vor.u32 1.1754944e-38, %v1161
        %v1163 = vsel %vm1160, %v1162, %v1158
        %v1164 = vmul.f32 %v1141, %v1163
        %v1165 = vrcp.pop %v1149
        %v1166 = vmul.f32 %v1149, %v1165
        %v1167 = vsub.f32 1.0, %v1166
        %v1168 = vmul.f32 %v1165, %v1167
        %v1169 = vadd.f32 %v1165, %v1168
        %vm1170 = vweird.f32 %v1149
        %vm1171 = vweird.f32 %v1165
        %vm1172 = vmor %vm1170, %vm1171
        %v1173 = vsel %vm1172, %v1165, %v1169
        %v1174 = vand.u32 2147483647, %v1149
        %vm1175 = vcmp.eq.f32.partialorder %v1174, 8.507059e+37
        %v1176 = vand.u32 %v1149, 2147483648
        %v1177 = vor.u32 1.1754944e-38, %v1176
        %v1178 = vsel %vm1175, %v1177, %v1173
        %v1179 = vmul.f32 %v1143, %v1178
        %1182 = vrot.lane.b32.xlu0 %v968, 120
        %v1183 = vpop.permute.xlu0 %1182
        %1184 = vrot.lane.b32.xlu0 %v971, 120
        %v1185 = vpop.permute.xlu0 %1184
        %v1189 = vsel %vm1013, %v1164, 0
        %v1192 = vsel %vm1013, %v1179, 0
        %1194 = vmatpush.msra.mxu0 0.0
        %1195 = vmatpush.msra.mxu0 0.0
        %1196 = vmatpush.msra.mxu0 0.0
        %1197 = vmatpush.msra.mxu0 0.0
        %1198 = vmatpush.msra.mxu0 0.0
        %1199 = vmatpush.msra.mxu0 0.0
        %1200 = vmatpush.msra.mxu0 0.0
        %1201 = vmatpush.msra.mxu0 0.0
        %1202 = vmatpush.msra.mxu0 0.0
        %1203 = vmatpush.msra.mxu0 0.0
        %1204 = vmatpush.msra.mxu0 0.0
        %1205 = vmatpush.msra.mxu0 0.0
        %1206 = vmatpush.msra.mxu0 0.0
        %1207 = vmatpush.msra.mxu0 0.0
        %1208 = vmatpush.msra.mxu0 %v1185
        %1209 = vmatpush.msra.mxu0 %v1183
        %1210 = vmatmul.f32.gmra.mxu0 %v1189
        %v1211 = vpop.f32.mrf.mxu0
        %v1212 = vadd.f32 0.0, %v1211
        %1213 = vmatmul.f32.gmra.mxu0 %v1192
        %v1214 = vpop.f32.mrf.mxu0
        %v1215 = vadd.f32 0.0, %v1214
        %1216 = vdwg.mxu0
        %1217 = vrot.lane.b32.xlu0 %v931, 112
        %v1218 = vpop.permute.xlu0 %1217
        %1219 = vrot.lane.b32.xlu0 %v934, 112
        %v1220 = vpop.permute.xlu0 %1219
        %1221 = vrot.lane.b32.xlu0 %v931, 80
        %v1222 = vpop.permute.xlu0 %1221
        %1223 = vrot.lane.b32.xlu0 %v934, 80
        %v1224 = vpop.permute.xlu0 %1223
        %v1225 = vsel %vm979, %v1218, 0
        %v1227 = vsel %vm979, %v1220, 0
        %v1229 = vsel %vm979, %v1222, 0
        %v1231 = vsel %vm979, %v1224, 0
        %1233 = vmatpush.xpose.msra.mxu0 0.0
        %1234 = vmatpush.xpose.msra.mxu0 0.0
        %1235 = vmatpush.xpose.msra.mxu0 0.0
        %1236 = vmatpush.xpose.msra.mxu0 0.0
        %1237 = vmatpush.xpose.msra.mxu0 0.0
        %1238 = vmatpush.xpose.msra.mxu0 0.0
        %1239 = vmatpush.xpose.msra.mxu0 0.0
        %1240 = vmatpush.xpose.msra.mxu0 0.0
        %1241 = vmatpush.xpose.msra.mxu0 0.0
        %1242 = vmatpush.xpose.msra.mxu0 0.0
        %1243 = vmatpush.xpose.msra.mxu0 0.0
        %1244 = vmatpush.xpose.msra.mxu0 0.0
        %1245 = vmatpush.xpose.msra.mxu0 0.0
        %1246 = vmatpush.xpose.msra.mxu0 0.0
        %1247 = vmatpush.xpose.msra.mxu0 %v1231
        %1248 = vmatpush.xpose.msra.mxu0 %v1229
        %1249 = vmatmul.f32.gmra.mxu0 %v1225
        %v1250 = vpop.f32.mrf.mxu0
        %v1251 = vadd.f32 0.0, %v1250
        %1252 = vmatmul.f32.gmra.mxu0 %v1227
        %v1253 = vpop.f32.mrf.mxu0
        %v1254 = vadd.f32 0.0, %v1253
        %1255 = vdwg.mxu0
        %v1256 = vmul.f32 %v1251, 0.35355338
        %v1257 = vmul.f32 %v1254, 0.35355338
        %v1258 = vsel %vm1013, %v1256, -inf
        %1259 = vmax.xlane.f32.xlu0 %v1258
        %v1260 = vpop.xlane.xlu0 %1259
        %v1261 = vsel %vm1013, %v1257, -inf
        %1262 = vmax.xlane.f32.xlu0 %v1261
        %v1263 = vpop.xlane.xlu0 %1262
        %v1264 = vsub.f32 %v1256, %v1260
        %v1265 = vsub.f32 %v1257, %v1263
        %v1266 = vmul.f32 %v1264, 1.442695
        %v1267 = vpow.pop %v1266
        %v1268 = vmul.f32 %v1265, 1.442695
        %v1269 = vpow.pop %v1268
        %v1270 = vsel %vm1013, %v1267, 0.0
        %1271 = vadd.xlane.f32.xlu0 %v1270
        %v1272 = vpop.xlane.xlu0 %1271
        %v1273 = vsel %vm1013, %v1269, 0.0
        %1274 = vadd.xlane.f32.xlu0 %v1273
        %v1275 = vpop.xlane.xlu0 %1274
        %v1276 = vrcp.pop %v1272
        %v1277 = vmul.f32 %v1272, %v1276
        %v1278 = vsub.f32 1.0, %v1277
        %v1279 = vmul.f32 %v1276, %v1278
        %v1280 = vadd.f32 %v1276, %v1279
        %vm1281 = vweird.f32 %v1272
        %vm1282 = vweird.f32 %v1276
        %vm1283 = vmor %vm1281, %vm1282
        %v1284 = vsel %vm1283, %v1276, %v1280
        %v1285 = vand.u32 2147483647, %v1272
        %vm1286 = vcmp.eq.f32.partialorder %v1285, 8.507059e+37
        %v1287 = vand.u32 %v1272, 2147483648
        %v1288 = vor.u32 1.1754944e-38, %v1287
        %v1289 = vsel %vm1286, %v1288, %v1284
        %v1290 = vmul.f32 %v1267, %v1289
        %v1291 = vrcp.pop %v1275
        %v1292 = vmul.f32 %v1275, %v1291
        %v1293 = vsub.f32 1.0, %v1292
        %v1294 = vmul.f32 %v1291, %v1293
        %v1295 = vadd.f32 %v1291, %v1294
        %vm1296 = vweird.f32 %v1275
        %vm1297 = vweird.f32 %v1291
        %vm1298 = vmor %vm1296, %vm1297
        %v1299 = vsel %vm1298, %v1291, %v1295
        %v1300 = vand.u32 2147483647, %v1275
        %vm1301 = vcmp.eq.f32.partialorder %v1300, 8.507059e+37
        %v1302 = vand.u32 %v1275, 2147483648
        %v1303 = vor.u32 1.1754944e-38, %v1302
        %v1304 = vsel %vm1301, %v1303, %v1299
        %v1305 = vmul.f32 %v1269, %v1304
        %1306 = vrot.lane.b32.xlu0 %v968, 112
        %v1307 = vpop.permute.xlu0 %1306
        %1308 = vrot.lane.b32.xlu0 %v971, 112
        %v1309 = vpop.permute.xlu0 %1308
        %v1313 = vsel %vm1013, %v1290, 0
        %v1316 = vsel %vm1013, %v1305, 0
        %1318 = vmatpush.msra.mxu0 0.0
        %1319 = vmatpush.msra.mxu0 0.0
        %1320 = vmatpush.msra.mxu0 0.0
        %1321 = vmatpush.msra.mxu0 0.0
        %1322 = vmatpush.msra.mxu0 0.0
        %1323 = vmatpush.msra.mxu0 0.0
        %1324 = vmatpush.msra.mxu0 0.0
        %1325 = vmatpush.msra.mxu0 0.0
        %1326 = vmatpush.msra.mxu0 0.0
        %1327 = vmatpush.msra.mxu0 0.0
        %1328 = vmatpush.msra.mxu0 0.0
        %1329 = vmatpush.msra.mxu0 0.0
        %1330 = vmatpush.msra.mxu0 0.0
        %1331 = vmatpush.msra.mxu0 0.0
        %1332 = vmatpush.msra.mxu0 %v1309
        %1333 = vmatpush.msra.mxu0 %v1307
        %1334 = vmatmul.f32.gmra.mxu0 %v1313
        %v1335 = vpop.f32.mrf.mxu0
        %v1336 = vadd.f32 0.0, %v1335
        %1337 = vmatmul.f32.gmra.mxu0 %v1316
        %v1338 = vpop.f32.mrf.mxu0
        %v1339 = vadd.f32 0.0, %v1338
        %1340 = vdwg.mxu0
        %1341 = vrot.lane.b32.xlu0 %v931, 104
        %v1342 = vpop.permute.xlu0 %1341
        %1343 = vrot.lane.b32.xlu0 %v934, 104
        %v1344 = vpop.permute.xlu0 %1343
        %1345 = vrot.lane.b32.xlu0 %v931, 72
        %v1346 = vpop.permute.xlu0 %1345
        %1347 = vrot.lane.b32.xlu0 %v934, 72
        %v1348 = vpop.permute.xlu0 %1347
        %v1349 = vsel %vm979, %v1342, 0
        %v1351 = vsel %vm979, %v1344, 0
        %v1353 = vsel %vm979, %v1346, 0
        %v1355 = vsel %vm979, %v1348, 0
        %1357 = vmatpush.xpose.msra.mxu0 0.0
        %1358 = vmatpush.xpose.msra.mxu0 0.0
        %1359 = vmatpush.xpose.msra.mxu0 0.0
        %1360 = vmatpush.xpose.msra.mxu0 0.0
        %1361 = vmatpush.xpose.msra.mxu0 0.0
        %1362 = vmatpush.xpose.msra.mxu0 0.0
        %1363 = vmatpush.xpose.msra.mxu0 0.0
        %1364 = vmatpush.xpose.msra.mxu0 0.0
        %1365 = vmatpush.xpose.msra.mxu0 0.0
        %1366 = vmatpush.xpose.msra.mxu0 0.0
        %1367 = vmatpush.xpose.msra.mxu0 0.0
        %1368 = vmatpush.xpose.msra.mxu0 0.0
        %1369 = vmatpush.xpose.msra.mxu0 0.0
        %1370 = vmatpush.xpose.msra.mxu0 0.0
        %1371 = vmatpush.xpose.msra.mxu0 %v1355
        %1372 = vmatpush.xpose.msra.mxu0 %v1353
        %1373 = vmatmul.f32.gmra.mxu0 %v1349
        %v1374 = vpop.f32.mrf.mxu0
        %v1375 = vadd.f32 0.0, %v1374
        %1376 = vmatmul.f32.gmra.mxu0 %v1351
        %v1377 = vpop.f32.mrf.mxu0
        %v1378 = vadd.f32 0.0, %v1377
        %1379 = vdwg.mxu0
        %v1380 = vmul.f32 %v1375, 0.35355338
        %v1381 = vmul.f32 %v1378, 0.35355338
        %v1382 = vsel %vm1013, %v1380, -inf
        %1383 = vmax.xlane.f32.xlu0 %v1382
        %v1384 = vpop.xlane.xlu0 %1383
        %v1385 = vsel %vm1013, %v1381, -inf
        %1386 = vmax.xlane.f32.xlu0 %v1385
        %v1387 = vpop.xlane.xlu0 %1386
        %v1388 = vsub.f32 %v1380, %v1384
        %v1389 = vsub.f32 %v1381, %v1387
        %v1390 = vmul.f32 %v1388, 1.442695
        %v1391 = vpow.pop %v1390
        %v1392 = vmul.f32 %v1389, 1.442695
        %v1393 = vpow.pop %v1392
        %v1394 = vsel %vm1013, %v1391, 0.0
        %1395 = vadd.xlane.f32.xlu0 %v1394
        %v1396 = vpop.xlane.xlu0 %1395
        %v1397 = vsel %vm1013, %v1393, 0.0
        %1398 = vadd.xlane.f32.xlu0 %v1397
        %v1399 = vpop.xlane.xlu0 %1398
        %v1400 = vrcp.pop %v1396
        %v1401 = vmul.f32 %v1396, %v1400
        %v1402 = vsub.f32 1.0, %v1401
        %v1403 = vmul.f32 %v1400, %v1402
        %v1404 = vadd.f32 %v1400, %v1403
        %vm1405 = vweird.f32 %v1396
        %vm1406 = vweird.f32 %v1400
        %vm1407 = vmor %vm1405, %vm1406
        %v1408 = vsel %vm1407, %v1400, %v1404
        %v1409 = vand.u32 2147483647, %v1396
        %vm1410 = vcmp.eq.f32.partialorder %v1409, 8.507059e+37
        %v1411 = vand.u32 %v1396, 2147483648
        %v1412 = vor.u32 1.1754944e-38, %v1411
        %v1413 = vsel %vm1410, %v1412, %v1408
        %v1414 = vmul.f32 %v1391, %v1413
        %v1415 = vrcp.pop %v1399
        %v1416 = vmul.f32 %v1399, %v1415
        %v1417 = vsub.f32 1.0, %v1416
        %v1418 = vmul.f32 %v1415, %v1417
        %v1419 = vadd.f32 %v1415, %v1418
        %vm1420 = vweird.f32 %v1399
        %vm1421 = vweird.f32 %v1415
        %vm1422 = vmor %vm1420, %vm1421
        %v1423 = vsel %vm1422, %v1415, %v1419
        %v1424 = vand.u32 2147483647, %v1399
        %vm1425 = vcmp.eq.f32.partialorder %v1424, 8.507059e+37
        %v1426 = vand.u32 %v1399, 2147483648
        %v1427 = vor.u32 1.1754944e-38, %v1426
        %v1428 = vsel %vm1425, %v1427, %v1423
        %v1429 = vmul.f32 %v1393, %v1428
        %1430 = vrot.lane.b32.xlu0 %v968, 104
        %v1431 = vpop.permute.xlu0 %1430
        %1432 = vrot.lane.b32.xlu0 %v971, 104
        %v1433 = vpop.permute.xlu0 %1432
        %v1437 = vsel %vm1013, %v1414, 0
        %v1440 = vsel %vm1013, %v1429, 0
        %1442 = vmatpush.msra.mxu0 0.0
        %1443 = vmatpush.msra.mxu0 0.0
        %1444 = vmatpush.msra.mxu0 0.0
        %1445 = vmatpush.msra.mxu0 0.0
        %1446 = vmatpush.msra.mxu0 0.0
        %1447 = vmatpush.msra.mxu0 0.0
        %1448 = vmatpush.msra.mxu0 0.0
        %1449 = vmatpush.msra.mxu0 0.0
        %1450 = vmatpush.msra.mxu0 0.0
        %1451 = vmatpush.msra.mxu0 0.0
        %1452 = vmatpush.msra.mxu0 0.0
        %1453 = vmatpush.msra.mxu0 0.0
        %1454 = vmatpush.msra.mxu0 0.0
        %1455 = vmatpush.msra.mxu0 0.0
        %1456 = vmatpush.msra.mxu0 %v1433
        %1457 = vmatpush.msra.mxu0 %v1431
        %1458 = vmatmul.f32.gmra.mxu0 %v1437
        %v1459 = vpop.f32.mrf.mxu0
        %v1460 = vadd.f32 0.0, %v1459
        %1461 = vmatmul.f32.gmra.mxu0 %v1440
        %v1462 = vpop.f32.mrf.mxu0
        %v1463 = vadd.f32 0.0, %v1462
        %1464 = vdwg.mxu0
        %1467 = vrot.lane.b32.xlu0 %v1212, 8
        %v1468 = vpop.permute.xlu0 %1467
        %1469 = vrot.lane.b32.xlu0 %v1215, 8
        %v1470 = vpop.permute.xlu0 %1469
        %1475 = vrot.lane.b32.xlu0 %v1336, 16
        %v1476 = vpop.permute.xlu0 %1475
        %1477 = vrot.lane.b32.xlu0 %v1339, 16
        %v1478 = vpop.permute.xlu0 %1477
        %1483 = vrot.lane.b32.xlu0 %v1460, 24
        %v1484 = vpop.permute.xlu0 %1483
        %1485 = vrot.lane.b32.xlu0 %v1463, 24
        %v1486 = vpop.permute.xlu0 %1485
        %v1489 = vsel %vm979, %v1086, %v1468
        %v1490 = vsel %vm979, %v1089, %v1470
        %v1491 = vsel %vm1013, %v1489, %v1476
        %v1492 = vsel %vm1013, %v1490, %v1478
        %vm1493 = vcmask 195584
        %v1494 = vsel %vm1493, %v1491, %v1484
        %v1495 = vsel %vm1493, %v1492, %v1486
        %v1496 = vld [vmem:[%s702] sm:$0xff]
        %v1497 = vld [vmem:[%s702 + $0x8] sm:$0xff]
        %v1498 = vld [vmem:[%s702 + $0x10] sm:$0xff]
        %v1499 = vld [vmem:[%s702 + $0x18] sm:$0xff]
        %v1500 = vld [vmem:[%s853] sm:$0x1]
        %v1502 = vperm.slane %v1500, 0
        %v1505 = vsel %vm906, %v1494, 0
        %v1508 = vsel %vm906, %v1495, 0
        %1510 = vmatpush.msra.mxu0 0.0
        %1511 = vmatpush.msra.mxu0 0.0
        %1512 = vmatpush.msra.mxu0 0.0
        %1513 = vmatpush.msra.mxu0 0.0
        %1514 = vmatpush.msra.mxu0 0.0
        %1515 = vmatpush.msra.mxu0 0.0
        %1516 = vmatpush.msra.mxu0 0.0
        %1517 = vmatpush.msra.mxu0 0.0
        %1518 = vmatpush.msra.mxu0 0.0
        %1519 = vmatpush.msra.mxu0 0.0
        %1520 = vmatpush.msra.mxu0 0.0
        %1521 = vmatpush.msra.mxu0 0.0
        %1522 = vmatpush.msra.mxu0 %v1499
        %1523 = vmatpush.msra.mxu0 %v1498
        %1524 = vmatpush.msra.mxu0 %v1497
        %1525 = vmatpush.msra.mxu0 %v1496
        %1526 = vmatmul.f32.gmra.mxu0 %v1505
        %v1527 = vpop.f32.mrf.mxu0
        %v1528 = vadd.f32 %v1502, %v1527
        %1529 = vmatmul.f32.gmra.mxu0 %v1508
        %v1530 = vpop.f32.mrf.mxu0
        %v1531 = vadd.f32 %v1502, %v1530
        %1532 = vdwg.mxu0
        %v1533 = vadd.f32 %v892, %v1528
        %v1534 = vadd.f32 %v893, %v1531
        %v1535 = vld [vmem:[%s856] sm:$0x1]
        %v1536 = vld [vmem:[%s859] sm:$0x1]
        %v1537 = vsel %vm906, %v1533, 0.0
        %1538 = vadd.xlane.f32.xlu0 %v1537
        %v1539 = vpop.xlane.xlu0 %1538
        %v1540 = vsel %vm906, %v1534, 0.0
        %1541 = vadd.xlane.f32.xlu0 %v1540
        %v1542 = vpop.xlane.xlu0 %1541
        %v1543 = vrcp.pop 32.0
        %v1544 = vmul.f32 32.0, %v1543
        %v1545 = vsub.f32 1.0, %v1544
        %v1546 = vmul.f32 %v1543, %v1545
        %v1547 = vadd.f32 %v1543, %v1546
        %vm1548 = vweird.f32 %v1543
        %v1549 = vsel %vm1548, %v1543, %v1547
        %v1550 = vmul.f32 %v1539, %v1549
        %v1551 = vmul.f32 %v1542, %v1549
        %v1552 = vsub.f32 %v1533, %v1550
        %v1553 = vsub.f32 %v1534, %v1551
        %v1554 = vmul.f32 %v1552, %v1552
        %v1555 = vmul.f32 %v1553, %v1553
        %v1556 = vsel %vm906, %v1554, 0.0
        %1557 = vadd.xlane.f32.xlu0 %v1556
        %v1558 = vpop.xlane.xlu0 %1557
        %v1559 = vsel %vm906, %v1555, 0.0
        %1560 = vadd.xlane.f32.xlu0 %v1559
        %v1561 = vpop.xlane.xlu0 %1560
        %v1562 = vmul.f32 %v1558, %v1549
        %v1563 = vmul.f32 %v1561, %v1549
        %v1564 = vadd.f32 %v1562, 1e-05
        %v1565 = vadd.f32 %v1563, 1e-05
        %v1566 = vrsqrt.pop %v1564
        %v1567 = vmul.f32 %v1566, %v1564
        %v1568 = vmul.f32 %v1567, %v1566
        %v1569 = vmul.f32 0.5, %v1568
        %v1570 = vsub.f32 1.5, %v1569
        %v1571 = vmul.f32 %v1566, %v1570
        %vm1572 = vweird.f32 %v1564
        %vm1573 = vweird.f32 %v1566
        %vm1574 = vmor %vm1572, %vm1573
        %v1575 = vsel %vm1574, %v1566, %v1571
        %v1576 = vrsqrt.pop %v1565
        %v1577 = vmul.f32 %v1576, %v1565
        %v1578 = vmul.f32 %v1577, %v1576
        %v1579 = vmul.f32 0.5, %v1578
        %v1580 = vsub.f32 1.5, %v1579
        %v1581 = vmul.f32 %v1576, %v1580
        %vm1582 = vweird.f32 %v1565
        %vm1583 = vweird.f32 %v1576
        %vm1584 = vmor %vm1582, %vm1583
        %v1585 = vsel %vm1584, %v1576, %v1581
        %v1586 = vmul.f32 %v1552, %v1575
        %v1587 = vmul.f32 %v1553, %v1585
        %v1589 = vperm.slane %v1535, 0
        %v1591 = vmul.f32 %v1586, %v1589
        %v1592 = vmul.f32 %v1587, %v1589
        %v1594 = vperm.slane %v1536, 0
        %v1596 = vadd.f32 %v1591, %v1594
        %v1597 = vadd.f32 %v1592, %v1594
        %v1598 = vld [vmem:[%s712] sm:$0xff]
        %v1599 = vld [vmem:[%s712 + $0x8] sm:$0xff]
        %v1600 = vld [vmem:[%s712 + $0x10] sm:$0xff]
        %v1601 = vld [vmem:[%s712 + $0x18] sm:$0xff]
        %v1602 = vld [vmem:[%s862] sm:$0x1]
        %v1604 = vperm.slane %v1602, 0
        %v1607 = vsel %vm906, %v1596, 0
        %v1610 = vsel %vm906, %v1597, 0
        %1612 = vmatpush.msra.mxu0 0.0
        %1613 = vmatpush.msra.mxu0 0.0
        %1614 = vmatpush.msra.mxu0 0.0
        %1615 = vmatpush.msra.mxu0 0.0
        %1616 = vmatpush.msra.mxu0 0.0
        %1617 = vmatpush.msra.mxu0 0.0
        %1618 = vmatpush.msra.mxu0 0.0
        %1619 = vmatpush.msra.mxu0 0.0
        %1620 = vmatpush.msra.mxu0 0.0
        %1621 = vmatpush.msra.mxu0 0.0
        %1622 = vmatpush.msra.mxu0 0.0
        %1623 = vmatpush.msra.mxu0 0.0
        %1624 = vmatpush.msra.mxu0 %v1601
        %1625 = vmatpush.msra.mxu0 %v1600
        %1626 = vmatpush.msra.mxu0 %v1599
        %1627 = vmatpush.msra.mxu0 %v1598
        %1628 = vmatmul.f32.gmra.mxu0 %v1607
        %v1629 = vpop.f32.mrf.mxu0
        %v1630 = vadd.f32 %v1604, %v1629
        %1631 = vmatmul.f32.gmra.mxu0 %v1610
        %v1632 = vpop.f32.mrf.mxu0
        %v1633 = vadd.f32 %v1604, %v1632
        %1634 = vdwg.mxu0
        %v1635 = vmax.f32 %v1630, 0.0
        %v1636 = vmax.f32 %v1633, 0.0
        %v1637 = vld [vmem:[%s867] sm:$0xff]
        %v1638 = vld [vmem:[%s867 + $0x8] sm:$0xff]
        %v1639 = vld [vmem:[%s867 + $0x10] sm:$0xff]
        %v1640 = vld [vmem:[%s867 + $0x18] sm:$0xff]
        %v1641 = vld [vmem:[%s867 + $0x20] sm:$0xff]
        %v1642 = vld [vmem:[%s867 + $0x28] sm:$0xff]
        %v1643 = vld [vmem:[%s867 + $0x30] sm:$0xff]
        %v1644 = vld [vmem:[%s867 + $0x38] sm:$0xff]
        %v1645 = vld [vmem:[%s870] sm:$0x1]
        %v1647 = vperm.slane %v1645, 0
        %vm1649 = vcmask 523264
        %v1651 = vsel %vm1649, %v1635, 0
        %v1654 = vsel %vm1649, %v1636, 0
        %1656 = vmatpush.msra.mxu0 0.0
        %1657 = vmatpush.msra.mxu0 0.0
        %1658 = vmatpush.msra.mxu0 0.0
        %1659 = vmatpush.msra.mxu0 0.0
        %1660 = vmatpush.msra.mxu0 0.0
        %1661 = vmatpush.msra.mxu0 0.0
        %1662 = vmatpush.msra.mxu0 0.0
        %1663 = vmatpush.msra.mxu0 0.0
        %1664 = vmatpush.msra.mxu0 %v1644
        %1665 = vmatpush.msra.mxu0 %v1643
        %1666 = vmatpush.msra.mxu0 %v1642
        %1667 = vmatpush.msra.mxu0 %v1641
        %1668 = vmatpush.msra.mxu0 %v1640
        %1669 = vmatpush.msra.mxu0 %v1639
        %1670 = vmatpush.msra.mxu0 %v1638
        %1671 = vmatpush.msra.mxu0 %v1637
        %1672 = vmatmul.f32.gmra.mxu0 %v1651
        %v1673 = vpop.f32.mrf.mxu0
        %v1674 = vadd.f32 %v1647, %v1673
        %1675 = vmatmul.f32.gmra.mxu0 %v1654
        %v1676 = vpop.f32.mrf.mxu0
        %v1677 = vadd.f32 %v1647, %v1676
        %1678 = vdwg.mxu0
        %v1679 = vadd.f32 %v1596, %v1674
        %v1680 = vadd.f32 %v1597, %v1677
        %v1681 = vld [vmem:[%s873] sm:$0x1]
        %v1682 = vld [vmem:[%s876] sm:$0x1]
        %v1683 = vsel %vm906, %v1679, 0.0
        %1684 = vadd.xlane.f32.xlu0 %v1683
        %v1685 = vpop.xlane.xlu0 %1684
        %v1686 = vsel %vm906, %v1680, 0.0
        %1687 = vadd.xlane.f32.xlu0 %v1686
        %v1688 = vpop.xlane.xlu0 %1687
        %v1689 = vmul.f32 %v1685, %v1549
        %v1690 = vmul.f32 %v1688, %v1549
        %v1691 = vsub.f32 %v1679, %v1689
        %v1692 = vsub.f32 %v1680, %v1690
        %v1693 = vmul.f32 %v1691, %v1691
        %v1694 = vmul.f32 %v1692, %v1692
        %v1695 = vsel %vm906, %v1693, 0.0
        %1696 = vadd.xlane.f32.xlu0 %v1695
        %v1697 = vpop.xlane.xlu0 %1696
        %v1698 = vsel %vm906, %v1694, 0.0
        %1699 = vadd.xlane.f32.xlu0 %v1698
        %v1700 = vpop.xlane.xlu0 %1699
        %v1701 = vmul.f32 %v1697, %v1549
        %v1702 = vmul.f32 %v1700, %v1549
        %v1703 = vadd.f32 %v1701, 1e-05
        %v1704 = vadd.f32 %v1702, 1e-05
        %v1705 = vrsqrt.pop %v1703
        %v1706 = vmul.f32 %v1705, %v1703
        %v1707 = vmul.f32 %v1706, %v1705
        %v1708 = vmul.f32 0.5, %v1707
        %v1709 = vsub.f32 1.5, %v1708
        %v1710 = vmul.f32 %v1705, %v1709
        %vm1711 = vweird.f32 %v1703
        %vm1712 = vweird.f32 %v1705
        %vm1713 = vmor %vm1711, %vm1712
        %v1714 = vsel %vm1713, %v1705, %v1710
        %v1715 = vrsqrt.pop %v1704
        %v1716 = vmul.f32 %v1715, %v1704
        %v1717 = vmul.f32 %v1716, %v1715
        %v1718 = vmul.f32 0.5, %v1717
        %v1719 = vsub.f32 1.5, %v1718
        %v1720 = vmul.f32 %v1715, %v1719
        %vm1721 = vweird.f32 %v1704
        %vm1722 = vweird.f32 %v1715
        %vm1723 = vmor %vm1721, %vm1722
        %v1724 = vsel %vm1723, %v1715, %v1720
        %v1725 = vmul.f32 %v1691, %v1714
        %v1726 = vmul.f32 %v1692, %v1724
        %v1728 = vperm.slane %v1681, 0
        %v1730 = vmul.f32 %v1725, %v1728
        %v1731 = vmul.f32 %v1726, %v1728
        %v1733 = vperm.slane %v1682, 0
        %v1735 = vadd.f32 %v1730, %v1733
        %v1736 = vadd.f32 %v1731, %v1733
        %1737 = vst.msk [vmem:[#allocation2] sm:$0xff] %vm906, %v1735
        %1738 = vst.msk [vmem:[#allocation2 + $0x8] sm:$0xff] %vm906, %v1736
        %p1739 = scmp.eq.s32.totalorder %s40, 1
        // Predicated region
        $region105: #{transformer_forward.2} parent=91 // pred_check
          %p1740 = pneg %p1739
        $region106: #{transformer_forward.2} parent=91 // pred_check_branch
          %1742 = sbr.rel (%p1740) target = $region108
        $region107: #{transformer_forward.2} parent=91 // pred_region
          %v1743 = vld [vmem:[%s16] sm:$0x1]
          %v1744 = vld [vmem:[%s17] sm:$0x1]
          %v1745 = vsel %vm906, %v1735, 0.0
          %1746 = vadd.xlane.f32.xlu0 %v1745
          %v1747 = vpop.xlane.xlu0 %1746
          %v1748 = vsel %vm906, %v1736, 0.0
          %1749 = vadd.xlane.f32.xlu0 %v1748
          %v1750 = vpop.xlane.xlu0 %1749
          %v1751 = vmul.f32 %v1747, %v1549
          %v1752 = vmul.f32 %v1750, %v1549
          %v1753 = vsub.f32 %v1735, %v1751
          %v1754 = vsub.f32 %v1736, %v1752
          %v1755 = vmul.f32 %v1753, %v1753
          %v1756 = vmul.f32 %v1754, %v1754
          %v1757 = vsel %vm906, %v1755, 0.0
          %1758 = vadd.xlane.f32.xlu0 %v1757
          %v1759 = vpop.xlane.xlu0 %1758
          %v1760 = vsel %vm906, %v1756, 0.0
          %1761 = vadd.xlane.f32.xlu0 %v1760
          %v1762 = vpop.xlane.xlu0 %1761
          %v1763 = vmul.f32 %v1759, %v1549
          %v1764 = vmul.f32 %v1762, %v1549
          %v1765 = vadd.f32 %v1763, 1e-05
          %v1766 = vadd.f32 %v1764, 1e-05
          %v1767 = vrsqrt.pop %v1765
          %v1768 = vmul.f32 %v1767, %v1765
          %v1769 = vmul.f32 %v1768, %v1767
          %v1770 = vmul.f32 0.5, %v1769
          %v1771 = vsub.f32 1.5, %v1770
          %v1772 = vmul.f32 %v1767, %v1771
          %vm1773 = vweird.f32 %v1765
          %vm1774 = vweird.f32 %v1767
          %vm1775 = vmor %vm1773, %vm1774
          %v1776 = vsel %vm1775, %v1767, %v1772
          %v1777 = vrsqrt.pop %v1766
          %v1778 = vmul.f32 %v1777, %v1766
          %v1779 = vmul.f32 %v1778, %v1777
          %v1780 = vmul.f32 0.5, %v1779
          %v1781 = vsub.f32 1.5, %v1780
          %v1782 = vmul.f32 %v1777, %v1781
          %vm1783 = vweird.f32 %v1766
          %vm1784 = vweird.f32 %v1777
          %vm1785 = vmor %vm1783, %vm1784
          %v1786 = vsel %vm1785, %v1777, %v1782
          %v1787 = vmul.f32 %v1753, %v1776
          %v1788 = vmul.f32 %v1754, %v1786
          %v1790 = vperm.slane %v1743, 0
          %v1792 = vmul.f32 %v1787, %v1790
          %v1793 = vmul.f32 %v1788, %v1790
          %v1795 = vperm.slane %v1744, 0
          %v1797 = vadd.f32 %v1792, %v1795
          %v1798 = vadd.f32 %v1793, %v1795
          %1799 = vst.msk [vmem:[%s881] sm:$0xff] %vm906, %v1797
          %1800 = vst.msk [vmem:[%s881 + $0x8] sm:$0xff] %vm906, %v1798
        $region108: #{transformer_forward.2} parent=91 // pred_fallthru
          _
        %s1801 = smul.u32 2, %s39
        %p1802 = scmp.lt.s32.totalorder %s1801, 3
        %s1803 = scalar_select %p1802, %s1801, 3
        %s1804 = smul.addr %s1803, 8
        %s1805 = scalar_lea.vmem %s18, %s1804
        // Predicated region
        $region109: #{transformer_forward.2} parent=91 // pred_check
          %p1806 = pneg %p523
        $region110: #{transformer_forward.2} parent=91 // pred_check_branch
          %1808 = sbr.rel (%p1806) target = $region112
        $region111: #{transformer_forward.2} parent=91 // pred_region
          %s1809 = smul.u32 2, %s39
        $region112: #{transformer_forward.2} parent=91 // pred_fallthru
          _
      $region92: #{transformer_forward.2} parent=5 // pred_fallthru
        _
      %p1810 = scmp.le.s32.totalorder 2, %s30
      // Predicated region
      $region113: #{transformer_forward.2} parent=5 // pred_check
        %p1811 = pneg %p1810
      $region114: #{transformer_forward.2} parent=5 // pred_check_branch
        %1813 = sbr.rel (%p1811) target = $region116
      $region115: #{transformer_forward.2} parent=5 // pred_region
        %s1814 = ssub.s32 %s30, 2
        // Predicated region
        $region117: #{transformer_forward.2} parent=115 // pred_check
          %p1815 = pneg %p529
        $region118: #{transformer_forward.2} parent=115 // pred_check_branch
          %1817 = sbr.rel (%p1815) target = $region120
        $region119: #{transformer_forward.2} parent=115 // pred_region
          %s1818 = smul.u32 2, %s41
          %p1819 = scmp.lt.s32.totalorder %s1818, 3
          %s1820 = scalar_select %p1819, %s1818, 3
          %s1821 = smul.addr %s1820, 8
          %s1822 = scalar_lea.vmem %s18, %s1821
        $region120: #{transformer_forward.2} parent=115 // pred_fallthru
          _
      $region116: #{transformer_forward.2} parent=5 // pred_fallthru
        _
    $region6: #{transformer_forward.2} parent=1 // loop_footer
      %s34 = sadd.s32 1, %s30
    $region7: #{transformer_forward.2} parent=1 // loop_footer_branch
      %29 = sbr.rel target = $region3
    $region8: #{transformer_forward.2} parent=1 // loop_exit
      _
    %1823 = vsyncpa [#allocation4], 1
    %s1824 = scalar_lea.sflag [#allocation4], 1
    %1825 = vsyncpa %s1824, 1
    %1826 = vsyncpa [#allocation6], 1
    %s1827 = scalar_lea.sflag [#allocation6], 1
    %1828 = vsyncpa %s1827, 1

// kernel: transformer_forward.3
$region0: #{transformer_forward.3}
  #allocation0 [shape = 'u32[]', space=smem, size = 0x4, offset = 0x4, fixed_abs, tag = 'smem constant byte address 0x4 - core index']
  #allocation1 [shape = 'u32[72,128]{1,0:T(1,128)}', space=vmem, size = 0x9000, scoped, tag = 'internal scratch']
  #allocation2 [shape = 'f32[8,32]{1,0:T(8,128)}', space=vmem, size = 0x1000, scoped, tag = 'scratch operand']
  %s0 = inlined_call_operand.smem [shape: u32[30], index: -1, kind: input, shape index: {}]
  %s1 = sld [smem:[%s0]]
  %s2 = scalar_lea.smem %s0, 1
  %s3 = sld [smem:[%s2]]
  %s4 = scalar_lea.smem %s0, 2
  %s5 = sld [smem:[%s4]]
  %s6 = scalar_lea.smem %s0, 3
  %s7 = sld [smem:[%s6]]
  %s8 = scalar_lea.smem %s0, 4
  %s9 = sld [smem:[%s8]]
  %s10 = scalar_lea.smem %s0, 5
  %s11 = sld [smem:[%s10]]
  %s12 = scalar_lea.smem %s0, 6
  %s13 = sld [smem:[%s12]]
  %s14 = scalar_lea.smem %s0, 7
  %s15 = sld [smem:[%s14]]
  %s16 = scalar_lea.smem %s0, 8
  %s17 = sld [smem:[%s16]]
  %s18 = scalar_lea.smem %s0, 9
  %s19 = sld [smem:[%s18]]
  %s20 = scalar_lea.smem %s0, 10
  %s21 = sld [smem:[%s20]]
  %s22 = scalar_lea.smem %s0, 11
  %s23 = sld [smem:[%s22]]
  %s24 = scalar_lea.smem %s0, 12
  %s25 = sld [smem:[%s24]]
  %s26 = scalar_lea.smem %s0, 13
  %s27 = sld [smem:[%s26]]
  %s28 = scalar_lea.smem %s0, 14
  %s29 = sld [smem:[%s28]]
  %s30 = scalar_lea.smem %s0, 15
  %s31 = sld [smem:[%s30]]
  %s32 = scalar_lea.smem %s0, 16
  %s33 = sld [smem:[%s32]]
  %s34 = scalar_lea.smem %s0, 17
  %s35 = sld [smem:[%s34]]
  %s36 = scalar_lea.smem %s0, 18
  %s37 = sld [smem:[%s36]]
  %s38 = scalar_lea.smem %s0, 19
  %s39 = sld [smem:[%s38]]
  %s40 = scalar_lea.smem %s0, 20
  %s41 = sld [smem:[%s40]]
  %s42 = scalar_lea.smem %s0, 21
  %s43 = sld [smem:[%s42]]
  %s44 = scalar_lea.smem %s0, 22
  %s45 = sld [smem:[%s44]]
  %s46 = scalar_lea.smem %s0, 23
  %s47 = sld [smem:[%s46]]
  %s48 = scalar_lea.smem %s0, 24
  %s49 = sld [smem:[%s48]]
  %s50 = scalar_lea.smem %s0, 25
  %s51 = sld [smem:[%s50]]
  %s52 = scalar_lea.smem %s0, 26
  %s53 = sld [smem:[%s52]]
  %s54 = scalar_lea.smem %s0, 27
  %s55 = sld [smem:[%s54]]
  %s56 = scalar_lea.smem %s0, 28
  %s57 = sld [smem:[%s56]]
  %s58 = scalar_lea.smem %s0, 29
  %s59 = sld [smem:[%s58]]
  %s60 = sld [smem:[#allocation0]]
  $region177: #{transformer_forward.3} parent=0
    _
  %s62 = ssub.s32 1, %s60
  %s63 = scalar_select 0, %s62, %s60
  $region1: #{transformer_forward.3} parent=0
    #allocation3 [shape = 'u8[32768]{0}', space=vmem, size = 0x8000, scoped, tag = 'input window, operand 11']
    #allocation4 [shape = 's32[2]{0}', space=sflag, size = 0x8, scoped, tag = 'scoped memory for transformer_forward.3']
    #allocation5 [shape = 's32[2]{0}', space=sflag, size = 0x8, scoped, tag = 'scoped memory for transformer_forward.3']
    #allocation6 [shape = 'u8[32768]{0}', space=vmem, size = 0x8000, scoped, tag = 'input window, operand 13']
    #allocation7 [shape = 's32[2]{0}', space=sflag, size = 0x8, scoped, tag = 'scoped memory for transformer_forward.3']
    #allocation8 [shape = 'u8[32768]{0}', space=vmem, size = 0x8000, scoped, tag = 'input window, operand 15']
    #allocation9 [shape = 'u8[32768]{0}', space=vmem, size = 0x8000, scoped, tag = 'input window, operand 17']
    #allocation10 [shape = 's32[2]{0}', space=sflag, size = 0x8, scoped, tag = 'scoped memory for transformer_forward.3']
    #allocation11 [shape = 'u8[32768]{0}', space=vmem, size = 0x8000, scoped, tag = 'input window, operand 21']
    #allocation12 [shape = 'u8[8192]{0}', space=vmem, size = 0x2000, scoped, tag = 'output window, operand 0']
    %64 = vsyncpa [#allocation4], 0
    %s65 = scalar_lea.sflag [#allocation4], 1
    %66 = vsyncpa %s65, 0
    %67 = vsyncpa [#allocation7], 0
    %s68 = scalar_lea.sflag [#allocation7], 1
    %69 = vsyncpa %s68, 0
    %70 = vsyncpa [#allocation10], 0
    %s71 = scalar_lea.sflag [#allocation10], 1
    %72 = vsyncpa %s71, 0
    %73 = vsyncpa [#allocation5], 0
    %s74 = scalar_lea.sflag [#allocation5], 1
    %75 = vsyncpa %s74, 0
    loop: start=0, step=1, limit=6
    $region2: #{transformer_forward.3} parent=1 // loop_pre_header
      _
    $region3: #{transformer_forward.3} parent=1 // loop_header
      %s77 = sphi 0, %s81
      %p78 = scmp.ge.s32.totalorder %s77, 6
      %s84 = sphi 0, %s96
      %s85 = sphi 0, %s92
      %s86 = sphi 0, %s84
      %s87 = sphi 0, %s85
      %s88 = sphi 0, %s86
      %s89 = sphi 0, %s87
      %s99 = sphi 0, %s101
      %s102 = sphi 0, %s99
      %s103 = sphi 0, %s102
      %s119 = sphi 0, %s103
      %s125 = sphi 0, %s127
      %s128 = sphi 0, %s125
      %s129 = sphi 0, %s128
      %s145 = sphi 0, %s129
      %s151 = sphi 0, %s153
      %s154 = sphi 0, %s151
      %s155 = sphi 0, %s154
      %s171 = sphi 0, %s155
      %s177 = sphi 0, %s179
      %s180 = sphi 0, %s177
      %s181 = sphi 0, %s180
      %s197 = sphi 0, %s181
      %s203 = sphi 0, %s205
      %s206 = sphi 0, %s203
      %s207 = sphi 0, %s206
      %s223 = sphi 0, %s207
      %s229 = sphi 0, %s231
      %s232 = sphi 0, %s229
      %s233 = sphi 0, %s232
      %s249 = sphi 0, %s233
      %s255 = sphi 0, %s257
      %s258 = sphi 0, %s255
      %s259 = sphi 0, %s258
      %s275 = sphi 0, %s259
      %s281 = sphi 0, %s283
      %s284 = sphi 0, %s281
      %s285 = sphi 0, %s284
      %s301 = sphi 0, %s285
      %s307 = sphi 0, %s309
      %s310 = sphi 0, %s307
      %s311 = sphi 0, %s310
      %s327 = sphi 0, %s311
      %s333 = sphi 0, %s335
      %s336 = sphi 0, %s333
      %s337 = sphi 0, %s336
      %s353 = sphi 0, %s337
      %s359 = sphi 0, %s361
      %s362 = sphi 0, %s359
      %s363 = sphi 0, %s362
      %s379 = sphi 0, %s363
      %s385 = sphi 0, %s387
      %s388 = sphi 0, %s385
      %s389 = sphi 0, %s388
      %s405 = sphi 0, %s389
      %s411 = sphi 0, %s413
      %s414 = sphi 0, %s411
      %s415 = sphi 0, %s414
      %s431 = sphi 0, %s415
      %s437 = sphi 0, %s439
      %s440 = sphi 0, %s437
      %s441 = sphi 0, %s440
      %s457 = sphi 0, %s441
      %s463 = sphi 0, %s465
      %s466 = sphi 0, %s463
      %s467 = sphi 0, %s466
      %s483 = sphi 0, %s467
      %s489 = sphi 0, %s491
      %s492 = sphi 0, %s489
      %s493 = sphi 0, %s492
      %s509 = sphi 0, %s493
      %s515 = sphi 0, %s517
      %s518 = sphi 0, %s515
      %s519 = sphi 0, %s518
      %s535 = sphi 0, %s519
      %s541 = sphi 0, %s543
      %s544 = sphi 0, %s541
      %s545 = sphi 0, %s544
      %s561 = sphi 0, %s545
      %s567 = sphi 0, %s569
      %s570 = sphi 0, %s567
      %s571 = sphi 0, %s570
      %s587 = sphi 0, %s571
      %s593 = sphi 0, %s595
      %s596 = sphi 0, %s593
      %s597 = sphi 0, %s596
      %s613 = sphi 0, %s597
      %s619 = sphi 0, %s621
      %s622 = sphi 0, %s619
      %s623 = sphi 0, %s622
      %s639 = sphi 0, %s623
      %s645 = sphi 0, %s647
      %s648 = sphi 0, %s645
      %s649 = sphi 0, %s648
      %s665 = sphi 0, %s649
      %s671 = sphi 0, %s673
      %s674 = sphi 0, %s671
      %s675 = sphi 0, %s674
      %s691 = sphi 0, %s675
      %s697 = sphi 0, %s699
      %s700 = sphi 0, %s697
      %s701 = sphi 0, %s700
      %s717 = sphi 0, %s701
      %s723 = sphi 0, %s725
      %s726 = sphi 0, %s723
      %s727 = sphi 0, %s726
      %s743 = sphi 0, %s727
      %s749 = sphi 0, %s751
      %s752 = sphi 0, %s749
      %s753 = sphi 0, %s752
      %s769 = sphi 0, %s753
      %s775 = sphi 0, %s777
      %s778 = sphi 0, %s775
      %s779 = sphi 0, %s778
      %s795 = sphi 0, %s779
      %s799 = sphi 0, %s799
      %s801 = sphi 0, %s799
      %s802 = sphi 0, %s801
      %s816 = sphi 0, %s802
      %s820 = sphi 0, %s820
      %s822 = sphi 0, %s820
      %s823 = sphi 0, %s822
      %s837 = sphi 0, %s823
      %s843 = sphi 0, %s845
      %s846 = sphi 0, %s843
      %s847 = sphi 0, %s846
      %s863 = sphi 0, %s847
    $region4: #{transformer_forward.3} parent=1 // loop_header_branch
      %80 = sbr.rel (%p78) target = $region8
    $region5: #{transformer_forward.3} parent=1 // loop_body
      %s82 = ssub.s32 %s77, 1
      %s83 = ssub.s32 %s77, 2
      %s90 = sadd.s32 1, %s85
      %p91 = scmp.ge.s32.totalorder %s90, 2
      %s92 = scalar_select %p91, 0, %s90
      %s93 = sadd.s32 1, %s84
      %s94 = scalar_select %p91, %s93, %s84
      %p95 = scmp.ge.s32.totalorder %s94, 2
      %s96 = scalar_select %p95, 0, %s94
      %s97 = ssub.s32 %s84, %s96
      %p98 = scmp.eq.s32.totalorder %s97, 0
      %s100 = sadd.s32 %s99, 1
      %s101 = scalar_select %p98, %s99, %s100
      %p104 = pneg %p98
      %p105 = scmp.eq.s32.totalorder %s77, 3
      %p106 = por %p104, %p105
      %p107 = scmp.ne.s32.totalorder %s99, %s102
      %p108 = scmp.eq.s32.totalorder %s77, 0
      %p109 = por %p107, %p108
      %p110 = scmp.ne.s32.totalorder %s99, %s102
      %p111 = scmp.eq.s32.totalorder %s82, 3
      %p112 = por %p110, %p111
      %p113 = scmp.ne.s32.totalorder %s102, %s103
      %p114 = scmp.eq.s32.totalorder %s82, 0
      %p115 = por %p113, %p114
      %p116 = scmp.ne.s32.totalorder %s102, %s103
      %p117 = scmp.eq.s32.totalorder %s83, 3
      %p118 = por %p116, %p117
      %p120 = scmp.ne.s32.totalorder %s103, %s119
      %p121 = scmp.eq.s32.totalorder %s83, 0
      %p122 = por %p120, %p121
      %s123 = ssub.s32 %s84, %s96
      %p124 = scmp.eq.s32.totalorder %s123, 0
      %s126 = sadd.s32 %s125, 1
      %s127 = scalar_select %p124, %s125, %s126
      %p130 = pneg %p124
      %p131 = scmp.eq.s32.totalorder %s77, 3
      %p132 = por %p130, %p131
      %p133 = scmp.ne.s32.totalorder %s125, %s128
      %p134 = scmp.eq.s32.totalorder %s77, 0
      %p135 = por %p133, %p134
      %p136 = scmp.ne.s32.totalorder %s125, %s128
      %p137 = scmp.eq.s32.totalorder %s82, 3
      %p138 = por %p136, %p137
      %p139 = scmp.ne.s32.totalorder %s128, %s129
      %p140 = scmp.eq.s32.totalorder %s82, 0
      %p141 = por %p139, %p140
      %p142 = scmp.ne.s32.totalorder %s128, %s129
      %p143 = scmp.eq.s32.totalorder %s83, 3
      %p144 = por %p142, %p143
      %p146 = scmp.ne.s32.totalorder %s129, %s145
      %p147 = scmp.eq.s32.totalorder %s83, 0
      %p148 = por %p146, %p147
      %s149 = ssub.s32 %s84, %s96
      %p150 = scmp.eq.s32.totalorder %s149, 0
      %s152 = sadd.s32 %s151, 1
      %s153 = scalar_select %p150, %s151, %s152
      %p156 = pneg %p150
      %p157 = scmp.eq.s32.totalorder %s77, 3
      %p158 = por %p156, %p157
      %p159 = scmp.ne.s32.totalorder %s151, %s154
      %p160 = scmp.eq.s32.totalorder %s77, 0
      %p161 = por %p159, %p160
      %p162 = scmp.ne.s32.totalorder %s151, %s154
      %p163 = scmp.eq.s32.totalorder %s82, 3
      %p164 = por %p162, %p163
      %p165 = scmp.ne.s32.totalorder %s154, %s155
      %p166 = scmp.eq.s32.totalorder %s82, 0
      %p167 = por %p165, %p166
      %p168 = scmp.ne.s32.totalorder %s154, %s155
      %p169 = scmp.eq.s32.totalorder %s83, 3
      %p170 = por %p168, %p169
      %p172 = scmp.ne.s32.totalorder %s155, %s171
      %p173 = scmp.eq.s32.totalorder %s83, 0
      %p174 = por %p172, %p173
      %s175 = ssub.s32 %s85, %s92
      %p176 = scmp.eq.s32.totalorder %s175, 0
      %s178 = sadd.s32 %s177, 1
      %s179 = scalar_select %p176, %s177, %s178
      %p182 = pneg %p176
      %p183 = scmp.eq.s32.totalorder %s77, 3
      %p184 = por %p182, %p183
      %p185 = scmp.ne.s32.totalorder %s177, %s180
      %p186 = scmp.eq.s32.totalorder %s77, 0
      %p187 = por %p185, %p186
      %p188 = scmp.ne.s32.totalorder %s177, %s180
      %p189 = scmp.eq.s32.totalorder %s82, 3
      %p190 = por %p188, %p189
      %p191 = scmp.ne.s32.totalorder %s180, %s181
      %p192 = scmp.eq.s32.totalorder %s82, 0
      %p193 = por %p191, %p192
      %p194 = scmp.ne.s32.totalorder %s180, %s181
      %p195 = scmp.eq.s32.totalorder %s83, 3
      %p196 = por %p194, %p195
      %p198 = scmp.ne.s32.totalorder %s181, %s197
      %p199 = scmp.eq.s32.totalorder %s83, 0
      %p200 = por %p198, %p199
      %s201 = ssub.s32 %s85, %s92
      %p202 = scmp.eq.s32.totalorder %s201, 0
      %s204 = sadd.s32 %s203, 1
      %s205 = scalar_select %p202, %s203, %s204
      %p208 = pneg %p202
      %p209 = scmp.eq.s32.totalorder %s77, 3
      %p210 = por %p208, %p209
      %p211 = scmp.ne.s32.totalorder %s203, %s206
      %p212 = scmp.eq.s32.totalorder %s77, 0
      %p213 = por %p211, %p212
      %p214 = scmp.ne.s32.totalorder %s203, %s206
      %p215 = scmp.eq.s32.totalorder %s82, 3
      %p216 = por %p214, %p215
      %p217 = scmp.ne.s32.totalorder %s206, %s207
      %p218 = scmp.eq.s32.totalorder %s82, 0
      %p219 = por %p217, %p218
      %p220 = scmp.ne.s32.totalorder %s206, %s207
      %p221 = scmp.eq.s32.totalorder %s83, 3
      %p222 = por %p220, %p221
      %p224 = scmp.ne.s32.totalorder %s207, %s223
      %p225 = scmp.eq.s32.totalorder %s83, 0
      %p226 = por %p224, %p225
      %s227 = ssub.s32 %s85, %s92
      %p228 = scmp.eq.s32.totalorder %s227, 0
      %s230 = sadd.s32 %s229, 1
      %s231 = scalar_select %p228, %s229, %s230
      %p234 = pneg %p228
      %p235 = scmp.eq.s32.totalorder %s77, 3
      %p236 = por %p234, %p235
      %p237 = scmp.ne.s32.totalorder %s229, %s232
      %p238 = scmp.eq.s32.totalorder %s77, 0
      %p239 = por %p237, %p238
      %p240 = scmp.ne.s32.totalorder %s229, %s232
      %p241 = scmp.eq.s32.totalorder %s82, 3
      %p242 = por %p240, %p241
      %p243 = scmp.ne.s32.totalorder %s232, %s233
      %p244 = scmp.eq.s32.totalorder %s82, 0
      %p245 = por %p243, %p244
      %p246 = scmp.ne.s32.totalorder %s232, %s233
      %p247 = scmp.eq.s32.totalorder %s83, 3
      %p248 = por %p246, %p247
      %p250 = scmp.ne.s32.totalorder %s233, %s249
      %p251 = scmp.eq.s32.totalorder %s83, 0
      %p252 = por %p250, %p251
      %s253 = ssub.s32 %s85, %s92
      %p254 = scmp.eq.s32.totalorder %s253, 0
      %s256 = sadd.s32 %s255, 1
      %s257 = scalar_select %p254, %s255, %s256
      %p260 = pneg %p254
      %p261 = scmp.eq.s32.totalorder %s77, 3
      %p262 = por %p260, %p261
      %p263 = scmp.ne.s32.totalorder %s255, %s258
      %p264 = scmp.eq.s32.totalorder %s77, 0
      %p265 = por %p263, %p264
      %p266 = scmp.ne.s32.totalorder %s255, %s258
      %p267 = scmp.eq.s32.totalorder %s82, 3
      %p268 = por %p266, %p267
      %p269 = scmp.ne.s32.totalorder %s258, %s259
      %p270 = scmp.eq.s32.totalorder %s82, 0
      %p271 = por %p269, %p270
      %p272 = scmp.ne.s32.totalorder %s258, %s259
      %p273 = scmp.eq.s32.totalorder %s83, 3
      %p274 = por %p272, %p273
      %p276 = scmp.ne.s32.totalorder %s259, %s275
      %p277 = scmp.eq.s32.totalorder %s83, 0
      %p278 = por %p276, %p277
      %s279 = ssub.s32 %s85, %s92
      %p280 = scmp.eq.s32.totalorder %s279, 0
      %s282 = sadd.s32 %s281, 1
      %s283 = scalar_select %p280, %s281, %s282
      %p286 = pneg %p280
      %p287 = scmp.eq.s32.totalorder %s77, 3
      %p288 = por %p286, %p287
      %p289 = scmp.ne.s32.totalorder %s281, %s284
      %p290 = scmp.eq.s32.totalorder %s77, 0
      %p291 = por %p289, %p290
      %p292 = scmp.ne.s32.totalorder %s281, %s284
      %p293 = scmp.eq.s32.totalorder %s82, 3
      %p294 = por %p292, %p293
      %p295 = scmp.ne.s32.totalorder %s284, %s285
      %p296 = scmp.eq.s32.totalorder %s82, 0
      %p297 = por %p295, %p296
      %p298 = scmp.ne.s32.totalorder %s284, %s285
      %p299 = scmp.eq.s32.totalorder %s83, 3
      %p300 = por %p298, %p299
      %p302 = scmp.ne.s32.totalorder %s285, %s301
      %p303 = scmp.eq.s32.totalorder %s83, 0
      %p304 = por %p302, %p303
      %s305 = ssub.s32 %s85, %s92
      %p306 = scmp.eq.s32.totalorder %s305, 0
      %s308 = sadd.s32 %s307, 1
      %s309 = scalar_select %p306, %s307, %s308
      %p312 = pneg %p306
      %p313 = scmp.eq.s32.totalorder %s77, 3
      %p314 = por %p312, %p313
      %p315 = scmp.ne.s32.totalorder %s307, %s310
      %p316 = scmp.eq.s32.totalorder %s77, 0
      %p317 = por %p315, %p316
      %p318 = scmp.ne.s32.totalorder %s307, %s310
      %p319 = scmp.eq.s32.totalorder %s82, 3
      %p320 = por %p318, %p319
      %p321 = scmp.ne.s32.totalorder %s310, %s311
      %p322 = scmp.eq.s32.totalorder %s82, 0
      %p323 = por %p321, %p322
      %p324 = scmp.ne.s32.totalorder %s310, %s311
      %p325 = scmp.eq.s32.totalorder %s83, 3
      %p326 = por %p324, %p325
      %p328 = scmp.ne.s32.totalorder %s311, %s327
      %p329 = scmp.eq.s32.totalorder %s83, 0
      %p330 = por %p328, %p329
      %s331 = ssub.s32 %s85, %s92
      %p332 = scmp.eq.s32.totalorder %s331, 0
      %s334 = sadd.s32 %s333, 1
      %s335 = scalar_select %p332, %s333, %s334
      %p338 = pneg %p332
      %p339 = scmp.eq.s32.totalorder %s77, 3
      %p340 = por %p338, %p339
      %p341 = scmp.ne.s32.totalorder %s333, %s336
      %p342 = scmp.eq.s32.totalorder %s77, 0
      %p343 = por %p341, %p342
      %p344 = scmp.ne.s32.totalorder %s333, %s336
      %p345 = scmp.eq.s32.totalorder %s82, 3
      %p346 = por %p344, %p345
      %p347 = scmp.ne.s32.totalorder %s336, %s337
      %p348 = scmp.eq.s32.totalorder %s82, 0
      %p349 = por %p347, %p348
      %p350 = scmp.ne.s32.totalorder %s336, %s337
      %p351 = scmp.eq.s32.totalorder %s83, 3
      %p352 = por %p350, %p351
      %p354 = scmp.ne.s32.totalorder %s337, %s353
      %p355 = scmp.eq.s32.totalorder %s83, 0
      %p356 = por %p354, %p355
      %s357 = ssub.s32 %s85, %s92
      %p358 = scmp.eq.s32.totalorder %s357, 0
      %s360 = sadd.s32 %s359, 1
      %s361 = scalar_select %p358, %s359, %s360
      %p364 = pneg %p358
      %p365 = scmp.eq.s32.totalorder %s77, 3
      %p366 = por %p364, %p365
      %p367 = scmp.ne.s32.totalorder %s359, %s362
      %p368 = scmp.eq.s32.totalorder %s77, 0
      %p369 = por %p367, %p368
      %p370 = scmp.ne.s32.totalorder %s359, %s362
      %p371 = scmp.eq.s32.totalorder %s82, 3
      %p372 = por %p370, %p371
      %p373 = scmp.ne.s32.totalorder %s362, %s363
      %p374 = scmp.eq.s32.totalorder %s82, 0
      %p375 = por %p373, %p374
      %p376 = scmp.ne.s32.totalorder %s362, %s363
      %p377 = scmp.eq.s32.totalorder %s83, 3
      %p378 = por %p376, %p377
      %p380 = scmp.ne.s32.totalorder %s363, %s379
      %p381 = scmp.eq.s32.totalorder %s83, 0
      %p382 = por %p380, %p381
      %s383 = ssub.s32 %s85, %s92
      %p384 = scmp.eq.s32.totalorder %s383, 0
      %s386 = sadd.s32 %s385, 1
      %s387 = scalar_select %p384, %s385, %s386
      %p390 = pneg %p384
      %p391 = scmp.eq.s32.totalorder %s77, 3
      %p392 = por %p390, %p391
      %p393 = scmp.ne.s32.totalorder %s385, %s388
      %p394 = scmp.eq.s32.totalorder %s77, 0
      %p395 = por %p393, %p394
      %p396 = scmp.ne.s32.totalorder %s385, %s388
      %p397 = scmp.eq.s32.totalorder %s82, 3
      %p398 = por %p396, %p397
      %p399 = scmp.ne.s32.totalorder %s388, %s389
      %p400 = scmp.eq.s32.totalorder %s82, 0
      %p401 = por %p399, %p400
      %p402 = scmp.ne.s32.totalorder %s388, %s389
      %p403 = scmp.eq.s32.totalorder %s83, 3
      %p404 = por %p402, %p403
      %p406 = scmp.ne.s32.totalorder %s389, %s405
      %p407 = scmp.eq.s32.totalorder %s83, 0
      %p408 = por %p406, %p407
      %s409 = ssub.s32 %s85, %s92
      %p410 = scmp.eq.s32.totalorder %s409, 0
      %s412 = sadd.s32 %s411, 1
      %s413 = scalar_select %p410, %s411, %s412
      %p416 = pneg %p410
      %p417 = scmp.eq.s32.totalorder %s77, 3
      %p418 = por %p416, %p417
      %p419 = scmp.ne.s32.totalorder %s411, %s414
      %p420 = scmp.eq.s32.totalorder %s77, 0
      %p421 = por %p419, %p420
      %p422 = scmp.ne.s32.totalorder %s411, %s414
      %p423 = scmp.eq.s32.totalorder %s82, 3
      %p424 = por %p422, %p423
      %p425 = scmp.ne.s32.totalorder %s414, %s415
      %p426 = scmp.eq.s32.totalorder %s82, 0
      %p427 = por %p425, %p426
      %p428 = scmp.ne.s32.totalorder %s414, %s415
      %p429 = scmp.eq.s32.totalorder %s83, 3
      %p430 = por %p428, %p429
      %p432 = scmp.ne.s32.totalorder %s415, %s431
      %p433 = scmp.eq.s32.totalorder %s83, 0
      %p434 = por %p432, %p433
      %s435 = ssub.s32 %s85, %s92
      %p436 = scmp.eq.s32.totalorder %s435, 0
      %s438 = sadd.s32 %s437, 1
      %s439 = scalar_select %p436, %s437, %s438
      %p442 = pneg %p436
      %p443 = scmp.eq.s32.totalorder %s77, 3
      %p444 = por %p442, %p443
      %p445 = scmp.ne.s32.totalorder %s437, %s440
      %p446 = scmp.eq.s32.totalorder %s77, 0
      %p447 = por %p445, %p446
      %p448 = scmp.ne.s32.totalorder %s437, %s440
      %p449 = scmp.eq.s32.totalorder %s82, 3
      %p450 = por %p448, %p449
      %p451 = scmp.ne.s32.totalorder %s440, %s441
      %p452 = scmp.eq.s32.totalorder %s82, 0
      %p453 = por %p451, %p452
      %p454 = scmp.ne.s32.totalorder %s440, %s441
      %p455 = scmp.eq.s32.totalorder %s83, 3
      %p456 = por %p454, %p455
      %p458 = scmp.ne.s32.totalorder %s441, %s457
      %p459 = scmp.eq.s32.totalorder %s83, 0
      %p460 = por %p458, %p459
      %s461 = ssub.s32 %s85, %s92
      %p462 = scmp.eq.s32.totalorder %s461, 0
      %s464 = sadd.s32 %s463, 1
      %s465 = scalar_select %p462, %s463, %s464
      %p468 = pneg %p462
      %p469 = scmp.eq.s32.totalorder %s77, 3
      %p470 = por %p468, %p469
      %p471 = scmp.ne.s32.totalorder %s463, %s466
      %p472 = scmp.eq.s32.totalorder %s77, 0
      %p473 = por %p471, %p472
      %p474 = scmp.ne.s32.totalorder %s463, %s466
      %p475 = scmp.eq.s32.totalorder %s82, 3
      %p476 = por %p474, %p475
      %p477 = scmp.ne.s32.totalorder %s466, %s467
      %p478 = scmp.eq.s32.totalorder %s82, 0
      %p479 = por %p477, %p478
      %p480 = scmp.ne.s32.totalorder %s466, %s467
      %p481 = scmp.eq.s32.totalorder %s83, 3
      %p482 = por %p480, %p481
      %p484 = scmp.ne.s32.totalorder %s467, %s483
      %p485 = scmp.eq.s32.totalorder %s83, 0
      %p486 = por %p484, %p485
      %s487 = ssub.s32 %s85, %s92
      %p488 = scmp.eq.s32.totalorder %s487, 0
      %s490 = sadd.s32 %s489, 1
      %s491 = scalar_select %p488, %s489, %s490
      %p494 = pneg %p488
      %p495 = scmp.eq.s32.totalorder %s77, 3
      %p496 = por %p494, %p495
      %p497 = scmp.ne.s32.totalorder %s489, %s492
      %p498 = scmp.eq.s32.totalorder %s77, 0
      %p499 = por %p497, %p498
      %p500 = scmp.ne.s32.totalorder %s489, %s492
      %p501 = scmp.eq.s32.totalorder %s82, 3
      %p502 = por %p500, %p501
      %p503 = scmp.ne.s32.totalorder %s492, %s493
      %p504 = scmp.eq.s32.totalorder %s82, 0
      %p505 = por %p503, %p504
      %p506 = scmp.ne.s32.totalorder %s492, %s493
      %p507 = scmp.eq.s32.totalorder %s83, 3
      %p508 = por %p506, %p507
      %p510 = scmp.ne.s32.totalorder %s493, %s509
      %p511 = scmp.eq.s32.totalorder %s83, 0
      %p512 = por %p510, %p511
      %s513 = ssub.s32 %s85, %s92
      %p514 = scmp.eq.s32.totalorder %s513, 0
      %s516 = sadd.s32 %s515, 1
      %s517 = scalar_select %p514, %s515, %s516
      %p520 = pneg %p514
      %p521 = scmp.eq.s32.totalorder %s77, 3
      %p522 = por %p520, %p521
      %p523 = scmp.ne.s32.totalorder %s515, %s518
      %p524 = scmp.eq.s32.totalorder %s77, 0
      %p525 = por %p523, %p524
      %p526 = scmp.ne.s32.totalorder %s515, %s518
      %p527 = scmp.eq.s32.totalorder %s82, 3
      %p528 = por %p526, %p527
      %p529 = scmp.ne.s32.totalorder %s518, %s519
      %p530 = scmp.eq.s32.totalorder %s82, 0
      %p531 = por %p529, %p530
      %p532 = scmp.ne.s32.totalorder %s518, %s519
      %p533 = scmp.eq.s32.totalorder %s83, 3
      %p534 = por %p532, %p533
      %p536 = scmp.ne.s32.totalorder %s519, %s535
      %p537 = scmp.eq.s32.totalorder %s83, 0
      %p538 = por %p536, %p537
      %s539 = ssub.s32 %s85, %s92
      %p540 = scmp.eq.s32.totalorder %s539, 0
      %s542 = sadd.s32 %s541, 1
      %s543 = scalar_select %p540, %s541, %s542
      %p546 = pneg %p540
      %p547 = scmp.eq.s32.totalorder %s77, 3
      %p548 = por %p546, %p547
      %p549 = scmp.ne.s32.totalorder %s541, %s544
      %p550 = scmp.eq.s32.totalorder %s77, 0
      %p551 = por %p549, %p550
      %p552 = scmp.ne.s32.totalorder %s541, %s544
      %p553 = scmp.eq.s32.totalorder %s82, 3
      %p554 = por %p552, %p553
      %p555 = scmp.ne.s32.totalorder %s544, %s545
      %p556 = scmp.eq.s32.totalorder %s82, 0
      %p557 = por %p555, %p556
      %p558 = scmp.ne.s32.totalorder %s544, %s545
      %p559 = scmp.eq.s32.totalorder %s83, 3
      %p560 = por %p558, %p559
      %p562 = scmp.ne.s32.totalorder %s545, %s561
      %p563 = scmp.eq.s32.totalorder %s83, 0
      %p564 = por %p562, %p563
      %s565 = ssub.s32 %s85, %s92
      %p566 = scmp.eq.s32.totalorder %s565, 0
      %s568 = sadd.s32 %s567, 1
      %s569 = scalar_select %p566, %s567, %s568
      %p572 = pneg %p566
      %p573 = scmp.eq.s32.totalorder %s77, 3
      %p574 = por %p572, %p573
      %p575 = scmp.ne.s32.totalorder %s567, %s570
      %p576 = scmp.eq.s32.totalorder %s77, 0
      %p577 = por %p575, %p576
      %p578 = scmp.ne.s32.totalorder %s567, %s570
      %p579 = scmp.eq.s32.totalorder %s82, 3
      %p580 = por %p578, %p579
      %p581 = scmp.ne.s32.totalorder %s570, %s571
      %p582 = scmp.eq.s32.totalorder %s82, 0
      %p583 = por %p581, %p582
      %p584 = scmp.ne.s32.totalorder %s570, %s571
      %p585 = scmp.eq.s32.totalorder %s83, 3
      %p586 = por %p584, %p585
      %p588 = scmp.ne.s32.totalorder %s571, %s587
      %p589 = scmp.eq.s32.totalorder %s83, 0
      %p590 = por %p588, %p589
      %s591 = ssub.s32 %s85, %s92
      %p592 = scmp.eq.s32.totalorder %s591, 0
      %s594 = sadd.s32 %s593, 1
      %s595 = scalar_select %p592, %s593, %s594
      %p598 = pneg %p592
      %p599 = scmp.eq.s32.totalorder %s77, 3
      %p600 = por %p598, %p599
      %p601 = scmp.ne.s32.totalorder %s593, %s596
      %p602 = scmp.eq.s32.totalorder %s77, 0
      %p603 = por %p601, %p602
      %p604 = scmp.ne.s32.totalorder %s593, %s596
      %p605 = scmp.eq.s32.totalorder %s82, 3
      %p606 = por %p604, %p605
      %p607 = scmp.ne.s32.totalorder %s596, %s597
      %p608 = scmp.eq.s32.totalorder %s82, 0
      %p609 = por %p607, %p608
      %p610 = scmp.ne.s32.totalorder %s596, %s597
      %p611 = scmp.eq.s32.totalorder %s83, 3
      %p612 = por %p610, %p611
      %p614 = scmp.ne.s32.totalorder %s597, %s613
      %p615 = scmp.eq.s32.totalorder %s83, 0
      %p616 = por %p614, %p615
      %s617 = ssub.s32 %s85, %s92
      %p618 = scmp.eq.s32.totalorder %s617, 0
      %s620 = sadd.s32 %s619, 1
      %s621 = scalar_select %p618, %s619, %s620
      %p624 = pneg %p618
      %p625 = scmp.eq.s32.totalorder %s77, 3
      %p626 = por %p624, %p625
      %p627 = scmp.ne.s32.totalorder %s619, %s622
      %p628 = scmp.eq.s32.totalorder %s77, 0
      %p629 = por %p627, %p628
      %p630 = scmp.ne.s32.totalorder %s619, %s622
      %p631 = scmp.eq.s32.totalorder %s82, 3
      %p632 = por %p630, %p631
      %p633 = scmp.ne.s32.totalorder %s622, %s623
      %p634 = scmp.eq.s32.totalorder %s82, 0
      %p635 = por %p633, %p634
      %p636 = scmp.ne.s32.totalorder %s622, %s623
      %p637 = scmp.eq.s32.totalorder %s83, 3
      %p638 = por %p636, %p637
      %p640 = scmp.ne.s32.totalorder %s623, %s639
      %p641 = scmp.eq.s32.totalorder %s83, 0
      %p642 = por %p640, %p641
      %s643 = ssub.s32 %s85, %s92
      %p644 = scmp.eq.s32.totalorder %s643, 0
      %s646 = sadd.s32 %s645, 1
      %s647 = scalar_select %p644, %s645, %s646
      %p650 = pneg %p644
      %p651 = scmp.eq.s32.totalorder %s77, 3
      %p652 = por %p650, %p651
      %p653 = scmp.ne.s32.totalorder %s645, %s648
      %p654 = scmp.eq.s32.totalorder %s77, 0
      %p655 = por %p653, %p654
      %p656 = scmp.ne.s32.totalorder %s645, %s648
      %p657 = scmp.eq.s32.totalorder %s82, 3
      %p658 = por %p656, %p657
      %p659 = scmp.ne.s32.totalorder %s648, %s649
      %p660 = scmp.eq.s32.totalorder %s82, 0
      %p661 = por %p659, %p660
      %p662 = scmp.ne.s32.totalorder %s648, %s649
      %p663 = scmp.eq.s32.totalorder %s83, 3
      %p664 = por %p662, %p663
      %p666 = scmp.ne.s32.totalorder %s649, %s665
      %p667 = scmp.eq.s32.totalorder %s83, 0
      %p668 = por %p666, %p667
      %s669 = ssub.s32 %s85, %s92
      %p670 = scmp.eq.s32.totalorder %s669, 0
      %s672 = sadd.s32 %s671, 1
      %s673 = scalar_select %p670, %s671, %s672
      %p676 = pneg %p670
      %p677 = scmp.eq.s32.totalorder %s77, 3
      %p678 = por %p676, %p677
      %p679 = scmp.ne.s32.totalorder %s671, %s674
      %p680 = scmp.eq.s32.totalorder %s77, 0
      %p681 = por %p679, %p680
      %p682 = scmp.ne.s32.totalorder %s671, %s674
      %p683 = scmp.eq.s32.totalorder %s82, 3
      %p684 = por %p682, %p683
      %p685 = scmp.ne.s32.totalorder %s674, %s675
      %p686 = scmp.eq.s32.totalorder %s82, 0
      %p687 = por %p685, %p686
      %p688 = scmp.ne.s32.totalorder %s674, %s675
      %p689 = scmp.eq.s32.totalorder %s83, 3
      %p690 = por %p688, %p689
      %p692 = scmp.ne.s32.totalorder %s675, %s691
      %p693 = scmp.eq.s32.totalorder %s83, 0
      %p694 = por %p692, %p693
      %s695 = ssub.s32 %s85, %s92
      %p696 = scmp.eq.s32.totalorder %s695, 0
      %s698 = sadd.s32 %s697, 1
      %s699 = scalar_select %p696, %s697, %s698
      %p702 = pneg %p696
      %p703 = scmp.eq.s32.totalorder %s77, 3
      %p704 = por %p702, %p703
      %p705 = scmp.ne.s32.totalorder %s697, %s700
      %p706 = scmp.eq.s32.totalorder %s77, 0
      %p707 = por %p705, %p706
      %p708 = scmp.ne.s32.totalorder %s697, %s700
      %p709 = scmp.eq.s32.totalorder %s82, 3
      %p710 = por %p708, %p709
      %p711 = scmp.ne.s32.totalorder %s700, %s701
      %p712 = scmp.eq.s32.totalorder %s82, 0
      %p713 = por %p711, %p712
      %p714 = scmp.ne.s32.totalorder %s700, %s701
      %p715 = scmp.eq.s32.totalorder %s83, 3
      %p716 = por %p714, %p715
      %p718 = scmp.ne.s32.totalorder %s701, %s717
      %p719 = scmp.eq.s32.totalorder %s83, 0
      %p720 = por %p718, %p719
      %s721 = ssub.s32 %s85, %s92
      %p722 = scmp.eq.s32.totalorder %s721, 0
      %s724 = sadd.s32 %s723, 1
      %s725 = scalar_select %p722, %s723, %s724
      %p728 = pneg %p722
      %p729 = scmp.eq.s32.totalorder %s77, 3
      %p730 = por %p728, %p729
      %p731 = scmp.ne.s32.totalorder %s723, %s726
      %p732 = scmp.eq.s32.totalorder %s77, 0
      %p733 = por %p731, %p732
      %p734 = scmp.ne.s32.totalorder %s723, %s726
      %p735 = scmp.eq.s32.totalorder %s82, 3
      %p736 = por %p734, %p735
      %p737 = scmp.ne.s32.totalorder %s726, %s727
      %p738 = scmp.eq.s32.totalorder %s82, 0
      %p739 = por %p737, %p738
      %p740 = scmp.ne.s32.totalorder %s726, %s727
      %p741 = scmp.eq.s32.totalorder %s83, 3
      %p742 = por %p740, %p741
      %p744 = scmp.ne.s32.totalorder %s727, %s743
      %p745 = scmp.eq.s32.totalorder %s83, 0
      %p746 = por %p744, %p745
      %s747 = ssub.s32 %s85, %s92
      %p748 = scmp.eq.s32.totalorder %s747, 0
      %s750 = sadd.s32 %s749, 1
      %s751 = scalar_select %p748, %s749, %s750
      %p754 = pneg %p748
      %p755 = scmp.eq.s32.totalorder %s77, 3
      %p756 = por %p754, %p755
      %p757 = scmp.ne.s32.totalorder %s749, %s752
      %p758 = scmp.eq.s32.totalorder %s77, 0
      %p759 = por %p757, %p758
      %p760 = scmp.ne.s32.totalorder %s749, %s752
      %p761 = scmp.eq.s32.totalorder %s82, 3
      %p762 = por %p760, %p761
      %p763 = scmp.ne.s32.totalorder %s752, %s753
      %p764 = scmp.eq.s32.totalorder %s82, 0
      %p765 = por %p763, %p764
      %p766 = scmp.ne.s32.totalorder %s752, %s753
      %p767 = scmp.eq.s32.totalorder %s83, 3
      %p768 = por %p766, %p767
      %p770 = scmp.ne.s32.totalorder %s753, %s769
      %p771 = scmp.eq.s32.totalorder %s83, 0
      %p772 = por %p770, %p771
      %s773 = ssub.s32 %s85, %s92
      %p774 = scmp.eq.s32.totalorder %s773, 0
      %s776 = sadd.s32 %s775, 1
      %s777 = scalar_select %p774, %s775, %s776
      %p780 = pneg %p774
      %p781 = scmp.eq.s32.totalorder %s77, 3
      %p782 = por %p780, %p781
      %p783 = scmp.ne.s32.totalorder %s775, %s778
      %p784 = scmp.eq.s32.totalorder %s77, 0
      %p785 = por %p783, %p784
      %p786 = scmp.ne.s32.totalorder %s775, %s778
      %p787 = scmp.eq.s32.totalorder %s82, 3
      %p788 = por %p786, %p787
      %p789 = scmp.ne.s32.totalorder %s778, %s779
      %p790 = scmp.eq.s32.totalorder %s82, 0
      %p791 = por %p789, %p790
      %p792 = scmp.ne.s32.totalorder %s778, %s779
      %p793 = scmp.eq.s32.totalorder %s83, 3
      %p794 = por %p792, %p793
      %p796 = scmp.ne.s32.totalorder %s779, %s795
      %p797 = scmp.eq.s32.totalorder %s83, 0
      %p798 = por %p796, %p797
      %s800 = sadd.s32 %s799, 1
      %p803 = scmp.eq.s32.totalorder %s77, 3
      %p804 = scmp.ne.s32.totalorder %s799, %s801
      %p805 = scmp.eq.s32.totalorder %s77, 0
      %p806 = por %p804, %p805
      %p807 = scmp.ne.s32.totalorder %s799, %s801
      %p808 = scmp.eq.s32.totalorder %s82, 3
      %p809 = por %p807, %p808
      %p810 = scmp.ne.s32.totalorder %s801, %s802
      %p811 = scmp.eq.s32.totalorder %s82, 0
      %p812 = por %p810, %p811
      %p813 = scmp.ne.s32.totalorder %s801, %s802
      %p814 = scmp.eq.s32.totalorder %s83, 3
      %p815 = por %p813, %p814
      %p817 = scmp.ne.s32.totalorder %s802, %s816
      %p818 = scmp.eq.s32.totalorder %s83, 0
      %p819 = por %p817, %p818
      %s821 = sadd.s32 %s820, 1
      %p824 = scmp.eq.s32.totalorder %s77, 3
      %p825 = scmp.ne.s32.totalorder %s820, %s822
      %p826 = scmp.eq.s32.totalorder %s77, 0
      %p827 = por %p825, %p826
      %p828 = scmp.ne.s32.totalorder %s820, %s822
      %p829 = scmp.eq.s32.totalorder %s82, 3
      %p830 = por %p828, %p829
      %p831 = scmp.ne.s32.totalorder %s822, %s823
      %p832 = scmp.eq.s32.totalorder %s82, 0
      %p833 = por %p831, %p832
      %p834 = scmp.ne.s32.totalorder %s822, %s823
      %p835 = scmp.eq.s32.totalorder %s83, 3
      %p836 = por %p834, %p835
      %p838 = scmp.ne.s32.totalorder %s823, %s837
      %p839 = scmp.eq.s32.totalorder %s83, 0
      %p840 = por %p838, %p839
      %s841 = ssub.s32 %s84, %s96
      %p842 = scmp.eq.s32.totalorder %s841, 0
      %s844 = sadd.s32 %s843, 1
      %s845 = scalar_select %p842, %s843, %s844
      %p848 = pneg %p842
      %p849 = scmp.eq.s32.totalorder %s77, 3
      %p850 = por %p848, %p849
      %p851 = scmp.ne.s32.totalorder %s843, %s846
      %p852 = scmp.eq.s32.totalorder %s77, 0
      %p853 = por %p851, %p852
      %p854 = scmp.ne.s32.totalorder %s843, %s846
      %p855 = scmp.eq.s32.totalorder %s82, 3
      %p856 = por %p854, %p855
      %p857 = scmp.ne.s32.totalorder %s846, %s847
      %p858 = scmp.eq.s32.totalorder %s82, 0
      %p859 = por %p857, %p858
      %p860 = scmp.ne.s32.totalorder %s846, %s847
      %p861 = scmp.eq.s32.totalorder %s83, 3
      %p862 = por %p860, %p861
      %p864 = scmp.ne.s32.totalorder %s847, %s863
      %p865 = scmp.eq.s32.totalorder %s83, 0
      %p866 = por %p864, %p865
      %p867 = scmp.le.s32.totalorder 1, %s77
      %p868 = scmp.lt.s32.totalorder %s77, 5
      %p869 = pnand %p867, %p868
      %p870 = pneg %p869
      // Predicated region
      $region9: #{transformer_forward.3} parent=5 // pred_check
        _
      $region10: #{transformer_forward.3} parent=5 // pred_check_branch
        %872 = sbr.rel (%p869) target = $region12
      $region11: #{transformer_forward.3} parent=5 // pred_region
        %s873 = ssub.s32 %s77, 1
        // Predicated region
        $region13: #{transformer_forward.3} parent=11 // pred_check
          %p874 = pneg %p812
        $region14: #{transformer_forward.3} parent=11 // pred_check_branch
          %876 = sbr.rel (%p874) target = $region16
        $region15: #{transformer_forward.3} parent=11 // pred_region
          _
        $region16: #{transformer_forward.3} parent=11 // pred_fallthru
          _
        // Predicated region
        $region17: #{transformer_forward.3} parent=11 // pred_check
          %p877 = pneg %p833
        $region18: #{transformer_forward.3} parent=11 // pred_check_branch
          %879 = sbr.rel (%p877) target = $region20
        $region19: #{transformer_forward.3} parent=11 // pred_region
          _
        $region20: #{transformer_forward.3} parent=11 // pred_fallthru
          _
      $region12: #{transformer_forward.3} parent=5 // pred_fallthru
        _
      %p880 = scmp.lt.s32.totalorder %s77, 4
      // Predicated region
      $region21: #{transformer_forward.3} parent=5 // pred_check
        %p881 = pneg %p880
      $region22: #{transformer_forward.3} parent=5 // pred_check_branch
        %883 = sbr.rel (%p881) target = $region24
      $region23: #{transformer_forward.3} parent=5 // pred_region
        // Predicated region
        $region25: #{transformer_forward.3} parent=23 // pred_check
          %p884 = pneg %p109
        $region26: #{transformer_forward.3} parent=23 // pred_check_branch
          %886 = sbr.rel (%p884) target = $region28
        $region27: #{transformer_forward.3} parent=23 // pred_region
          %s887 = smul.u32 2, %s84
          %p888 = scmp.lt.s32.totalorder %s887, 3
          %s889 = scalar_select %p888, %s887, 3
          %s890 = smul.addr %s889, 8
          %s891 = scalar_lea.vmem %s1, %s890
          %s892 = smul.u32 2, %s84
        $region28: #{transformer_forward.3} parent=23 // pred_fallthru
          _
        // Predicated region
        $region29: #{transformer_forward.3} parent=23 // pred_check
          %p893 = pneg %p135
        $region30: #{transformer_forward.3} parent=23 // pred_check_branch
          %895 = sbr.rel (%p893) target = $region32
        $region31: #{transformer_forward.3} parent=23 // pred_region
          %s896 = smul.u32 2, %s84
          %p897 = scmp.lt.s32.totalorder %s896, 3
          %s898 = scalar_select %p897, %s896, 3
          %s899 = smul.addr %s898, 8
          %s900 = scalar_lea.vmem %s3, %s899
          %s901 = smul.u32 2, %s84
        $region32: #{transformer_forward.3} parent=23 // pred_fallthru
          _
        // Predicated region
        $region33: #{transformer_forward.3} parent=23 // pred_check
          %p902 = pneg %p161
        $region34: #{transformer_forward.3} parent=23 // pred_check_branch
          %904 = sbr.rel (%p902) target = $region36
        $region35: #{transformer_forward.3} parent=23 // pred_region
          %p905 = scmp.lt.s32.totalorder %s84, 1
          %s906 = scalar_select %p905, %s84, 1
          %s907 = smul.addr %s906, 8
          %s908 = scalar_lea.vmem %s5, %s907
        $region36: #{transformer_forward.3} parent=23 // pred_fallthru
          _
        // Predicated region
        $region37: #{transformer_forward.3} parent=23 // pred_check
          %p909 = pneg %p187
        $region38: #{transformer_forward.3} parent=23 // pred_check_branch
          %911 = sbr.rel (%p909) target = $region40
        $region39: #{transformer_forward.3} parent=23 // pred_region
          %p912 = scmp.lt.s32.totalorder %s85, 1
          %s913 = scalar_select %p912, %s85, 1
          %s914 = smul.addr %s913, 4
          %s915 = smul.addr %s914, 8
          %s916 = scalar_lea.vmem %s7, %s915
        $region40: #{transformer_forward.3} parent=23 // pred_fallthru
          _
        // Predicated region
        $region41: #{transformer_forward.3} parent=23 // pred_check
          %p917 = pneg %p213
        $region42: #{transformer_forward.3} parent=23 // pred_check_branch
          %919 = sbr.rel (%p917) target = $region44
        $region43: #{transformer_forward.3} parent=23 // pred_region
          %p920 = scmp.lt.s32.totalorder %s85, 1
          %s921 = scalar_select %p920, %s85, 1
          %s922 = scalar_lea.vmem %s9, %s921
        $region44: #{transformer_forward.3} parent=23 // pred_fallthru
          _
        // Predicated region
        $region45: #{transformer_forward.3} parent=23 // pred_check
          %p923 = pneg %p239
        $region46: #{transformer_forward.3} parent=23 // pred_check_branch
          %925 = sbr.rel (%p923) target = $region48
        $region47: #{transformer_forward.3} parent=23 // pred_region
          %p926 = scmp.lt.s32.totalorder %s85, 1
          %s927 = scalar_select %p926, %s85, 1
          %s928 = smul.addr %s927, 4
          %s929 = smul.addr %s928, 8
          %s930 = scalar_lea.vmem %s11, %s929
        $region48: #{transformer_forward.3} parent=23 // pred_fallthru
          _
        // Predicated region
        $region49: #{transformer_forward.3} parent=23 // pred_check
          %p931 = pneg %p265
        $region50: #{transformer_forward.3} parent=23 // pred_check_branch
          %933 = sbr.rel (%p931) target = $region52
        $region51: #{transformer_forward.3} parent=23 // pred_region
          %p934 = scmp.lt.s32.totalorder %s85, 1
          %s935 = scalar_select %p934, %s85, 1
          %s936 = scalar_lea.vmem %s13, %s935
        $region52: #{transformer_forward.3} parent=23 // pred_fallthru
          _
        // Predicated region
        $region53: #{transformer_forward.3} parent=23 // pred_check
          %p937 = pneg %p291
        $region54: #{transformer_forward.3} parent=23 // pred_check_branch
          %939 = sbr.rel (%p937) target = $region56
        $region55: #{transformer_forward.3} parent=23 // pred_region
          %p940 = scmp.lt.s32.totalorder %s85, 1
          %s941 = scalar_select %p940, %s85, 1
          %s942 = smul.addr %s941, 4
          %s943 = smul.addr %s942, 8
          %s944 = scalar_lea.vmem %s15, %s943
        $region56: #{transformer_forward.3} parent=23 // pred_fallthru
          _
        // Predicated region
        $region57: #{transformer_forward.3} parent=23 // pred_check
          %p945 = pneg %p317
        $region58: #{transformer_forward.3} parent=23 // pred_check_branch
          %947 = sbr.rel (%p945) target = $region60
        $region59: #{transformer_forward.3} parent=23 // pred_region
          %p948 = scmp.lt.s32.totalorder %s85, 1
          %s949 = scalar_select %p948, %s85, 1
          %s950 = scalar_lea.vmem %s17, %s949
        $region60: #{transformer_forward.3} parent=23 // pred_fallthru
          _
        // Predicated region
        $region61: #{transformer_forward.3} parent=23 // pred_check
          %p951 = pneg %p343
        $region62: #{transformer_forward.3} parent=23 // pred_check_branch
          %953 = sbr.rel (%p951) target = $region64
        $region63: #{transformer_forward.3} parent=23 // pred_region
          %p954 = scmp.lt.s32.totalorder %s85, 1
          %s955 = scalar_select %p954, %s85, 1
          %s956 = scalar_lea.vmem %s19, %s955
        $region64: #{transformer_forward.3} parent=23 // pred_fallthru
          _
        // Predicated region
        $region65: #{transformer_forward.3} parent=23 // pred_check
          %p957 = pneg %p369
        $region66: #{transformer_forward.3} parent=23 // pred_check_branch
          %959 = sbr.rel (%p957) target = $region68
        $region67: #{transformer_forward.3} parent=23 // pred_region
          %p960 = scmp.lt.s32.totalorder %s85, 1
          %s961 = scalar_select %p960, %s85, 1
          %s962 = scalar_lea.vmem %s21, %s961
        $region68: #{transformer_forward.3} parent=23 // pred_fallthru
          _
        // Predicated region
        $region69: #{transformer_forward.3} parent=23 // pred_check
          %p963 = pneg %p395
        $region70: #{transformer_forward.3} parent=23 // pred_check_branch
          %965 = sbr.rel (%p963) target = $region72
        $region71: #{transformer_forward.3} parent=23 // pred_region
          %s966 = sand.u32 %s385, 1
          %s967 = scalar_lea.sflag [#allocation4], %s966
          %s968 = sand.u32 %s385, 1
          %s969 = smul.addr %s968, 32
          %s970 = scalar_lea.vmem [#allocation3], %s969
          %972 = vsyncadd %s967, 0
          %s973 = smul.addr %s85, 4
          %s974 = smul.addr %s973, 8
          %s975 = scalar_lea.hbm %s23, %s974
          %s976 = sshll.u32 %s975, 4
          %s977 = int_to_ptr.hbm [resolvable:$true] %s976
          %s978 = sshll.u32 %s970, 4
          %s979 = int_to_ptr.vmem [resolvable:$true] %s978
          %984 = dma.hbm_to_vmem [thread:$0]  %s977, 512, %s979, %s967, 128, 128, 8
        $region72: #{transformer_forward.3} parent=23 // pred_fallthru
          _
        // Predicated region
        $region73: #{transformer_forward.3} parent=23 // pred_check
          %p985 = pneg %p421
        $region74: #{transformer_forward.3} parent=23 // pred_check_branch
          %987 = sbr.rel (%p985) target = $region76
        $region75: #{transformer_forward.3} parent=23 // pred_region
          %p988 = scmp.lt.s32.totalorder %s85, 1
          %s989 = scalar_select %p988, %s85, 1
          %s990 = scalar_lea.vmem %s25, %s989
        $region76: #{transformer_forward.3} parent=23 // pred_fallthru
          _
        // Predicated region
        $region77: #{transformer_forward.3} parent=23 // pred_check
          %p991 = pneg %p447
        $region78: #{transformer_forward.3} parent=23 // pred_check_branch
          %993 = sbr.rel (%p991) target = $region80
        $region79: #{transformer_forward.3} parent=23 // pred_region
          %s994 = sand.u32 %s77, 1
          %s995 = scalar_lea.sflag [#allocation7], %s994
          %s996 = sand.u32 %s437, 1
          %s997 = smul.addr %s996, 32
          %s998 = scalar_lea.vmem [#allocation6], %s997
          %1000 = vsyncadd %s995, 0
          %s1001 = smul.addr %s85, 4
          %s1002 = smul.addr %s1001, 8
          %s1003 = scalar_lea.hbm %s27, %s1002
          %s1004 = sshll.u32 %s1003, 4
          %s1005 = int_to_ptr.hbm [resolvable:$true] %s1004
          %s1006 = sshll.u32 %s998, 4
          %s1007 = int_to_ptr.vmem [resolvable:$true] %s1006
          %1012 = dma.hbm_to_vmem [thread:$0]  %s1005, 512, %s1007, %s995, 128, 128, 8
        $region80: #{transformer_forward.3} parent=23 // pred_fallthru
          _
        // Predicated region
        $region81: #{transformer_forward.3} parent=23 // pred_check
          %p1013 = pneg %p473
        $region82: #{transformer_forward.3} parent=23 // pred_check_branch
          %1015 = sbr.rel (%p1013) target = $region84
        $region83: #{transformer_forward.3} parent=23 // pred_region
          %p1016 = scmp.lt.s32.totalorder %s85, 1
          %s1017 = scalar_select %p1016, %s85, 1
          %s1018 = scalar_lea.vmem %s29, %s1017
        $region84: #{transformer_forward.3} parent=23 // pred_fallthru
          _
        // Predicated region
        $region85: #{transformer_forward.3} parent=23 // pred_check
          %p1019 = pneg %p499
        $region86: #{transformer_forward.3} parent=23 // pred_check_branch
          %1021 = sbr.rel (%p1019) target = $region88
        $region87: #{transformer_forward.3} parent=23 // pred_region
          %s1022 = sand.u32 %s77, 1
          %s1023 = scalar_lea.sflag [#allocation7], %s1022
          %s1024 = sand.u32 %s489, 1
          %s1025 = smul.addr %s1024, 32
          %s1026 = scalar_lea.vmem [#allocation8], %s1025
          %1028 = vsyncadd %s1023, 0
          %s1029 = smul.addr %s85, 4
          %s1030 = smul.addr %s1029, 8
          %s1031 = scalar_lea.hbm %s31, %s1030
          %s1032 = sshll.u32 %s1031, 4
          %s1033 = int_to_ptr.hbm [resolvable:$true] %s1032
          %s1034 = sshll.u32 %s1026, 4
          %s1035 = int_to_ptr.vmem [resolvable:$true] %s1034
          %1040 = dma.hbm_to_vmem [thread:$0]  %s1033, 512, %s1035, %s1023, 128, 128, 8
        $region88: #{transformer_forward.3} parent=23 // pred_fallthru
          _
        // Predicated region
        $region89: #{transformer_forward.3} parent=23 // pred_check
          %p1041 = pneg %p525
        $region90: #{transformer_forward.3} parent=23 // pred_check_branch
          %1043 = sbr.rel (%p1041) target = $region92
        $region91: #{transformer_forward.3} parent=23 // pred_region
          %p1044 = scmp.lt.s32.totalorder %s85, 1
          %s1045 = scalar_select %p1044, %s85, 1
          %s1046 = scalar_lea.vmem %s33, %s1045
        $region92: #{transformer_forward.3} parent=23 // pred_fallthru
          _
        // Predicated region
        $region93: #{transformer_forward.3} parent=23 // pred_check
          %p1047 = pneg %p551
        $region94: #{transformer_forward.3} parent=23 // pred_check_branch
          %1049 = sbr.rel (%p1047) target = $region96
        $region95: #{transformer_forward.3} parent=23 // pred_region
          %s1050 = sand.u32 %s77, 1
          %s1051 = scalar_lea.sflag [#allocation10], %s1050
          %s1052 = sand.u32 %s541, 1
          %s1053 = smul.addr %s1052, 32
          %s1054 = scalar_lea.vmem [#allocation9], %s1053
          %1056 = vsyncadd %s1051, 0
          %s1057 = smul.addr %s85, 4
          %s1058 = smul.addr %s1057, 8
          %s1059 = scalar_lea.hbm %s35, %s1058
          %s1060 = sshll.u32 %s1059, 4
          %s1061 = int_to_ptr.hbm [resolvable:$true] %s1060
          %s1062 = sshll.u32 %s1054, 4
          %s1063 = int_to_ptr.vmem [resolvable:$true] %s1062
          %1068 = dma.hbm_to_vmem [thread:$0]  %s1061, 512, %s1063, %s1051, 128, 128, 8
        $region96: #{transformer_forward.3} parent=23 // pred_fallthru
          _
        // Predicated region
        $region97: #{transformer_forward.3} parent=23 // pred_check
          %p1069 = pneg %p577
        $region98: #{transformer_forward.3} parent=23 // pred_check_branch
          %1071 = sbr.rel (%p1069) target = $region100
        $region99: #{transformer_forward.3} parent=23 // pred_region
          %p1072 = scmp.lt.s32.totalorder %s85, 1
          %s1073 = scalar_select %p1072, %s85, 1
          %s1074 = scalar_lea.vmem %s37, %s1073
        $region100: #{transformer_forward.3} parent=23 // pred_fallthru
          _
        // Predicated region
        $region101: #{transformer_forward.3} parent=23 // pred_check
          %p1075 = pneg %p603
        $region102: #{transformer_forward.3} parent=23 // pred_check_branch
          %1077 = sbr.rel (%p1075) target = $region104
        $region103: #{transformer_forward.3} parent=23 // pred_region
          %p1078 = scmp.lt.s32.totalorder %s85, 1
          %s1079 = scalar_select %p1078, %s85, 1
          %s1080 = scalar_lea.vmem %s39, %s1079
        $region104: #{transformer_forward.3} parent=23 // pred_fallthru
          _
        // Predicated region
        $region105: #{transformer_forward.3} parent=23 // pred_check
          %p1081 = pneg %p629
        $region106: #{transformer_forward.3} parent=23 // pred_check_branch
          %1083 = sbr.rel (%p1081) target = $region108
        $region107: #{transformer_forward.3} parent=23 // pred_region
          %p1084 = scmp.lt.s32.totalorder %s85, 1
          %s1085 = scalar_select %p1084, %s85, 1
          %s1086 = scalar_lea.vmem %s41, %s1085
        $region108: #{transformer_forward.3} parent=23 // pred_fallthru
          _
        // Predicated region
        $region109: #{transformer_forward.3} parent=23 // pred_check
          %p1087 = pneg %p655
        $region110: #{transformer_forward.3} parent=23 // pred_check_branch
          %1089 = sbr.rel (%p1087) target = $region112
        $region111: #{transformer_forward.3} parent=23 // pred_region
          %s1090 = sand.u32 %s77, 1
          %s1091 = scalar_lea.sflag [#allocation10], %s1090
          %s1092 = sand.u32 %s645, 1
          %s1093 = smul.addr %s1092, 32
          %s1094 = scalar_lea.vmem [#allocation11], %s1093
          %1096 = vsyncadd %s1091, 0
          %s1097 = smul.addr %s85, 4
          %s1098 = smul.addr %s1097, 8
          %s1099 = scalar_lea.hbm %s43, %s1098
          %s1100 = sshll.u32 %s1099, 4
          %s1101 = int_to_ptr.hbm [resolvable:$true] %s1100
          %s1102 = sshll.u32 %s1094, 4
          %s1103 = int_to_ptr.vmem [resolvable:$true] %s1102
          %1108 = dma.hbm_to_vmem [thread:$0]  %s1101, 512, %s1103, %s1091, 128, 128, 8
        $region112: #{transformer_forward.3} parent=23 // pred_fallthru
          _
        // Predicated region
        $region113: #{transformer_forward.3} parent=23 // pred_check
          %p1109 = pneg %p681
        $region114: #{transformer_forward.3} parent=23 // pred_check_branch
          %1111 = sbr.rel (%p1109) target = $region116
        $region115: #{transformer_forward.3} parent=23 // pred_region
          %p1112 = scmp.lt.s32.totalorder %s85, 1
          %s1113 = scalar_select %p1112, %s85, 1
          %s1114 = scalar_lea.vmem %s45, %s1113
        $region116: #{transformer_forward.3} parent=23 // pred_fallthru
          _
        // Predicated region
        $region117: #{transformer_forward.3} parent=23 // pred_check
          %p1115 = pneg %p707
        $region118: #{transformer_forward.3} parent=23 // pred_check_branch
          %1117 = sbr.rel (%p1115) target = $region120
        $region119: #{transformer_forward.3} parent=23 // pred_region
          %p1118 = scmp.lt.s32.totalorder %s85, 1
          %s1119 = scalar_select %p1118, %s85, 1
          %s1120 = smul.addr %s1119, 8
          %s1121 = smul.addr %s1120, 8
          %s1122 = scalar_lea.vmem %s47, %s1121
        $region120: #{transformer_forward.3} parent=23 // pred_fallthru
          _
        // Predicated region
        $region121: #{transformer_forward.3} parent=23 // pred_check
          %p1123 = pneg %p733
        $region122: #{transformer_forward.3} parent=23 // pred_check_branch
          %1125 = sbr.rel (%p1123) target = $region124
        $region123: #{transformer_forward.3} parent=23 // pred_region
          %p1126 = scmp.lt.s32.totalorder %s85, 1
          %s1127 = scalar_select %p1126, %s85, 1
          %s1128 = scalar_lea.vmem %s49, %s1127
        $region124: #{transformer_forward.3} parent=23 // pred_fallthru
          _
        // Predicated region
        $region125: #{transformer_forward.3} parent=23 // pred_check
          %p1129 = pneg %p759
        $region126: #{transformer_forward.3} parent=23 // pred_check_branch
          %1131 = sbr.rel (%p1129) target = $region128
        $region127: #{transformer_forward.3} parent=23 // pred_region
          %p1132 = scmp.lt.s32.totalorder %s85, 1
          %s1133 = scalar_select %p1132, %s85, 1
          %s1134 = scalar_lea.vmem %s51, %s1133
        $region128: #{transformer_forward.3} parent=23 // pred_fallthru
          _
        // Predicated region
        $region129: #{transformer_forward.3} parent=23 // pred_check
          %p1135 = pneg %p785
        $region130: #{transformer_forward.3} parent=23 // pred_check_branch
          %1137 = sbr.rel (%p1135) target = $region132
        $region131: #{transformer_forward.3} parent=23 // pred_region
          %p1138 = scmp.lt.s32.totalorder %s85, 1
          %s1139 = scalar_select %p1138, %s85, 1
          %s1140 = scalar_lea.vmem %s53, %s1139
        $region132: #{transformer_forward.3} parent=23 // pred_fallthru
          _
      $region24: #{transformer_forward.3} parent=5 // pred_fallthru
        _
      %p1141 = scmp.le.s32.totalorder 1, %s77
      %p1142 = scmp.lt.s32.totalorder %s77, 5
      %p1143 = pnand %p1141, %p1142
      %p1144 = pneg %p1143
      // Predicated region
      $region133: #{transformer_forward.3} parent=5 // pred_check
        _
      $region134: #{transformer_forward.3} parent=5 // pred_check_branch
        %1146 = sbr.rel (%p1143) target = $region136
      $region135: #{transformer_forward.3} parent=5 // pred_region
        %s1147 = ssub.s32 %s77, 1
        %s1148 = sand.u32 %s388, 1
        %s1149 = scalar_lea.sflag [#allocation4], %s1148
        %s1150 = sand.u32 %s388, 1
        %s1151 = smul.addr %s1150, 32
        %s1152 = scalar_lea.vmem [#allocation3], %s1151
        // Predicated region
        $region137: #{transformer_forward.3} parent=135 // pred_check
          %p1153 = pneg %p401
        $region138: #{transformer_forward.3} parent=135 // pred_check_branch
          %1155 = sbr.rel (%p1153) target = $region140
        $region139: #{transformer_forward.3} parent=135 // pred_region
          %1157 = dma.done %s1149, 512
        $region140: #{transformer_forward.3} parent=135 // pred_fallthru
          _
        %s1158 = sand.u32 %s82, 1
        %s1159 = scalar_lea.sflag [#allocation7], %s1158
        %s1160 = sand.u32 %s440, 1
        %s1161 = smul.addr %s1160, 32
        %s1162 = scalar_lea.vmem [#allocation6], %s1161
        // Predicated region
        $region141: #{transformer_forward.3} parent=135 // pred_check
          %p1163 = pneg %p453
        $region142: #{transformer_forward.3} parent=135 // pred_check_branch
          %1165 = sbr.rel (%p1163) target = $region144
        $region143: #{transformer_forward.3} parent=135 // pred_region
          %1167 = dma.done %s1159, 512
        $region144: #{transformer_forward.3} parent=135 // pred_fallthru
          _
        %s1168 = sand.u32 %s82, 1
        %s1169 = scalar_lea.sflag [#allocation7], %s1168
        %s1170 = sand.u32 %s492, 1
        %s1171 = smul.addr %s1170, 32
        %s1172 = scalar_lea.vmem [#allocation8], %s1171
        // Predicated region
        $region145: #{transformer_forward.3} parent=135 // pred_check
          %p1173 = pneg %p505
        $region146: #{transformer_forward.3} parent=135 // pred_check_branch
          %1175 = sbr.rel (%p1173) target = $region148
        $region147: #{transformer_forward.3} parent=135 // pred_region
          %1177 = dma.done %s1169, 512
        $region148: #{transformer_forward.3} parent=135 // pred_fallthru
          _
        %s1178 = sand.u32 %s82, 1
        %s1179 = scalar_lea.sflag [#allocation10], %s1178
        %s1180 = sand.u32 %s544, 1
        %s1181 = smul.addr %s1180, 32
        %s1182 = scalar_lea.vmem [#allocation9], %s1181
        // Predicated region
        $region149: #{transformer_forward.3} parent=135 // pred_check
          %p1183 = pneg %p557
        $region150: #{transformer_forward.3} parent=135 // pred_check_branch
          %1185 = sbr.rel (%p1183) target = $region152
        $region151: #{transformer_forward.3} parent=135 // pred_region
          %1187 = dma.done %s1179, 512
        $region152: #{transformer_forward.3} parent=135 // pred_fallthru
          _
        %s1188 = sand.u32 %s82, 1
        %s1189 = scalar_lea.sflag [#allocation10], %s1188
        %s1190 = sand.u32 %s648, 1
        %s1191 = smul.addr %s1190, 32
        %s1192 = scalar_lea.vmem [#allocation11], %s1191
        // Predicated region
        $region153: #{transformer_forward.3} parent=135 // pred_check
          %p1193 = pneg %p661
        $region154: #{transformer_forward.3} parent=135 // pred_check_branch
          %1195 = sbr.rel (%p1193) target = $region156
        $region155: #{transformer_forward.3} parent=135 // pred_region
          %1197 = dma.done %s1189, 512
        $region156: #{transformer_forward.3} parent=135 // pred_fallthru
          _
        %s1198 = smul.u32 2, %s86
        %p1199 = scmp.lt.s32.totalorder %s1198, 3
        %s1200 = scalar_select %p1199, %s1198, 3
        %s1201 = smul.addr %s1200, 8
        %s1202 = scalar_lea.vmem %s1, %s1201
        %p1203 = pneg %p115
        %p1204 = pneg %p112
        %s1205 = smul.u32 2, %s86
        %p1206 = scmp.lt.s32.totalorder %s1205, 3
        %s1207 = scalar_select %p1206, %s1205, 3
        %s1208 = smul.addr %s1207, 8
        %s1209 = scalar_lea.vmem %s3, %s1208
        %p1210 = pneg %p141
        %p1211 = pneg %p138
        %p1212 = scmp.lt.s32.totalorder %s86, 1
        %s1213 = scalar_select %p1212, %s86, 1
        %s1214 = smul.addr %s1213, 8
        %s1215 = scalar_lea.vmem %s5, %s1214
        %p1216 = pneg %p167
        %p1217 = pneg %p164
        %p1218 = scmp.lt.s32.totalorder %s87, 1
        %s1219 = scalar_select %p1218, %s87, 1
        %s1220 = smul.addr %s1219, 4
        %s1221 = smul.addr %s1220, 8
        %s1222 = scalar_lea.vmem %s7, %s1221
        %p1223 = pneg %p193
        %p1224 = pneg %p190
        %p1225 = scmp.lt.s32.totalorder %s87, 1
        %s1226 = scalar_select %p1225, %s87, 1
        %s1227 = scalar_lea.vmem %s9, %s1226
        %p1228 = pneg %p219
        %p1229 = pneg %p216
        %p1230 = scmp.lt.s32.totalorder %s87, 1
        %s1231 = scalar_select %p1230, %s87, 1
        %s1232 = smul.addr %s1231, 4
        %s1233 = smul.addr %s1232, 8
        %s1234 = scalar_lea.vmem %s11, %s1233
        %p1235 = pneg %p245
        %p1236 = pneg %p242
        %p1237 = scmp.lt.s32.totalorder %s87, 1
        %s1238 = scalar_select %p1237, %s87, 1
        %s1239 = scalar_lea.vmem %s13, %s1238
        %p1240 = pneg %p271
        %p1241 = pneg %p268
        %p1242 = scmp.lt.s32.totalorder %s87, 1
        %s1243 = scalar_select %p1242, %s87, 1
        %s1244 = smul.addr %s1243, 4
        %s1245 = smul.addr %s1244, 8
        %s1246 = scalar_lea.vmem %s15, %s1245
        %p1247 = pneg %p297
        %p1248 = pneg %p294
        %p1249 = scmp.lt.s32.totalorder %s87, 1
        %s1250 = scalar_select %p1249, %s87, 1
        %s1251 = scalar_lea.vmem %s17, %s1250
        %p1252 = pneg %p323
        %p1253 = pneg %p320
        %p1254 = scmp.lt.s32.totalorder %s87, 1
        %s1255 = scalar_select %p1254, %s87, 1
        %s1256 = scalar_lea.vmem %s19, %s1255
        %p1257 = pneg %p349
        %p1258 = pneg %p346
        %p1259 = scmp.lt.s32.totalorder %s87, 1
        %s1260 = scalar_select %p1259, %s87, 1
        %s1261 = scalar_lea.vmem %s21, %s1260
        %p1262 = pneg %p375
        %p1263 = pneg %p372
        %s1264 = sand.u32 %s388, 1
        %s1265 = scalar_lea.sflag [#allocation4], %s1264
        %s1266 = sand.u32 %s388, 1
        %s1267 = smul.addr %s1266, 32
        %s1268 = scalar_lea.vmem [#allocation3], %s1267
        %p1269 = pneg %p401
        %p1270 = pneg %p398
        %p1271 = scmp.lt.s32.totalorder %s87, 1
        %s1272 = scalar_select %p1271, %s87, 1
        %s1273 = scalar_lea.vmem %s25, %s1272
        %p1274 = pneg %p427
        %p1275 = pneg %p424
        %s1276 = sand.u32 %s82, 1
        %s1277 = scalar_lea.sflag [#allocation7], %s1276
        %s1278 = sand.u32 %s440, 1
        %s1279 = smul.addr %s1278, 32
        %s1280 = scalar_lea.vmem [#allocation6], %s1279
        %p1281 = pneg %p453
        %p1282 = pneg %p450
        %p1283 = scmp.lt.s32.totalorder %s87, 1
        %s1284 = scalar_select %p1283, %s87, 1
        %s1285 = scalar_lea.vmem %s29, %s1284
        %p1286 = pneg %p479
        %p1287 = pneg %p476
        %s1288 = sand.u32 %s82, 1
        %s1289 = scalar_lea.sflag [#allocation7], %s1288
        %s1290 = sand.u32 %s492, 1
        %s1291 = smul.addr %s1290, 32
        %s1292 = scalar_lea.vmem [#allocation8], %s1291
        %p1293 = pneg %p505
        %p1294 = pneg %p502
        %p1295 = scmp.lt.s32.totalorder %s87, 1
        %s1296 = scalar_select %p1295, %s87, 1
        %s1297 = scalar_lea.vmem %s33, %s1296
        %p1298 = pneg %p531
        %p1299 = pneg %p528
        %s1300 = sand.u32 %s82, 1
        %s1301 = scalar_lea.sflag [#allocation10], %s1300
        %s1302 = sand.u32 %s544, 1
        %s1303 = smul.addr %s1302, 32
        %s1304 = scalar_lea.vmem [#allocation9], %s1303
        %p1305 = pneg %p557
        %p1306 = pneg %p554
        %p1307 = scmp.lt.s32.totalorder %s87, 1
        %s1308 = scalar_select %p1307, %s87, 1
        %s1309 = scalar_lea.vmem %s37, %s1308
        %p1310 = pneg %p583
        %p1311 = pneg %p580
        %p1312 = scmp.lt.s32.totalorder %s87, 1
        %s1313 = scalar_select %p1312, %s87, 1
        %s1314 = scalar_lea.vmem %s39, %s1313
        %p1315 = pneg %p609
        %p1316 = pneg %p606
        %p1317 = scmp.lt.s32.totalorder %s87, 1
        %s1318 = scalar_select %p1317, %s87, 1
        %s1319 = scalar_lea.vmem %s41, %s1318
        %p1320 = pneg %p635
        %p1321 = pneg %p632
        %s1322 = sand.u32 %s82, 1
        %s1323 = scalar_lea.sflag [#allocation10], %s1322
        %s1324 = sand.u32 %s648, 1
        %s1325 = smul.addr %s1324, 32
        %s1326 = scalar_lea.vmem [#allocation11], %s1325
        %p1327 = pneg %p661
        %p1328 = pneg %p658
        %p1329 = scmp.lt.s32.totalorder %s87, 1
        %s1330 = scalar_select %p1329, %s87, 1
        %s1331 = scalar_lea.vmem %s45, %s1330
        %p1332 = pneg %p687
        %p1333 = pneg %p684
        %p1334 = scmp.lt.s32.totalorder %s87, 1
        %s1335 = scalar_select %p1334, %s87, 1
        %s1336 = smul.addr %s1335, 8
        %s1337 = smul.addr %s1336, 8
        %s1338 = scalar_lea.vmem %s47, %s1337
        %p1339 = pneg %p713
        %p1340 = pneg %p710
        %p1341 = scmp.lt.s32.totalorder %s87, 1
        %s1342 = scalar_select %p1341, %s87, 1
        %s1343 = scalar_lea.vmem %s49, %s1342
        %p1344 = pneg %p739
        %p1345 = pneg %p736
        %p1346 = scmp.lt.s32.totalorder %s87, 1
        %s1347 = scalar_select %p1346, %s87, 1
        %s1348 = scalar_lea.vmem %s51, %s1347
        %p1349 = pneg %p765
        %p1350 = pneg %p762
        %p1351 = scmp.lt.s32.totalorder %s87, 1
        %s1352 = scalar_select %p1351, %s87, 1
        %s1353 = scalar_lea.vmem %s53, %s1352
        %p1354 = pneg %p791
        %p1355 = pneg %p788
        %p1356 = pneg %p812
        %p1357 = pneg %p809
        %p1358 = pneg %p833
        %p1359 = pneg %p830
        %p1360 = pneg %p859
        %p1361 = pneg %p856
        %s1362 = sand.u32 %s846, 1
        %s1363 = scalar_lea.sflag [#allocation5], %s1362
        %s1364 = sand.u32 %s846, 1
        %s1365 = smul.addr %s1364, 8
        %s1366 = scalar_lea.vmem [#allocation12], %s1365
        %s1367 = smul.u32 2, %s86
        %p1368 = scmp.lt.s32.totalorder %s1367, 3
        %s1369 = scalar_select %p1368, %s1367, 3
        %s1370 = smul.addr %s1369, 8
        %s1371 = scalar_lea.vmem %s1, %s1370
        %s1372 = smul.u32 2, %s86
        %s1373 = smul.u32 2, %s86
        %p1374 = scmp.lt.s32.totalorder %s1373, 3
        %s1375 = scalar_select %p1374, %s1373, 3
        %s1376 = smul.addr %s1375, 8
        %s1377 = scalar_lea.vmem %s3, %s1376
        %s1378 = smul.u32 2, %s86
        %p1379 = scmp.lt.s32.totalorder %s86, 1
        %s1380 = scalar_select %p1379, %s86, 1
        %s1381 = smul.addr %s1380, 8
        %s1382 = scalar_lea.vmem %s5, %s1381
        %p1383 = scmp.lt.s32.totalorder %s87, 1
        %s1384 = scalar_select %p1383, %s87, 1
        %s1385 = smul.addr %s1384, 4
        %s1386 = smul.addr %s1385, 8
        %s1387 = scalar_lea.vmem %s7, %s1386
        %p1388 = scmp.lt.s32.totalorder %s87, 1
        %s1389 = scalar_select %p1388, %s87, 1
        %s1390 = scalar_lea.vmem %s9, %s1389
        %p1391 = scmp.lt.s32.totalorder %s87, 1
        %s1392 = scalar_select %p1391, %s87, 1
        %s1393 = smul.addr %s1392, 4
        %s1394 = smul.addr %s1393, 8
        %s1395 = scalar_lea.vmem %s11, %s1394
        %p1396 = scmp.lt.s32.totalorder %s87, 1
        %s1397 = scalar_select %p1396, %s87, 1
        %s1398 = scalar_lea.vmem %s13, %s1397
        %p1399 = scmp.lt.s32.totalorder %s87, 1
        %s1400 = scalar_select %p1399, %s87, 1
        %s1401 = smul.addr %s1400, 4
        %s1402 = smul.addr %s1401, 8
        %s1403 = scalar_lea.vmem %s15, %s1402
        %p1404 = scmp.lt.s32.totalorder %s87, 1
        %s1405 = scalar_select %p1404, %s87, 1
        %s1406 = scalar_lea.vmem %s17, %s1405
        %p1407 = scmp.lt.s32.totalorder %s87, 1
        %s1408 = scalar_select %p1407, %s87, 1
        %s1409 = scalar_lea.vmem %s19, %s1408
        %p1410 = scmp.lt.s32.totalorder %s87, 1
        %s1411 = scalar_select %p1410, %s87, 1
        %s1412 = scalar_lea.vmem %s21, %s1411
        %p1413 = scmp.lt.s32.totalorder %s87, 1
        %s1414 = scalar_select %p1413, %s87, 1
        %s1415 = scalar_lea.vmem %s25, %s1414
        %p1416 = scmp.lt.s32.totalorder %s87, 1
        %s1417 = scalar_select %p1416, %s87, 1
        %s1418 = scalar_lea.vmem %s29, %s1417
        %p1419 = scmp.lt.s32.totalorder %s87, 1
        %s1420 = scalar_select %p1419, %s87, 1
        %s1421 = scalar_lea.vmem %s33, %s1420
        %p1422 = scmp.lt.s32.totalorder %s87, 1
        %s1423 = scalar_select %p1422, %s87, 1
        %s1424 = scalar_lea.vmem %s37, %s1423
        %p1425 = scmp.lt.s32.totalorder %s87, 1
        %s1426 = scalar_select %p1425, %s87, 1
        %s1427 = scalar_lea.vmem %s39, %s1426
        %p1428 = scmp.lt.s32.totalorder %s87, 1
        %s1429 = scalar_select %p1428, %s87, 1
        %s1430 = scalar_lea.vmem %s41, %s1429
        %p1431 = scmp.lt.s32.totalorder %s87, 1
        %s1432 = scalar_select %p1431, %s87, 1
        %s1433 = scalar_lea.vmem %s45, %s1432
        %p1434 = scmp.lt.s32.totalorder %s87, 1
        %s1435 = scalar_select %p1434, %s87, 1
        %s1436 = smul.addr %s1435, 8
        %s1437 = smul.addr %s1436, 8
        %s1438 = scalar_lea.vmem %s47, %s1437
        %p1439 = scmp.lt.s32.totalorder %s87, 1
        %s1440 = scalar_select %p1439, %s87, 1
        %s1441 = scalar_lea.vmem %s49, %s1440
        %p1442 = scmp.lt.s32.totalorder %s87, 1
        %s1443 = scalar_select %p1442, %s87, 1
        %s1444 = scalar_lea.vmem %s51, %s1443
        %p1445 = scmp.lt.s32.totalorder %s87, 1
        %s1446 = scalar_select %p1445, %s87, 1
        %s1447 = scalar_lea.vmem %s53, %s1446
        %p1448 = scmp.eq.s32.totalorder %s87, 0
        // Predicated region
        $region157: #{transformer_forward.3} parent=135 // pred_check
          %p1449 = pneg %p1448
        $region158: #{transformer_forward.3} parent=135 // pred_check_branch
          %1451 = sbr.rel (%p1449) target = $region160
        $region159: #{transformer_forward.3} parent=135 // pred_region
          %vm1452 = vcmask 261120
          %1453 = vst.msk [vmem:[#allocation2] sm:$0xff] %vm1452, 0.0
        $region160: #{transformer_forward.3} parent=135 // pred_fallthru
          _
        %v1454 = vld [vmem:[#allocation2] sm:$0xff]
        %v1455 = vld [vmem:[%s1382] sm:$0xff]
        %v1456 = vld [vmem:[%s1371] sm:$0xff]
        %v1457 = vld [vmem:[%s1371 + $0x8] sm:$0xff]
        %v1458 = vld [vmem:[%s1377] sm:$0xff]
        %v1459 = vld [vmem:[%s1377 + $0x8] sm:$0xff]
        %v1460 = vadd.f32 %v1454, %v1455
        %v1461 = vld [vmem:[%s1387] sm:$0xff]
        %v1462 = vld [vmem:[%s1387 + $0x8] sm:$0xff]
        %v1463 = vld [vmem:[%s1387 + $0x10] sm:$0xff]
        %v1464 = vld [vmem:[%s1387 + $0x18] sm:$0xff]
        %v1465 = vld [vmem:[%s1390] sm:$0x1]
        %v1467 = vperm.slane %v1465, 0
        %vm1469 = vcmask 261120
        %v1471 = vsel %vm1469, %v1460, 0
        %1473 = vmatpush.msra.mxu0 0.0
        %1474 = vmatpush.msra.mxu0 0.0
        %1475 = vmatpush.msra.mxu0 0.0
        %1476 = vmatpush.msra.mxu0 0.0
        %1477 = vmatpush.msra.mxu0 0.0
        %1478 = vmatpush.msra.mxu0 0.0
        %1479 = vmatpush.msra.mxu0 0.0
        %1480 = vmatpush.msra.mxu0 0.0
        %1481 = vmatpush.msra.mxu0 0.0
        %1482 = vmatpush.msra.mxu0 0.0
        %1483 = vmatpush.msra.mxu0 0.0
        %1484 = vmatpush.msra.mxu0 0.0
        %1485 = vmatpush.msra.mxu0 %v1464
        %1486 = vmatpush.msra.mxu0 %v1463
        %1487 = vmatpush.msra.mxu0 %v1462
        %1488 = vmatpush.msra.mxu0 %v1461
        %1489 = vmatmul.f32.gmra.mxu0 %v1471
        %v1490 = vpop.f32.mrf.mxu0
        %v1491 = vadd.f32 %v1467, %v1490
        %1492 = vdwg.mxu0
        %v1493 = vld [vmem:[%s1395] sm:$0xff]
        %v1494 = vld [vmem:[%s1395 + $0x8] sm:$0xff]
        %v1495 = vld [vmem:[%s1395 + $0x10] sm:$0xff]
        %v1496 = vld [vmem:[%s1395 + $0x18] sm:$0xff]
        %v1497 = vld [vmem:[%s1398] sm:$0x1]
        %v1499 = vperm.slane %v1497, 0
        %v1502 = vsel %vm1469, %v1454, 0
        %1504 = vmatpush.msra.mxu0 0.0
        %1505 = vmatpush.msra.mxu0 0.0
        %1506 = vmatpush.msra.mxu0 0.0
        %1507 = vmatpush.msra.mxu0 0.0
        %1508 = vmatpush.msra.mxu0 0.0
        %1509 = vmatpush.msra.mxu0 0.0
        %1510 = vmatpush.msra.mxu0 0.0
        %1511 = vmatpush.msra.mxu0 0.0
        %1512 = vmatpush.msra.mxu0 0.0
        %1513 = vmatpush.msra.mxu0 0.0
        %1514 = vmatpush.msra.mxu0 0.0
        %1515 = vmatpush.msra.mxu0 0.0
        %1516 = vmatpush.msra.mxu0 %v1496
        %1517 = vmatpush.msra.mxu0 %v1495
        %1518 = vmatpush.msra.mxu0 %v1494
        %1519 = vmatpush.msra.mxu0 %v1493
        %1520 = vmatmul.f32.gmra.mxu0 %v1502
        %v1521 = vpop.f32.mrf.mxu0
        %v1522 = vadd.f32 %v1499, %v1521
        %1523 = vdwg.mxu0
        %1525 = vrot.lane.b32.xlu0 %v1491, 96
        %v1526 = vpop.permute.xlu0 %1525
        %vm1527 = vcmask 64512
        %v1528 = vsel %vm1527, %v1491, 0
        %v1530 = vsel %vm1527, %v1526, 0
        %1532 = vmatpush.xpose.msra.mxu0 0.0
        %1533 = vmatpush.xpose.msra.mxu0 0.0
        %1534 = vmatpush.xpose.msra.mxu0 0.0
        %1535 = vmatpush.xpose.msra.mxu0 0.0
        %1536 = vmatpush.xpose.msra.mxu0 0.0
        %1537 = vmatpush.xpose.msra.mxu0 0.0
        %1538 = vmatpush.xpose.msra.mxu0 0.0
        %1539 = vmatpush.xpose.msra.mxu0 0.0
        %1540 = vmatpush.xpose.msra.mxu0 0.0
        %1541 = vmatpush.xpose.msra.mxu0 0.0
        %1542 = vmatpush.xpose.msra.mxu0 0.0
        %1543 = vmatpush.xpose.msra.mxu0 0.0
        %1544 = vmatpush.xpose.msra.mxu0 0.0
        %1545 = vmatpush.xpose.msra.mxu0 0.0
        %1546 = vmatpush.xpose.msra.mxu0 0.0
        %1547 = vmatpush.xpose.msra.mxu0 %v1530
        %1548 = vmatmul.f32.gmra.mxu0 %v1528
        %v1549 = vpop.f32.mrf.mxu0
        %v1550 = vadd.f32 0.0, %v1549
        %1551 = vdwg.mxu0
        %v1552 = vmul.f32 %v1550, 0.35355338
        %v1553 = vsel %vm1527, %v1552, -inf
        %1554 = vmax.xlane.f32.xlu0 %v1553
        %v1555 = vpop.xlane.xlu0 %1554
        %v1556 = vsub.f32 %v1552, %v1555
        %v1557 = vmul.f32 %v1556, 1.442695
        %v1558 = vpow.pop %v1557
        %v1559 = vsel %vm1527, %v1558, 0.0
        %1560 = vadd.xlane.f32.xlu0 %v1559
        %v1561 = vpop.xlane.xlu0 %1560
        %v1562 = vrcp.pop %v1561
        %v1563 = vmul.f32 %v1561, %v1562
        %v1564 = vsub.f32 1.0, %v1563
        %v1565 = vmul.f32 %v1562, %v1564
        %v1566 = vadd.f32 %v1562, %v1565
        %vm1567 = vweird.f32 %v1561
        %vm1568 = vweird.f32 %v1562
        %vm1569 = vmor %vm1567, %vm1568
        %v1570 = vsel %vm1569, %v1562, %v1566
        %v1571 = vand.u32 2147483647, %v1561
        %vm1572 = vcmp.eq.f32.partialorder %v1571, 8.507059e+37
        %v1573 = vand.u32 %v1561, 2147483648
        %v1574 = vor.u32 1.1754944e-38, %v1573
        %v1575 = vsel %vm1572, %v1574, %v1570
        %v1576 = vmul.f32 %v1558, %v1575
        %v1578 = vsel %vm1527, %v1576, 0
        %1580 = vmatpush.msra.mxu0 0.0
        %1581 = vmatpush.msra.mxu0 0.0
        %1582 = vmatpush.msra.mxu0 0.0
        %1583 = vmatpush.msra.mxu0 0.0
        %1584 = vmatpush.msra.mxu0 0.0
        %1585 = vmatpush.msra.mxu0 0.0
        %1586 = vmatpush.msra.mxu0 0.0
        %1587 = vmatpush.msra.mxu0 0.0
        %1588 = vmatpush.msra.mxu0 0.0
        %1589 = vmatpush.msra.mxu0 0.0
        %1590 = vmatpush.msra.mxu0 0.0
        %1591 = vmatpush.msra.mxu0 0.0
        %1592 = vmatpush.msra.mxu0 0.0
        %1593 = vmatpush.msra.mxu0 0.0
        %1594 = vmatpush.msra.mxu0 0.0
        %1595 = vmatpush.msra.mxu0 %v1522
        %1596 = vmatmul.f32.gmra.mxu0 %v1578
        %v1597 = vpop.f32.mrf.mxu0
        %v1598 = vadd.f32 0.0, %v1597
        %1599 = vdwg.mxu0
        %1600 = vrot.lane.b32.xlu0 %v1491, 120
        %v1601 = vpop.permute.xlu0 %1600
        %1602 = vrot.lane.b32.xlu0 %v1491, 88
        %v1603 = vpop.permute.xlu0 %1602
        %v1604 = vsel %vm1527, %v1601, 0
        %v1606 = vsel %vm1527, %v1603, 0
        %1608 = vmatpush.xpose.msra.mxu0 0.0
        %1609 = vmatpush.xpose.msra.mxu0 0.0
        %1610 = vmatpush.xpose.msra.mxu0 0.0
        %1611 = vmatpush.xpose.msra.mxu0 0.0
        %1612 = vmatpush.xpose.msra.mxu0 0.0
        %1613 = vmatpush.xpose.msra.mxu0 0.0
        %1614 = vmatpush.xpose.msra.mxu0 0.0
        %1615 = vmatpush.xpose.msra.mxu0 0.0
        %1616 = vmatpush.xpose.msra.mxu0 0.0
        %1617 = vmatpush.xpose.msra.mxu0 0.0
        %1618 = vmatpush.xpose.msra.mxu0 0.0
        %1619 = vmatpush.xpose.msra.mxu0 0.0
        %1620 = vmatpush.xpose.msra.mxu0 0.0
        %1621 = vmatpush.xpose.msra.mxu0 0.0
        %1622 = vmatpush.xpose.msra.mxu0 0.0
        %1623 = vmatpush.xpose.msra.mxu0 %v1606
        %1624 = vmatmul.f32.gmra.mxu0 %v1604
        %v1625 = vpop.f32.mrf.mxu0
        %v1626 = vadd.f32 0.0, %v1625
        %1627 = vdwg.mxu0
        %v1628 = vmul.f32 %v1626, 0.35355338
        %v1629 = vsel %vm1527, %v1628, -inf
        %1630 = vmax.xlane.f32.xlu0 %v1629
        %v1631 = vpop.xlane.xlu0 %1630
        %v1632 = vsub.f32 %v1628, %v1631
        %v1633 = vmul.f32 %v1632, 1.442695
        %v1634 = vpow.pop %v1633
        %v1635 = vsel %vm1527, %v1634, 0.0
        %1636 = vadd.xlane.f32.xlu0 %v1635
        %v1637 = vpop.xlane.xlu0 %1636
        %v1638 = vrcp.pop %v1637
        %v1639 = vmul.f32 %v1637, %v1638
        %v1640 = vsub.f32 1.0, %v1639
        %v1641 = vmul.f32 %v1638, %v1640
        %v1642 = vadd.f32 %v1638, %v1641
        %vm1643 = vweird.f32 %v1637
        %vm1644 = vweird.f32 %v1638
        %vm1645 = vmor %vm1643, %vm1644
        %v1646 = vsel %vm1645, %v1638, %v1642
        %v1647 = vand.u32 2147483647, %v1637
        %vm1648 = vcmp.eq.f32.partialorder %v1647, 8.507059e+37
        %v1649 = vand.u32 %v1637, 2147483648
        %v1650 = vor.u32 1.1754944e-38, %v1649
        %v1651 = vsel %vm1648, %v1650, %v1646
        %v1652 = vmul.f32 %v1634, %v1651
        %1654 = vrot.lane.b32.xlu0 %v1522, 120
        %v1655 = vpop.permute.xlu0 %1654
        %v1658 = vsel %vm1527, %v1652, 0
        %1660 = vmatpush.msra.mxu0 0.0
        %1661 = vmatpush.msra.mxu0 0.0
        %1662 = vmatpush.msra.mxu0 0.0
        %1663 = vmatpush.msra.mxu0 0.0
        %1664 = vmatpush.msra.mxu0 0.0
        %1665 = vmatpush.msra.mxu0 0.0
        %1666 = vmatpush.msra.mxu0 0.0
        %1667 = vmatpush.msra.mxu0 0.0
        %1668 = vmatpush.msra.mxu0 0.0
        %1669 = vmatpush.msra.mxu0 0.0
        %1670 = vmatpush.msra.mxu0 0.0
        %1671 = vmatpush.msra.mxu0 0.0
        %1672 = vmatpush.msra.mxu0 0.0
        %1673 = vmatpush.msra.mxu0 0.0
        %1674 = vmatpush.msra.mxu0 0.0
        %1675 = vmatpush.msra.mxu0 %v1655
        %1676 = vmatmul.f32.gmra.mxu0 %v1658
        %v1677 = vpop.f32.mrf.mxu0
        %v1678 = vadd.f32 0.0, %v1677
        %1679 = vdwg.mxu0
        %1680 = vrot.lane.b32.xlu0 %v1491, 112
        %v1681 = vpop.permute.xlu0 %1680
        %1682 = vrot.lane.b32.xlu0 %v1491, 80
        %v1683 = vpop.permute.xlu0 %1682
        %v1684 = vsel %vm1527, %v1681, 0
        %v1686 = vsel %vm1527, %v1683, 0
        %1688 = vmatpush.xpose.msra.mxu0 0.0
        %1689 = vmatpush.xpose.msra.mxu0 0.0
        %1690 = vmatpush.xpose.msra.mxu0 0.0
        %1691 = vmatpush.xpose.msra.mxu0 0.0
        %1692 = vmatpush.xpose.msra.mxu0 0.0
        %1693 = vmatpush.xpose.msra.mxu0 0.0
        %1694 = vmatpush.xpose.msra.mxu0 0.0
        %1695 = vmatpush.xpose.msra.mxu0 0.0
        %1696 = vmatpush.xpose.msra.mxu0 0.0
        %1697 = vmatpush.xpose.msra.mxu0 0.0
        %1698 = vmatpush.xpose.msra.mxu0 0.0
        %1699 = vmatpush.xpose.msra.mxu0 0.0
        %1700 = vmatpush.xpose.msra.mxu0 0.0
        %1701 = vmatpush.xpose.msra.mxu0 0.0
        %1702 = vmatpush.xpose.msra.mxu0 0.0
        %1703 = vmatpush.xpose.msra.mxu0 %v1686
        %1704 = vmatmul.f32.gmra.mxu0 %v1684
        %v1705 = vpop.f32.mrf.mxu0
        %v1706 = vadd.f32 0.0, %v1705
        %1707 = vdwg.mxu0
        %v1708 = vmul.f32 %v1706, 0.35355338
        %v1709 = vsel %vm1527, %v1708, -inf
        %1710 = vmax.xlane.f32.xlu0 %v1709
        %v1711 = vpop.xlane.xlu0 %1710
        %v1712 = vsub.f32 %v1708, %v1711
        %v1713 = vmul.f32 %v1712, 1.442695
        %v1714 = vpow.pop %v1713
        %v1715 = vsel %vm1527, %v1714, 0.0
        %1716 = vadd.xlane.f32.xlu0 %v1715
        %v1717 = vpop.xlane.xlu0 %1716
        %v1718 = vrcp.pop %v1717
        %v1719 = vmul.f32 %v1717, %v1718
        %v1720 = vsub.f32 1.0, %v1719
        %v1721 = vmul.f32 %v1718, %v1720
        %v1722 = vadd.f32 %v1718, %v1721
        %vm1723 = vweird.f32 %v1717
        %vm1724 = vweird.f32 %v1718
        %vm1725 = vmor %vm1723, %vm1724
        %v1726 = vsel %vm1725, %v1718, %v1722
        %v1727 = vand.u32 2147483647, %v1717
        %vm1728 = vcmp.eq.f32.partialorder %v1727, 8.507059e+37
        %v1729 = vand.u32 %v1717, 2147483648
        %v1730 = vor.u32 1.1754944e-38, %v1729
        %v1731 = vsel %vm1728, %v1730, %v1726
        %v1732 = vmul.f32 %v1714, %v1731
        %1733 = vrot.lane.b32.xlu0 %v1522, 112
        %v1734 = vpop.permute.xlu0 %1733
        %v1737 = vsel %vm1527, %v1732, 0
        %1739 = vmatpush.msra.mxu0 0.0
        %1740 = vmatpush.msra.mxu0 0.0
        %1741 = vmatpush.msra.mxu0 0.0
        %1742 = vmatpush.msra.mxu0 0.0
        %1743 = vmatpush.msra.mxu0 0.0
        %1744 = vmatpush.msra.mxu0 0.0
        %1745 = vmatpush.msra.mxu0 0.0
        %1746 = vmatpush.msra.mxu0 0.0
        %1747 = vmatpush.msra.mxu0 0.0
        %1748 = vmatpush.msra.mxu0 0.0
        %1749 = vmatpush.msra.mxu0 0.0
        %1750 = vmatpush.msra.mxu0 0.0
        %1751 = vmatpush.msra.mxu0 0.0
        %1752 = vmatpush.msra.mxu0 0.0
        %1753 = vmatpush.msra.mxu0 0.0
        %1754 = vmatpush.msra.mxu0 %v1734
        %1755 = vmatmul.f32.gmra.mxu0 %v1737
        %v1756 = vpop.f32.mrf.mxu0
        %v1757 = vadd.f32 0.0, %v1756
        %1758 = vdwg.mxu0
        %1759 = vrot.lane.b32.xlu0 %v1491, 104
        %v1760 = vpop.permute.xlu0 %1759
        %1761 = vrot.lane.b32.xlu0 %v1491, 72
        %v1762 = vpop.permute.xlu0 %1761
        %v1763 = vsel %vm1527, %v1760, 0
        %v1765 = vsel %vm1527, %v1762, 0
        %1767 = vmatpush.xpose.msra.mxu0 0.0
        %1768 = vmatpush.xpose.msra.mxu0 0.0
        %1769 = vmatpush.xpose.msra.mxu0 0.0
        %1770 = vmatpush.xpose.msra.mxu0 0.0
        %1771 = vmatpush.xpose.msra.mxu0 0.0
        %1772 = vmatpush.xpose.msra.mxu0 0.0
        %1773 = vmatpush.xpose.msra.mxu0 0.0
        %1774 = vmatpush.xpose.msra.mxu0 0.0
        %1775 = vmatpush.xpose.msra.mxu0 0.0
        %1776 = vmatpush.xpose.msra.mxu0 0.0
        %1777 = vmatpush.xpose.msra.mxu0 0.0
        %1778 = vmatpush.xpose.msra.mxu0 0.0
        %1779 = vmatpush.xpose.msra.mxu0 0.0
        %1780 = vmatpush.xpose.msra.mxu0 0.0
        %1781 = vmatpush.xpose.msra.mxu0 0.0
        %1782 = vmatpush.xpose.msra.mxu0 %v1765
        %1783 = vmatmul.f32.gmra.mxu0 %v1763
        %v1784 = vpop.f32.mrf.mxu0
        %v1785 = vadd.f32 0.0, %v1784
        %1786 = vdwg.mxu0
        %v1787 = vmul.f32 %v1785, 0.35355338
        %v1788 = vsel %vm1527, %v1787, -inf
        %1789 = vmax.xlane.f32.xlu0 %v1788
        %v1790 = vpop.xlane.xlu0 %1789
        %v1791 = vsub.f32 %v1787, %v1790
        %v1792 = vmul.f32 %v1791, 1.442695
        %v1793 = vpow.pop %v1792
        %v1794 = vsel %vm1527, %v1793, 0.0
        %1795 = vadd.xlane.f32.xlu0 %v1794
        %v1796 = vpop.xlane.xlu0 %1795
        %v1797 = vrcp.pop %v1796
        %v1798 = vmul.f32 %v1796, %v1797
        %v1799 = vsub.f32 1.0, %v1798
        %v1800 = vmul.f32 %v1797, %v1799
        %v1801 = vadd.f32 %v1797, %v1800
        %vm1802 = vweird.f32 %v1796
        %vm1803 = vweird.f32 %v1797
        %vm1804 = vmor %vm1802, %vm1803
        %v1805 = vsel %vm1804, %v1797, %v1801
        %v1806 = vand.u32 2147483647, %v1796
        %vm1807 = vcmp.eq.f32.partialorder %v1806, 8.507059e+37
        %v1808 = vand.u32 %v1796, 2147483648
        %v1809 = vor.u32 1.1754944e-38, %v1808
        %v1810 = vsel %vm1807, %v1809, %v1805
        %v1811 = vmul.f32 %v1793, %v1810
        %1812 = vrot.lane.b32.xlu0 %v1522, 104
        %v1813 = vpop.permute.xlu0 %1812
        %v1816 = vsel %vm1527, %v1811, 0
        %1818 = vmatpush.msra.mxu0 0.0
        %1819 = vmatpush.msra.mxu0 0.0
        %1820 = vmatpush.msra.mxu0 0.0
        %1821 = vmatpush.msra.mxu0 0.0
        %1822 = vmatpush.msra.mxu0 0.0
        %1823 = vmatpush.msra.mxu0 0.0
        %1824 = vmatpush.msra.mxu0 0.0
        %1825 = vmatpush.msra.mxu0 0.0
        %1826 = vmatpush.msra.mxu0 0.0
        %1827 = vmatpush.msra.mxu0 0.0
        %1828 = vmatpush.msra.mxu0 0.0
        %1829 = vmatpush.msra.mxu0 0.0
        %1830 = vmatpush.msra.mxu0 0.0
        %1831 = vmatpush.msra.mxu0 0.0
        %1832 = vmatpush.msra.mxu0 0.0
        %1833 = vmatpush.msra.mxu0 %v1813
        %1834 = vmatmul.f32.gmra.mxu0 %v1816
        %v1835 = vpop.f32.mrf.mxu0
        %v1836 = vadd.f32 0.0, %v1835
        %1837 = vdwg.mxu0
        %1839 = vrot.lane.b32.xlu0 %v1678, 8
        %v1840 = vpop.permute.xlu0 %1839
        %1843 = vrot.lane.b32.xlu0 %v1757, 16
        %v1844 = vpop.permute.xlu0 %1843
        %1847 = vrot.lane.b32.xlu0 %v1836, 24
        %v1848 = vpop.permute.xlu0 %1847
        %v1850 = vsel %vm1527, %v1598, %v1840
        %vm1851 = vcmask 130048
        %v1852 = vsel %vm1851, %v1850, %v1844
        %vm1853 = vcmask 195584
        %v1854 = vsel %vm1853, %v1852, %v1848
        %v1855 = vld [vmem:[%s1403] sm:$0xff]
        %v1856 = vld [vmem:[%s1403 + $0x8] sm:$0xff]
        %v1857 = vld [vmem:[%s1403 + $0x10] sm:$0xff]
        %v1858 = vld [vmem:[%s1403 + $0x18] sm:$0xff]
        %v1859 = vld [vmem:[%s1406] sm:$0x1]
        %v1861 = vperm.slane %v1859, 0
        %v1864 = vsel %vm1469, %v1854, 0
        %1866 = vmatpush.msra.mxu0 0.0
        %1867 = vmatpush.msra.mxu0 0.0
        %1868 = vmatpush.msra.mxu0 0.0
        %1869 = vmatpush.msra.mxu0 0.0
        %1870 = vmatpush.msra.mxu0 0.0
        %1871 = vmatpush.msra.mxu0 0.0
        %1872 = vmatpush.msra.mxu0 0.0
        %1873 = vmatpush.msra.mxu0 0.0
        %1874 = vmatpush.msra.mxu0 0.0
        %1875 = vmatpush.msra.mxu0 0.0
        %1876 = vmatpush.msra.mxu0 0.0
        %1877 = vmatpush.msra.mxu0 0.0
        %1878 = vmatpush.msra.mxu0 %v1858
        %1879 = vmatpush.msra.mxu0 %v1857
        %1880 = vmatpush.msra.mxu0 %v1856
        %1881 = vmatpush.msra.mxu0 %v1855
        %1882 = vmatmul.f32.gmra.mxu0 %v1864
        %v1883 = vpop.f32.mrf.mxu0
        %v1884 = vadd.f32 %v1861, %v1883
        %1885 = vdwg.mxu0
        %v1886 = vadd.f32 %v1454, %v1884
        %v1887 = vld [vmem:[%s1409] sm:$0x1]
        %v1888 = vld [vmem:[%s1412] sm:$0x1]
        %v1889 = vsel %vm1469, %v1886, 0.0
        %1890 = vadd.xlane.f32.xlu0 %v1889
        %v1891 = vpop.xlane.xlu0 %1890
        %v1892 = vrcp.pop 32.0
        %v1893 = vmul.f32 32.0, %v1892
        %v1894 = vsub.f32 1.0, %v1893
        %v1895 = vmul.f32 %v1892, %v1894
        %v1896 = vadd.f32 %v1892, %v1895
        %vm1897 = vweird.f32 %v1892
        %v1898 = vsel %vm1897, %v1892, %v1896
        %v1899 = vmul.f32 %v1891, %v1898
        %v1900 = vsub.f32 %v1886, %v1899
        %v1901 = vmul.f32 %v1900, %v1900
        %v1902 = vsel %vm1469, %v1901, 0.0
        %1903 = vadd.xlane.f32.xlu0 %v1902
        %v1904 = vpop.xlane.xlu0 %1903
        %v1905 = vmul.f32 %v1904, %v1898
        %v1906 = vadd.f32 %v1905, 1e-05
        %v1907 = vrsqrt.pop %v1906
        %v1908 = vmul.f32 %v1907, %v1906
        %v1909 = vmul.f32 %v1908, %v1907
        %v1910 = vmul.f32 0.5, %v1909
        %v1911 = vsub.f32 1.5, %v1910
        %v1912 = vmul.f32 %v1907, %v1911
        %vm1913 = vweird.f32 %v1906
        %vm1914 = vweird.f32 %v1907
        %vm1915 = vmor %vm1913, %vm1914
        %v1916 = vsel %vm1915, %v1907, %v1912
        %v1917 = vmul.f32 %v1900, %v1916
        %v1919 = vperm.slane %v1887, 0
        %v1921 = vmul.f32 %v1917, %v1919
        %v1923 = vperm.slane %v1888, 0
        %v1925 = vadd.f32 %v1921, %v1923
        %v1926 = vadd.f32 %v1925, %v1455
        %v1927 = vld [vmem:[%s1152] sm:$0xff]
        %v1928 = vld [vmem:[%s1152 + $0x8] sm:$0xff]
        %v1929 = vld [vmem:[%s1152 + $0x10] sm:$0xff]
        %v1930 = vld [vmem:[%s1152 + $0x18] sm:$0xff]
        %v1931 = vld [vmem:[%s1415] sm:$0x1]
        %v1933 = vperm.slane %v1931, 0
        %v1936 = vsel %vm1469, %v1926, 0
        %1938 = vmatpush.msra.mxu0 0.0
        %1939 = vmatpush.msra.mxu0 0.0
        %1940 = vmatpush.msra.mxu0 0.0
        %1941 = vmatpush.msra.mxu0 0.0
        %1942 = vmatpush.msra.mxu0 0.0
        %1943 = vmatpush.msra.mxu0 0.0
        %1944 = vmatpush.msra.mxu0 0.0
        %1945 = vmatpush.msra.mxu0 0.0
        %1946 = vmatpush.msra.mxu0 0.0
        %1947 = vmatpush.msra.mxu0 0.0
        %1948 = vmatpush.msra.mxu0 0.0
        %1949 = vmatpush.msra.mxu0 0.0
        %1950 = vmatpush.msra.mxu0 %v1930
        %1951 = vmatpush.msra.mxu0 %v1929
        %1952 = vmatpush.msra.mxu0 %v1928
        %1953 = vmatpush.msra.mxu0 %v1927
        %1954 = vmatmul.f32.gmra.mxu0 %v1936
        %v1955 = vpop.f32.mrf.mxu0
        %v1956 = vadd.f32 %v1933, %v1955
        %1957 = vdwg.mxu0
        %v1958 = vadd.f32 %v1456, %v1458
        %v1959 = vadd.f32 %v1457, %v1459
        %v1960 = vld [vmem:[%s1162] sm:$0xff]
        %v1961 = vld [vmem:[%s1162 + $0x8] sm:$0xff]
        %v1962 = vld [vmem:[%s1162 + $0x10] sm:$0xff]
        %v1963 = vld [vmem:[%s1162 + $0x18] sm:$0xff]
        %v1964 = vld [vmem:[%s1418] sm:$0x1]
        %v1966 = vperm.slane %v1964, 0
        %v1969 = vsel %vm1469, %v1958, 0
        %v1972 = vsel %vm1469, %v1959, 0
        %1974 = vmatpush.msra.mxu0 0.0
        %1975 = vmatpush.msra.mxu0 0.0
        %1976 = vmatpush.msra.mxu0 0.0
        %1977 = vmatpush.msra.mxu0 0.0
        %1978 = vmatpush.msra.mxu0 0.0
        %1979 = vmatpush.msra.mxu0 0.0
        %1980 = vmatpush.msra.mxu0 0.0
        %1981 = vmatpush.msra.mxu0 0.0
        %1982 = vmatpush.msra.mxu0 0.0
        %1983 = vmatpush.msra.mxu0 0.0
        %1984 = vmatpush.msra.mxu0 0.0
        %1985 = vmatpush.msra.mxu0 0.0
        %1986 = vmatpush.msra.mxu0 %v1963
        %1987 = vmatpush.msra.mxu0 %v1962
        %1988 = vmatpush.msra.mxu0 %v1961
        %1989 = vmatpush.msra.mxu0 %v1960
        %1990 = vmatmul.f32.gmra.mxu0 %v1969
        %v1991 = vpop.f32.mrf.mxu0
        %v1992 = vadd.f32 %v1966, %v1991
        %1993 = vmatmul.f32.gmra.mxu0 %v1972
        %v1994 = vpop.f32.mrf.mxu0
        %v1995 = vadd.f32 %v1966, %v1994
        %1996 = vdwg.mxu0
        %v1997 = vld [vmem:[%s1172] sm:$0xff]
        %v1998 = vld [vmem:[%s1172 + $0x8] sm:$0xff]
        %v1999 = vld [vmem:[%s1172 + $0x10] sm:$0xff]
        %v2000 = vld [vmem:[%s1172 + $0x18] sm:$0xff]
        %v2001 = vld [vmem:[%s1421] sm:$0x1]
        %v2003 = vperm.slane %v2001, 0
        %v2006 = vsel %vm1469, %v1456, 0
        %v2009 = vsel %vm1469, %v1457, 0
        %2011 = vmatpush.msra.mxu0 0.0
        %2012 = vmatpush.msra.mxu0 0.0
        %2013 = vmatpush.msra.mxu0 0.0
        %2014 = vmatpush.msra.mxu0 0.0
        %2015 = vmatpush.msra.mxu0 0.0
        %2016 = vmatpush.msra.mxu0 0.0
        %2017 = vmatpush.msra.mxu0 0.0
        %2018 = vmatpush.msra.mxu0 0.0
        %2019 = vmatpush.msra.mxu0 0.0
        %2020 = vmatpush.msra.mxu0 0.0
        %2021 = vmatpush.msra.mxu0 0.0
        %2022 = vmatpush.msra.mxu0 0.0
        %2023 = vmatpush.msra.mxu0 %v2000
        %2024 = vmatpush.msra.mxu0 %v1999
        %2025 = vmatpush.msra.mxu0 %v1998
        %2026 = vmatpush.msra.mxu0 %v1997
        %2027 = vmatmul.f32.gmra.mxu0 %v2006
        %v2028 = vpop.f32.mrf.mxu0
        %v2029 = vadd.f32 %v2003, %v2028
        %2030 = vmatmul.f32.gmra.mxu0 %v2009
        %v2031 = vpop.f32.mrf.mxu0
        %v2032 = vadd.f32 %v2003, %v2031
        %2033 = vdwg.mxu0
        %v2035 = vsel %vm1527, %v1956, 0
        %v2038 = vsel %vm1527, %v1992, 0
        %v2041 = vsel %vm1527, %v1995, 0
        %2043 = vmatpush.xpose.msra.mxu0 0.0
        %2044 = vmatpush.xpose.msra.mxu0 0.0
        %2045 = vmatpush.xpose.msra.mxu0 0.0
        %2046 = vmatpush.xpose.msra.mxu0 0.0
        %2047 = vmatpush.xpose.msra.mxu0 0.0
        %2048 = vmatpush.xpose.msra.mxu0 0.0
        %2049 = vmatpush.xpose.msra.mxu0 0.0
        %2050 = vmatpush.xpose.msra.mxu0 0.0
        %2051 = vmatpush.xpose.msra.mxu0 0.0
        %2052 = vmatpush.xpose.msra.mxu0 0.0
        %2053 = vmatpush.xpose.msra.mxu0 0.0
        %2054 = vmatpush.xpose.msra.mxu0 0.0
        %2055 = vmatpush.xpose.msra.mxu0 0.0
        %2056 = vmatpush.xpose.msra.mxu0 0.0
        %2057 = vmatpush.xpose.msra.mxu0 %v2041
        %2058 = vmatpush.xpose.msra.mxu0 %v2038
        %2059 = vmatmul.f32.gmra.mxu0 %v2035
        %v2060 = vpop.f32.mrf.mxu0
        %v2061 = vadd.f32 0.0, %v2060
        %2062 = vdwg.mxu0
        %v2063 = vmul.f32 %v2061, 0.35355338
        %v2064 = vsel %vm1851, %v2063, -inf
        %2065 = vmax.xlane.f32.xlu0 %v2064
        %v2066 = vpop.xlane.xlu0 %2065
        %v2067 = vsub.f32 %v2063, %v2066
        %v2068 = vmul.f32 %v2067, 1.442695
        %v2069 = vpow.pop %v2068
        %v2070 = vsel %vm1851, %v2069, 0.0
        %2071 = vadd.xlane.f32.xlu0 %v2070
        %v2072 = vpop.xlane.xlu0 %2071
        %v2073 = vrcp.pop %v2072
        %v2074 = vmul.f32 %v2072, %v2073
        %v2075 = vsub.f32 1.0, %v2074
        %v2076 = vmul.f32 %v2073, %v2075
        %v2077 = vadd.f32 %v2073, %v2076
        %vm2078 = vweird.f32 %v2072
        %vm2079 = vweird.f32 %v2073
        %vm2080 = vmor %vm2078, %vm2079
        %v2081 = vsel %vm2080, %v2073, %v2077
        %v2082 = vand.u32 2147483647, %v2072
        %vm2083 = vcmp.eq.f32.partialorder %v2082, 8.507059e+37
        %v2084 = vand.u32 %v2072, 2147483648
        %v2085 = vor.u32 1.1754944e-38, %v2084
        %v2086 = vsel %vm2083, %v2085, %v2081
        %v2087 = vmul.f32 %v2069, %v2086
        %v2089 = vsel %vm1851, %v2087, 0
        %2091 = vmatpush.msra.mxu0 0.0
        %2092 = vmatpush.msra.mxu0 0.0
        %2093 = vmatpush.msra.mxu0 0.0
        %2094 = vmatpush.msra.mxu0 0.0
        %2095 = vmatpush.msra.mxu0 0.0
        %2096 = vmatpush.msra.mxu0 0.0
        %2097 = vmatpush.msra.mxu0 0.0
        %2098 = vmatpush.msra.mxu0 0.0
        %2099 = vmatpush.msra.mxu0 0.0
        %2100 = vmatpush.msra.mxu0 0.0
        %2101 = vmatpush.msra.mxu0 0.0
        %2102 = vmatpush.msra.mxu0 0.0
        %2103 = vmatpush.msra.mxu0 0.0
        %2104 = vmatpush.msra.mxu0 0.0
        %2105 = vmatpush.msra.mxu0 %v2032
        %2106 = vmatpush.msra.mxu0 %v2029
        %2107 = vmatmul.f32.gmra.mxu0 %v2089
        %v2108 = vpop.f32.mrf.mxu0
        %v2109 = vadd.f32 0.0, %v2108
        %2110 = vdwg.mxu0
        %2111 = vrot.lane.b32.xlu0 %v1956, 120
        %v2112 = vpop.permute.xlu0 %2111
        %2113 = vrot.lane.b32.xlu0 %v1992, 120
        %v2114 = vpop.permute.xlu0 %2113
        %2115 = vrot.lane.b32.xlu0 %v1995, 120
        %v2116 = vpop.permute.xlu0 %2115
        %v2117 = vsel %vm1527, %v2112, 0
        %v2119 = vsel %vm1527, %v2114, 0
        %v2121 = vsel %vm1527, %v2116, 0
        %2123 = vmatpush.xpose.msra.mxu0 0.0
        %2124 = vmatpush.xpose.msra.mxu0 0.0
        %2125 = vmatpush.xpose.msra.mxu0 0.0
        %2126 = vmatpush.xpose.msra.mxu0 0.0
        %2127 = vmatpush.xpose.msra.mxu0 0.0
        %2128 = vmatpush.xpose.msra.mxu0 0.0
        %2129 = vmatpush.xpose.msra.mxu0 0.0
        %2130 = vmatpush.xpose.msra.mxu0 0.0
        %2131 = vmatpush.xpose.msra.mxu0 0.0
        %2132 = vmatpush.xpose.msra.mxu0 0.0
        %2133 = vmatpush.xpose.msra.mxu0 0.0
        %2134 = vmatpush.xpose.msra.mxu0 0.0
        %2135 = vmatpush.xpose.msra.mxu0 0.0
        %2136 = vmatpush.xpose.msra.mxu0 0.0
        %2137 = vmatpush.xpose.msra.mxu0 %v2121
        %2138 = vmatpush.xpose.msra.mxu0 %v2119
        %2139 = vmatmul.f32.gmra.mxu0 %v2117
        %v2140 = vpop.f32.mrf.mxu0
        %v2141 = vadd.f32 0.0, %v2140
        %2142 = vdwg.mxu0
        %v2143 = vmul.f32 %v2141, 0.35355338
        %v2144 = vsel %vm1851, %v2143, -inf
        %2145 = vmax.xlane.f32.xlu0 %v2144
        %v2146 = vpop.xlane.xlu0 %2145
        %v2147 = vsub.f32 %v2143, %v2146
        %v2148 = vmul.f32 %v2147, 1.442695
        %v2149 = vpow.pop %v2148
        %v2150 = vsel %vm1851, %v2149, 0.0
        %2151 = vadd.xlane.f32.xlu0 %v2150
        %v2152 = vpop.xlane.xlu0 %2151
        %v2153 = vrcp.pop %v2152
        %v2154 = vmul.f32 %v2152, %v2153
        %v2155 = vsub.f32 1.0, %v2154
        %v2156 = vmul.f32 %v2153, %v2155
        %v2157 = vadd.f32 %v2153, %v2156
        %vm2158 = vweird.f32 %v2152
        %vm2159 = vweird.f32 %v2153
        %vm2160 = vmor %vm2158, %vm2159
        %v2161 = vsel %vm2160, %v2153, %v2157
        %v2162 = vand.u32 2147483647, %v2152
        %vm2163 = vcmp.eq.f32.partialorder %v2162, 8.507059e+37
        %v2164 = vand.u32 %v2152, 2147483648
        %v2165 = vor.u32 1.1754944e-38, %v2164
        %v2166 = vsel %vm2163, %v2165, %v2161
        %v2167 = vmul.f32 %v2149, %v2166
        %2170 = vrot.lane.b32.xlu0 %v2029, 120
        %v2171 = vpop.permute.xlu0 %2170
        %2172 = vrot.lane.b32.xlu0 %v2032, 120
        %v2173 = vpop.permute.xlu0 %2172
        %v2177 = vsel %vm1851, %v2167, 0
        %2179 = vmatpush.msra.mxu0 0.0
        %2180 = vmatpush.msra.mxu0 0.0
        %2181 = vmatpush.msra.mxu0 0.0
        %2182 = vmatpush.msra.mxu0 0.0
        %2183 = vmatpush.msra.mxu0 0.0
        %2184 = vmatpush.msra.mxu0 0.0
        %2185 = vmatpush.msra.mxu0 0.0
        %2186 = vmatpush.msra.mxu0 0.0
        %2187 = vmatpush.msra.mxu0 0.0
        %2188 = vmatpush.msra.mxu0 0.0
        %2189 = vmatpush.msra.mxu0 0.0
        %2190 = vmatpush.msra.mxu0 0.0
        %2191 = vmatpush.msra.mxu0 0.0
        %2192 = vmatpush.msra.mxu0 0.0
        %2193 = vmatpush.msra.mxu0 %v2173
        %2194 = vmatpush.msra.mxu0 %v2171
        %2195 = vmatmul.f32.gmra.mxu0 %v2177
        %v2196 = vpop.f32.mrf.mxu0
        %v2197 = vadd.f32 0.0, %v2196
        %2198 = vdwg.mxu0
        %2199 = vrot.lane.b32.xlu0 %v1956, 112
        %v2200 = vpop.permute.xlu0 %2199
        %2201 = vrot.lane.b32.xlu0 %v1992, 112
        %v2202 = vpop.permute.xlu0 %2201
        %2203 = vrot.lane.b32.xlu0 %v1995, 112
        %v2204 = vpop.permute.xlu0 %2203
        %v2205 = vsel %vm1527, %v2200, 0
        %v2207 = vsel %vm1527, %v2202, 0
        %v2209 = vsel %vm1527, %v2204, 0
        %2211 = vmatpush.xpose.msra.mxu0 0.0
        %2212 = vmatpush.xpose.msra.mxu0 0.0
        %2213 = vmatpush.xpose.msra.mxu0 0.0
        %2214 = vmatpush.xpose.msra.mxu0 0.0
        %2215 = vmatpush.xpose.msra.mxu0 0.0
        %2216 = vmatpush.xpose.msra.mxu0 0.0
        %2217 = vmatpush.xpose.msra.mxu0 0.0
        %2218 = vmatpush.xpose.msra.mxu0 0.0
        %2219 = vmatpush.xpose.msra.mxu0 0.0
        %2220 = vmatpush.xpose.msra.mxu0 0.0
        %2221 = vmatpush.xpose.msra.mxu0 0.0
        %2222 = vmatpush.xpose.msra.mxu0 0.0
        %2223 = vmatpush.xpose.msra.mxu0 0.0
        %2224 = vmatpush.xpose.msra.mxu0 0.0
        %2225 = vmatpush.xpose.msra.mxu0 %v2209
        %2226 = vmatpush.xpose.msra.mxu0 %v2207
        %2227 = vmatmul.f32.gmra.mxu0 %v2205
        %v2228 = vpop.f32.mrf.mxu0
        %v2229 = vadd.f32 0.0, %v2228
        %2230 = vdwg.mxu0
        %v2231 = vmul.f32 %v2229, 0.35355338
        %v2232 = vsel %vm1851, %v2231, -inf
        %2233 = vmax.xlane.f32.xlu0 %v2232
        %v2234 = vpop.xlane.xlu0 %2233
        %v2235 = vsub.f32 %v2231, %v2234
        %v2236 = vmul.f32 %v2235, 1.442695
        %v2237 = vpow.pop %v2236
        %v2238 = vsel %vm1851, %v2237, 0.0
        %2239 = vadd.xlane.f32.xlu0 %v2238
        %v2240 = vpop.xlane.xlu0 %2239
        %v2241 = vrcp.pop %v2240
        %v2242 = vmul.f32 %v2240, %v2241
        %v2243 = vsub.f32 1.0, %v2242
        %v2244 = vmul.f32 %v2241, %v2243
        %v2245 = vadd.f32 %v2241, %v2244
        %vm2246 = vweird.f32 %v2240
        %vm2247 = vweird.f32 %v2241
        %vm2248 = vmor %vm2246, %vm2247
        %v2249 = vsel %vm2248, %v2241, %v2245
        %v2250 = vand.u32 2147483647, %v2240
        %vm2251 = vcmp.eq.f32.partialorder %v2250, 8.507059e+37
        %v2252 = vand.u32 %v2240, 2147483648
        %v2253 = vor.u32 1.1754944e-38, %v2252
        %v2254 = vsel %vm2251, %v2253, %v2249
        %v2255 = vmul.f32 %v2237, %v2254
        %2256 = vrot.lane.b32.xlu0 %v2029, 112
        %v2257 = vpop.permute.xlu0 %2256
        %2258 = vrot.lane.b32.xlu0 %v2032, 112
        %v2259 = vpop.permute.xlu0 %2258
        %v2263 = vsel %vm1851, %v2255, 0
        %2265 = vmatpush.msra.mxu0 0.0
        %2266 = vmatpush.msra.mxu0 0.0
        %2267 = vmatpush.msra.mxu0 0.0
        %2268 = vmatpush.msra.mxu0 0.0
        %2269 = vmatpush.msra.mxu0 0.0
        %2270 = vmatpush.msra.mxu0 0.0
        %2271 = vmatpush.msra.mxu0 0.0
        %2272 = vmatpush.msra.mxu0 0.0
        %2273 = vmatpush.msra.mxu0 0.0
        %2274 = vmatpush.msra.mxu0 0.0
        %2275 = vmatpush.msra.mxu0 0.0
        %2276 = vmatpush.msra.mxu0 0.0
        %2277 = vmatpush.msra.mxu0 0.0
        %2278 = vmatpush.msra.mxu0 0.0
        %2279 = vmatpush.msra.mxu0 %v2259
        %2280 = vmatpush.msra.mxu0 %v2257
        %2281 = vmatmul.f32.gmra.mxu0 %v2263
        %v2282 = vpop.f32.mrf.mxu0
        %v2283 = vadd.f32 0.0, %v2282
        %2284 = vdwg.mxu0
        %2285 = vrot.lane.b32.xlu0 %v1956, 104
        %v2286 = vpop.permute.xlu0 %2285
        %2287 = vrot.lane.b32.xlu0 %v1992, 104
        %v2288 = vpop.permute.xlu0 %2287
        %2289 = vrot.lane.b32.xlu0 %v1995, 104
        %v2290 = vpop.permute.xlu0 %2289
        %v2291 = vsel %vm1527, %v2286, 0
        %v2293 = vsel %vm1527, %v2288, 0
        %v2295 = vsel %vm1527, %v2290, 0
        %2297 = vmatpush.xpose.msra.mxu0 0.0
        %2298 = vmatpush.xpose.msra.mxu0 0.0
        %2299 = vmatpush.xpose.msra.mxu0 0.0
        %2300 = vmatpush.xpose.msra.mxu0 0.0
        %2301 = vmatpush.xpose.msra.mxu0 0.0
        %2302 = vmatpush.xpose.msra.mxu0 0.0
        %2303 = vmatpush.xpose.msra.mxu0 0.0
        %2304 = vmatpush.xpose.msra.mxu0 0.0
        %2305 = vmatpush.xpose.msra.mxu0 0.0
        %2306 = vmatpush.xpose.msra.mxu0 0.0
        %2307 = vmatpush.xpose.msra.mxu0 0.0
        %2308 = vmatpush.xpose.msra.mxu0 0.0
        %2309 = vmatpush.xpose.msra.mxu0 0.0
        %2310 = vmatpush.xpose.msra.mxu0 0.0
        %2311 = vmatpush.xpose.msra.mxu0 %v2295
        %2312 = vmatpush.xpose.msra.mxu0 %v2293
        %2313 = vmatmul.f32.gmra.mxu0 %v2291
        %v2314 = vpop.f32.mrf.mxu0
        %v2315 = vadd.f32 0.0, %v2314
        %2316 = vdwg.mxu0
        %v2317 = vmul.f32 %v2315, 0.35355338
        %v2318 = vsel %vm1851, %v2317, -inf
        %2319 = vmax.xlane.f32.xlu0 %v2318
        %v2320 = vpop.xlane.xlu0 %2319
        %v2321 = vsub.f32 %v2317, %v2320
        %v2322 = vmul.f32 %v2321, 1.442695
        %v2323 = vpow.pop %v2322
        %v2324 = vsel %vm1851, %v2323, 0.0
        %2325 = vadd.xlane.f32.xlu0 %v2324
        %v2326 = vpop.xlane.xlu0 %2325
        %v2327 = vrcp.pop %v2326
        %v2328 = vmul.f32 %v2326, %v2327
        %v2329 = vsub.f32 1.0, %v2328
        %v2330 = vmul.f32 %v2327, %v2329
        %v2331 = vadd.f32 %v2327, %v2330
        %vm2332 = vweird.f32 %v2326
        %vm2333 = vweird.f32 %v2327
        %vm2334 = vmor %vm2332, %vm2333
        %v2335 = vsel %vm2334, %v2327, %v2331
        %v2336 = vand.u32 2147483647, %v2326
        %vm2337 = vcmp.eq.f32.partialorder %v2336, 8.507059e+37
        %v2338 = vand.u32 %v2326, 2147483648
        %v2339 = vor.u32 1.1754944e-38, %v2338
        %v2340 = vsel %vm2337, %v2339, %v2335
        %v2341 = vmul.f32 %v2323, %v2340
        %2342 = vrot.lane.b32.xlu0 %v2029, 104
        %v2343 = vpop.permute.xlu0 %2342
        %2344 = vrot.lane.b32.xlu0 %v2032, 104
        %v2345 = vpop.permute.xlu0 %2344
        %v2349 = vsel %vm1851, %v2341, 0
        %2351 = vmatpush.msra.mxu0 0.0
        %2352 = vmatpush.msra.mxu0 0.0
        %2353 = vmatpush.msra.mxu0 0.0
        %2354 = vmatpush.msra.mxu0 0.0
        %2355 = vmatpush.msra.mxu0 0.0
        %2356 = vmatpush.msra.mxu0 0.0
        %2357 = vmatpush.msra.mxu0 0.0
        %2358 = vmatpush.msra.mxu0 0.0
        %2359 = vmatpush.msra.mxu0 0.0
        %2360 = vmatpush.msra.mxu0 0.0
        %2361 = vmatpush.msra.mxu0 0.0
        %2362 = vmatpush.msra.mxu0 0.0
        %2363 = vmatpush.msra.mxu0 0.0
        %2364 = vmatpush.msra.mxu0 0.0
        %2365 = vmatpush.msra.mxu0 %v2345
        %2366 = vmatpush.msra.mxu0 %v2343
        %2367 = vmatmul.f32.gmra.mxu0 %v2349
        %v2368 = vpop.f32.mrf.mxu0
        %v2369 = vadd.f32 0.0, %v2368
        %2370 = vdwg.mxu0
        %2372 = vrot.lane.b32.xlu0 %v2197, 8
        %v2373 = vpop.permute.xlu0 %2372
        %2376 = vrot.lane.b32.xlu0 %v2283, 16
        %v2377 = vpop.permute.xlu0 %2376
        %2380 = vrot.lane.b32.xlu0 %v2369, 24
        %v2381 = vpop.permute.xlu0 %2380
        %v2383 = vsel %vm1527, %v2109, %v2373
        %v2384 = vsel %vm1851, %v2383, %v2377
        %v2385 = vsel %vm1853, %v2384, %v2381
        %v2386 = vld [vmem:[%s1182] sm:$0xff]
        %v2387 = vld [vmem:[%s1182 + $0x8] sm:$0xff]
        %v2388 = vld [vmem:[%s1182 + $0x10] sm:$0xff]
        %v2389 = vld [vmem:[%s1182 + $0x18] sm:$0xff]
        %v2390 = vld [vmem:[%s1424] sm:$0x1]
        %v2392 = vperm.slane %v2390, 0
        %v2395 = vsel %vm1469, %v2385, 0
        %2397 = vmatpush.msra.mxu0 0.0
        %2398 = vmatpush.msra.mxu0 0.0
        %2399 = vmatpush.msra.mxu0 0.0
        %2400 = vmatpush.msra.mxu0 0.0
        %2401 = vmatpush.msra.mxu0 0.0
        %2402 = vmatpush.msra.mxu0 0.0
        %2403 = vmatpush.msra.mxu0 0.0
        %2404 = vmatpush.msra.mxu0 0.0
        %2405 = vmatpush.msra.mxu0 0.0
        %2406 = vmatpush.msra.mxu0 0.0
        %2407 = vmatpush.msra.mxu0 0.0
        %2408 = vmatpush.msra.mxu0 0.0
        %2409 = vmatpush.msra.mxu0 %v2389
        %2410 = vmatpush.msra.mxu0 %v2388
        %2411 = vmatpush.msra.mxu0 %v2387
        %2412 = vmatpush.msra.mxu0 %v2386
        %2413 = vmatmul.f32.gmra.mxu0 %v2395
        %v2414 = vpop.f32.mrf.mxu0
        %v2415 = vadd.f32 %v2392, %v2414
        %2416 = vdwg.mxu0
        %v2417 = vadd.f32 %v1925, %v2415
        %v2418 = vld [vmem:[%s1427] sm:$0x1]
        %v2419 = vld [vmem:[%s1430] sm:$0x1]
        %v2420 = vsel %vm1469, %v2417, 0.0
        %2421 = vadd.xlane.f32.xlu0 %v2420
        %v2422 = vpop.xlane.xlu0 %2421
        %v2423 = vmul.f32 %v2422, %v1898
        %v2424 = vsub.f32 %v2417, %v2423
        %v2425 = vmul.f32 %v2424, %v2424
        %v2426 = vsel %vm1469, %v2425, 0.0
        %2427 = vadd.xlane.f32.xlu0 %v2426
        %v2428 = vpop.xlane.xlu0 %2427
        %v2429 = vmul.f32 %v2428, %v1898
        %v2430 = vadd.f32 %v2429, 1e-05
        %v2431 = vrsqrt.pop %v2430
        %v2432 = vmul.f32 %v2431, %v2430
        %v2433 = vmul.f32 %v2432, %v2431
        %v2434 = vmul.f32 0.5, %v2433
        %v2435 = vsub.f32 1.5, %v2434
        %v2436 = vmul.f32 %v2431, %v2435
        %vm2437 = vweird.f32 %v2430
        %vm2438 = vweird.f32 %v2431
        %vm2439 = vmor %vm2437, %vm2438
        %v2440 = vsel %vm2439, %v2431, %v2436
        %v2441 = vmul.f32 %v2424, %v2440
        %v2443 = vperm.slane %v2418, 0
        %v2445 = vmul.f32 %v2441, %v2443
        %v2447 = vperm.slane %v2419, 0
        %v2449 = vadd.f32 %v2445, %v2447
        %v2450 = vld [vmem:[%s1192] sm:$0xff]
        %v2451 = vld [vmem:[%s1192 + $0x8] sm:$0xff]
        %v2452 = vld [vmem:[%s1192 + $0x10] sm:$0xff]
        %v2453 = vld [vmem:[%s1192 + $0x18] sm:$0xff]
        %v2454 = vld [vmem:[%s1433] sm:$0x1]
        %v2456 = vperm.slane %v2454, 0
        %v2459 = vsel %vm1469, %v2449, 0
        %2461 = vmatpush.msra.mxu0 0.0
        %2462 = vmatpush.msra.mxu0 0.0
        %2463 = vmatpush.msra.mxu0 0.0
        %2464 = vmatpush.msra.mxu0 0.0
        %2465 = vmatpush.msra.mxu0 0.0
        %2466 = vmatpush.msra.mxu0 0.0
        %2467 = vmatpush.msra.mxu0 0.0
        %2468 = vmatpush.msra.mxu0 0.0
        %2469 = vmatpush.msra.mxu0 0.0
        %2470 = vmatpush.msra.mxu0 0.0
        %2471 = vmatpush.msra.mxu0 0.0
        %2472 = vmatpush.msra.mxu0 0.0
        %2473 = vmatpush.msra.mxu0 %v2453
        %2474 = vmatpush.msra.mxu0 %v2452
        %2475 = vmatpush.msra.mxu0 %v2451
        %2476 = vmatpush.msra.mxu0 %v2450
        %2477 = vmatmul.f32.gmra.mxu0 %v2459
        %v2478 = vpop.f32.mrf.mxu0
        %v2479 = vadd.f32 %v2456, %v2478
        %2480 = vdwg.mxu0
        %v2481 = vmax.f32 %v2479, 0.0
        %v2482 = vld [vmem:[%s1438] sm:$0xff]
        %v2483 = vld [vmem:[%s1438 + $0x8] sm:$0xff]
        %v2484 = vld [vmem:[%s1438 + $0x10] sm:$0xff]
        %v2485 = vld [vmem:[%s1438 + $0x18] sm:$0xff]
        %v2486 = vld [vmem:[%s1438 + $0x20] sm:$0xff]
        %v2487 = vld [vmem:[%s1438 + $0x28] sm:$0xff]
        %v2488 = vld [vmem:[%s1438 + $0x30] sm:$0xff]
        %v2489 = vld [vmem:[%s1438 + $0x38] sm:$0xff]
        %v2490 = vld [vmem:[%s1441] sm:$0x1]
        %v2492 = vperm.slane %v2490, 0
        %vm2494 = vcmask 523264
        %v2496 = vsel %vm2494, %v2481, 0
        %2498 = vmatpush.msra.mxu0 0.0
        %2499 = vmatpush.msra.mxu0 0.0
        %2500 = vmatpush.msra.mxu0 0.0
        %2501 = vmatpush.msra.mxu0 0.0
        %2502 = vmatpush.msra.mxu0 0.0
        %2503 = vmatpush.msra.mxu0 0.0
        %2504 = vmatpush.msra.mxu0 0.0
        %2505 = vmatpush.msra.mxu0 0.0
        %2506 = vmatpush.msra.mxu0 %v2489
        %2507 = vmatpush.msra.mxu0 %v2488
        %2508 = vmatpush.msra.mxu0 %v2487
        %2509 = vmatpush.msra.mxu0 %v2486
        %2510 = vmatpush.msra.mxu0 %v2485
        %2511 = vmatpush.msra.mxu0 %v2484
        %2512 = vmatpush.msra.mxu0 %v2483
        %2513 = vmatpush.msra.mxu0 %v2482
        %2514 = vmatmul.f32.gmra.mxu0 %v2496
        %v2515 = vpop.f32.mrf.mxu0
        %v2516 = vadd.f32 %v2492, %v2515
        %2517 = vdwg.mxu0
        %v2518 = vadd.f32 %v2449, %v2516
        %v2519 = vld [vmem:[%s1444] sm:$0x1]
        %v2520 = vld [vmem:[%s1447] sm:$0x1]
        %v2521 = vsel %vm1469, %v2518, 0.0
        %2522 = vadd.xlane.f32.xlu0 %v2521
        %v2523 = vpop.xlane.xlu0 %2522
        %v2524 = vmul.f32 %v2523, %v1898
        %v2525 = vsub.f32 %v2518, %v2524
        %v2526 = vmul.f32 %v2525, %v2525
        %v2527 = vsel %vm1469, %v2526, 0.0
        %2528 = vadd.xlane.f32.xlu0 %v2527
        %v2529 = vpop.xlane.xlu0 %2528
        %v2530 = vmul.f32 %v2529, %v1898
        %v2531 = vadd.f32 %v2530, 1e-05
        %v2532 = vrsqrt.pop %v2531
        %v2533 = vmul.f32 %v2532, %v2531
        %v2534 = vmul.f32 %v2533, %v2532
        %v2535 = vmul.f32 0.5, %v2534
        %v2536 = vsub.f32 1.5, %v2535
        %v2537 = vmul.f32 %v2532, %v2536
        %vm2538 = vweird.f32 %v2531
        %vm2539 = vweird.f32 %v2532
        %vm2540 = vmor %vm2538, %vm2539
        %v2541 = vsel %vm2540, %v2532, %v2537
        %v2542 = vmul.f32 %v2525, %v2541
        %v2544 = vperm.slane %v2519, 0
        %v2546 = vmul.f32 %v2542, %v2544
        %v2548 = vperm.slane %v2520, 0
        %v2550 = vadd.f32 %v2546, %v2548
        %2551 = vst.msk [vmem:[#allocation2] sm:$0xff] %vm1469, %v2550
        %p2552 = scmp.eq.s32.totalorder %s87, 1
        // Predicated region
        $region161: #{transformer_forward.3} parent=135 // pred_check
          %p2553 = pneg %p2552
        $region162: #{transformer_forward.3} parent=135 // pred_check_branch
          %2555 = sbr.rel (%p2553) target = $region164
        $region163: #{transformer_forward.3} parent=135 // pred_region
          %v2556 = vld [vmem:[%s55] sm:$0x1]
          %v2557 = vld [vmem:[%s57] sm:$0x1]
          %v2558 = vsel %vm1469, %v2550, 0.0
          %2559 = vadd.xlane.f32.xlu0 %v2558
          %v2560 = vpop.xlane.xlu0 %2559
          %v2561 = vmul.f32 %v2560, %v1898
          %v2562 = vsub.f32 %v2550, %v2561
          %v2563 = vmul.f32 %v2562, %v2562
          %v2564 = vsel %vm1469, %v2563, 0.0
          %2565 = vadd.xlane.f32.xlu0 %v2564
          %v2566 = vpop.xlane.xlu0 %2565
          %v2567 = vmul.f32 %v2566, %v1898
          %v2568 = vadd.f32 %v2567, 1e-05
          %v2569 = vrsqrt.pop %v2568
          %v2570 = vmul.f32 %v2569, %v2568
          %v2571 = vmul.f32 %v2570, %v2569
          %v2572 = vmul.f32 0.5, %v2571
          %v2573 = vsub.f32 1.5, %v2572
          %v2574 = vmul.f32 %v2569, %v2573
          %vm2575 = vweird.f32 %v2568
          %vm2576 = vweird.f32 %v2569
          %vm2577 = vmor %vm2575, %vm2576
          %v2578 = vsel %vm2577, %v2569, %v2574
          %v2579 = vmul.f32 %v2562, %v2578
          %v2581 = vperm.slane %v2556, 0
          %v2583 = vmul.f32 %v2579, %v2581
          %v2585 = vperm.slane %v2557, 0
          %v2587 = vadd.f32 %v2583, %v2585
          %2588 = vst.msk [vmem:[%s1366] sm:$0xff] %vm1469, %v2587
        $region164: #{transformer_forward.3} parent=135 // pred_fallthru
          _
        %s2589 = sand.u32 %s846, 1
        %s2590 = scalar_lea.sflag [#allocation5], %s2589
        %s2591 = sand.u32 %s846, 1
        %s2592 = smul.addr %s2591, 8
        %s2593 = scalar_lea.vmem [#allocation12], %s2592
        // Predicated region
        $region165: #{transformer_forward.3} parent=135 // pred_check
          %p2594 = pneg %p856
        $region166: #{transformer_forward.3} parent=135 // pred_check_branch
          %2596 = sbr.rel (%p2594) target = $region168
        $region167: #{transformer_forward.3} parent=135 // pred_region
          %2598 = vsyncadd %s2590, 0
          %s2599 = smul.addr %s86, 8
          %s2600 = scalar_lea.hbm %s59, %s2599
          %s2602 = sshll.u32 %s2593, 4
          %s2603 = int_to_ptr.vmem [resolvable:$true] %s2602
          %s2604 = sshll.u32 %s2600, 4
          %s2605 = int_to_ptr.hbm [resolvable:$true] %s2604
          %2607 = dma.vmem_to_hbm [thread:$0]  %s2603, 128, %s2605, %s2590
        $region168: #{transformer_forward.3} parent=135 // pred_fallthru
          _
      $region136: #{transformer_forward.3} parent=5 // pred_fallthru
        _
      %p2608 = scmp.le.s32.totalorder 2, %s77
      // Predicated region
      $region169: #{transformer_forward.3} parent=5 // pred_check
        %p2609 = pneg %p2608
      $region170: #{transformer_forward.3} parent=5 // pred_check_branch
        %2611 = sbr.rel (%p2609) target = $region172
      $region171: #{transformer_forward.3} parent=5 // pred_region
        %s2612 = ssub.s32 %s77, 2
        // Predicated region
        $region173: #{transformer_forward.3} parent=171 // pred_check
          %p2613 = pneg %p862
        $region174: #{transformer_forward.3} parent=171 // pred_check_branch
          %2615 = sbr.rel (%p2613) target = $region176
        $region175: #{transformer_forward.3} parent=171 // pred_region
          %s2616 = sand.u32 %s847, 1
          %s2617 = scalar_lea.sflag [#allocation5], %s2616
          %s2618 = sand.u32 %s847, 1
          %s2619 = smul.addr %s2618, 8
          %s2620 = scalar_lea.vmem [#allocation12], %s2619
          %2622 = dma.done %s2617, 128
        $region176: #{transformer_forward.3} parent=171 // pred_fallthru
          _
      $region172: #{transformer_forward.3} parent=5 // pred_fallthru
        _
    $region6: #{transformer_forward.3} parent=1 // loop_footer
      %s81 = sadd.s32 1, %s77
    $region7: #{transformer_forward.3} parent=1 // loop_footer_branch
      %76 = sbr.rel target = $region3
    $region8: #{transformer_forward.3} parent=1 // loop_exit
      _
    %2623 = vsyncpa [#allocation4], 1
    %s2624 = scalar_lea.sflag [#allocation4], 1
    %2625 = vsyncpa %s2624, 1
    %2626 = vsyncpa [#allocation7], 1
    %s2627 = scalar_lea.sflag [#allocation7], 1
    %2628 = vsyncpa %s2627, 1
    %2629 = vsyncpa [#allocation10], 1
    %s2630 = scalar_lea.sflag [#allocation10], 1
    %2631 = vsyncpa %s2630, 1
    %2632 = vsyncpa [#allocation5], 1
    %s2633 = scalar_lea.sflag [#allocation5], 1
    %2634 = vsyncpa %s2633, 1

</llo_original>
